<compile_context>
chip_gen: v5e
topology: v5e:2x2
jax: 0.10.0
libtpu: 0.0.40
codegen_flags: <defaults>
</compile_context>

<pallas_src>
import math

import jax
import jax.numpy as jnp
from jax.experimental import pallas as pl
from jax.experimental.pallas import tpu as pltpu

# ----------------------------- config ---------------------------------------
BATCH = 2
C_IN = 3
IMG = 32
PATCH = 16
GRID_HW = IMG // PATCH                 # 2
NUM_PATCHES = GRID_HW * GRID_HW        # 4
SEQ = NUM_PATCHES + 1                  # 5 (class token + patches)
S_PAD = 8                              # sequence padded to one sublane tile
HIDDEN = 64
NUM_HEADS = 4
HEAD_DIM = HIDDEN // NUM_HEADS         # 16
MLP_DIM = 128
NUM_LAYERS = 2
NUM_CLASSES = 1000                     # ViT head output (feeds fc_emotion)
NUM_CLASSES_PAD = 1024                 # padded to a multiple of 128 lanes
PATCH_DIM = C_IN * PATCH * PATCH       # 768 (already a multiple of 128)
LN_EPS = 1e-6                          # torchvision ViT encoder LayerNorm eps

_VMEM = pl.BlockSpec(memory_space=pltpu.MemorySpace.VMEM)


# --------------------- in-kernel erf / exact-style GELU ---------------------
def _erf(x):
    # Abramowitz & Stegun 7.1.26 polynomial (max abs err ~1.5e-7); matches
    # PyTorch's exact-erf nn.GELU() closely without relying on a lax.erf
    # lowering inside Mosaic.  exp() runs on the EUP slot.
    a1, a2, a3, a4, a5 = 0.254829592, -0.284496736, 1.421413741, -1.453152027, 1.061405429
    p = 0.3275911
    sgn = jnp.where(x >= 0.0, 1.0, -1.0)
    ax = jnp.abs(x)
    t = 1.0 / (1.0 + p * ax)
    poly = ((((a5 * t + a4) * t + a3) * t + a2) * t + a1) * t
    return sgn * (1.0 - poly * jnp.exp(-ax * ax))


def _gelu(x):
    return 0.5 * x * (1.0 + _erf(x * (1.0 / math.sqrt(2.0))))


def _ln(x, g, b, eps=LN_EPS):
    mu = jnp.mean(x, axis=-1, keepdims=True)
    var = jnp.mean((x - mu) * (x - mu), axis=-1, keepdims=True)
    return (x - mu) * jax.lax.rsqrt(var + eps) * g + b


# --------------------------- fused forward kernel ---------------------------
def _vit_fused_kernel(patches_ref, seq0_ref, kmask_ref, patch_w_ref,
                      ln1_g_ref, ln1_b_ref, qkv_w_ref, qkv_b_ref,
                      out_w_ref, out_b_ref, ln2_g_ref, ln2_b_ref,
                      mlp_w1_ref, mlp_b1_ref, mlp_w2_ref, mlp_b2_ref,
                      lnf_g_ref, lnf_b_ref, head_w_ref, head_b_ref,
                      emo_w1_ref, emo_b1_ref, emo_w2_ref, emo_b2_ref,
                      out_ref):
    bsz = patches_ref.shape[0] // S_PAD
    scale = 1.0 / math.sqrt(HEAD_DIM)
    kmask = kmask_ref[...]                      # (S_PAD, S_PAD) additive key mask

    # ---- patch embedding (Conv2d k=16 s=16 as a matmul); class token,
    #      positional embedding and the conv bias are pre-folded into seq0,
    #      whose padded rows are zero. ----
    x = jnp.dot(patches_ref[...], patch_w_ref[...],
                preferred_element_type=jnp.float32) + seq0_ref[...]  # (B*S_PAD, D)

    # ---- encoder layers (statically unrolled; everything stays in VMEM) ----
    for l in range(NUM_LAYERS):
        # pre-LN multi-head self-attention
        h = _ln(x, ln1_g_ref[l], ln1_b_ref[l])
        qkv = jnp.dot(h, qkv_w_ref[l],
                      preferred_element_type=jnp.float32) + qkv_b_ref[l]  # (B*S_PAD, 3D)
        ow = out_w_ref[l]                                                 # (D, D)
        attn = out_b_ref[l]                                               # (1, D), broadcasts
        for hd in range(NUM_HEADS):
            q = qkv[:, hd * HEAD_DIM:(hd + 1) * HEAD_DIM]
            k = qkv[:, HIDDEN + hd * HEAD_DIM:HIDDEN + (hd + 1) * HEAD_DIM]
            v = qkv[:, 2 * HIDDEN + hd * HEAD_DIM:2 * HIDDEN + (hd + 1) * HEAD_DIM]
            q = q.reshape(bsz, S_PAD, HEAD_DIM)
            k = k.reshape(bsz, S_PAD, HEAD_DIM)
            v = v.reshape(bsz, S_PAD, HEAD_DIM)
            s = jnp.einsum("bqd,bkd->bqk", q, k,
                           preferred_element_type=jnp.float32) * scale
            s = s + kmask                                   # mask padded keys
            m = jnp.max(s, axis=-1, keepdims=True)
            p = jnp.exp(s - m)
            p = p * pl.reciprocal(jnp.sum(p, axis=-1, keepdims=True), approx=True)
            o = jnp.einsum("bqk,bkd->bqd", p, v,
                           preferred_element_type=jnp.float32)
            o = o.reshape(bsz * S_PAD, HEAD_DIM)
            # fold the "concat heads" into the output projection
            attn = attn + jnp.dot(o, ow[hd * HEAD_DIM:(hd + 1) * HEAD_DIM, :],
                                  preferred_element_type=jnp.float32)
        x = x + attn                                        # residual

        # pre-LN MLP (Linear -> GELU -> Linear)
        h = _ln(x, ln2_g_ref[l], ln2_b_ref[l])
        h = _gelu(jnp.dot(h, mlp_w1_ref[l],
                          preferred_element_type=jnp.float32) + mlp_b1_ref[l])
        h = jnp.dot(h, mlp_w2_ref[l],
                    preferred_element_type=jnp.float32) + mlp_b2_ref[l]
        x = x + h                                           # residual

    # ---- final LayerNorm + class-token extraction ----
    h = _ln(x, lnf_g_ref[...], lnf_b_ref[...])              # (B*S_PAD, D)
    cls = jnp.concatenate([h[b * S_PAD:b * S_PAD + 1, :] for b in range(bsz)],
                          axis=0)                           # (B, D)

    # ---- classification head + fc_emotion: bf16 weight streaming, f32 acc ----
    # TODO(synk): on v7x a 2-TensorCore split of this weight stream would give
    #             ~2x on the bandwidth-bound segment; kept single-core here.
    feat = jnp.dot(cls.astype(jnp.bfloat16), head_w_ref[...],
                   preferred_element_type=jnp.float32) + head_b_ref[...]  # (B, 1024)
    e = _gelu(jnp.dot(feat.astype(jnp.bfloat16), emo_w1_ref[...],
                      preferred_element_type=jnp.float32) + emo_b1_ref[...])  # (B, 512)
    y = jnp.dot(e.astype(jnp.bfloat16), emo_w2_ref[...],
                preferred_element_type=jnp.float32) + emo_b2_ref[...]         # (B, 256)
    out_ref[...] = y.astype(out_ref.dtype)


# ------------------------------ parameters ----------------------------------
def init_params(key):
    keys = iter(jax.random.split(key, 16))

    def nrm(shape, scale=0.02):
        return scale * jax.random.normal(next(keys), shape, dtype=jnp.float32)

    params = {
        # Conv2d(3, D, kernel=16, stride=16) expressed as a matmul over
        # flattened (c, ph, pw) patches (matches PyTorch weight layout).
        "patch_w": nrm((PATCH_DIM, HIDDEN)),
        "patch_b": jnp.zeros((HIDDEN,), jnp.float32),
        "cls_token": nrm((1, 1, HIDDEN)),
        "pos_emb": nrm((1, SEQ, HIDDEN)),
        "ln_g": jnp.ones((1, HIDDEN), jnp.float32),
        "ln_b": jnp.zeros((1, HIDDEN), jnp.float32),
        # Head + fc_emotion weights: stored bf16, K/N padded 1000 -> 1024 so
        # the weight-streaming GEMMs are lane-aligned; accumulation stays f32.
        "head_w": jnp.pad(nrm((HIDDEN, NUM_CLASSES)),
                          ((0, 0), (0, NUM_CLASSES_PAD - NUM_CLASSES))
                          ).astype(jnp.bfloat16),
        "head_b": jnp.zeros((1, NUM_CLASSES_PAD), jnp.float32),
        "emo_w1": jnp.pad(nrm((NUM_CLASSES, 512)),
                          ((0, NUM_CLASSES_PAD - NUM_CLASSES), (0, 0))
                          ).astype(jnp.bfloat16),
        "emo_b1": jnp.zeros((1, 512), jnp.float32),
        "emo_w2": nrm((512, 256)).astype(jnp.bfloat16),
        "emo_b2": jnp.zeros((1, 256), jnp.float32),
        # Encoder-layer weights stacked along a leading layer axis (f32).
        "layers": {
            "ln1_g": jnp.ones((NUM_LAYERS, 1, HIDDEN), jnp.float32),
            "ln1_b": jnp.zeros((NUM_LAYERS, 1, HIDDEN), jnp.float32),
            "qkv_w": nrm((NUM_LAYERS, HIDDEN, 3 * HIDDEN)),
            "qkv_b": jnp.zeros((NUM_LAYERS, 1, 3 * HIDDEN), jnp.float32),
            "out_w": nrm((NUM_LAYERS, HIDDEN, HIDDEN)),
            "out_b": jnp.zeros((NUM_LAYERS, 1, HIDDEN), jnp.float32),
            "ln2_g": jnp.ones((NUM_LAYERS, 1, HIDDEN), jnp.float32),
            "ln2_b": jnp.zeros((NUM_LAYERS, 1, HIDDEN), jnp.float32),
            "mlp_w1": nrm((NUM_LAYERS, HIDDEN, MLP_DIM)),
            "mlp_b1": jnp.zeros((NUM_LAYERS, 1, MLP_DIM), jnp.float32),
            "mlp_w2": nrm((NUM_LAYERS, MLP_DIM, HIDDEN)),
            "mlp_b2": jnp.zeros((NUM_LAYERS, 1, HIDDEN), jnp.float32),
        },
    }
    return params


# ------------------------------ forward pass --------------------------------
def vit_forward(params, x):
    """x: (B, C, H, W) float32 NCHW -> (B, 256).  Single fused pallas_call."""
    B = x.shape[0]

    # --- one-time XLA data movement: patch extraction into a lane-dense slab,
    #     padded to S_PAD rows per image (class slot + tail padding = zeros) ---
    patches = (x.reshape(B, C_IN, GRID_HW, PATCH, GRID_HW, PATCH)
                 .transpose(0, 2, 4, 1, 3, 5)
                 .reshape(B, NUM_PATCHES, PATCH_DIM))
    patches_pad = jnp.concatenate(
        [jnp.zeros((B, 1, PATCH_DIM), jnp.float32),             # class-token slot
         patches,
         jnp.zeros((B, S_PAD - SEQ, PATCH_DIM), jnp.float32)],  # padding slots
        axis=1).reshape(B * S_PAD, PATCH_DIM)

    # class token + positional embedding (+ conv bias for patch rows), padded
    # to S_PAD and tiled over batch -> added right after the patch matmul.
    row_cls = params["cls_token"].reshape(1, HIDDEN) + params["pos_emb"][0, 0:1]
    rows_patch = params["pos_emb"][0, 1:SEQ] + params["patch_b"][None, :]
    rows_pad = jnp.zeros((S_PAD - SEQ, HIDDEN), jnp.float32)
    seq0 = jnp.tile(jnp.concatenate([row_cls, rows_patch, rows_pad], axis=0), (B, 1))

    # additive attention bias: padded key columns get a large negative value.
    kmask = jnp.broadcast_to(
        jnp.where(jnp.arange(S_PAD) < SEQ, 0.0, -1e9).astype(jnp.float32)[None, :],
        (S_PAD, S_PAD))

    L = params["layers"]
    args = (patches_pad, seq0, kmask, params["patch_w"],
            L["ln1_g"], L["ln1_b"], L["qkv_w"], L["qkv_b"],
            L["out_w"], L["out_b"], L["ln2_g"], L["ln2_b"],
            L["mlp_w1"], L["mlp_b1"], L["mlp_w2"], L["mlp_b2"],
            params["ln_g"], params["ln_b"],
            params["head_w"], params["head_b"],
            params["emo_w1"], params["emo_b1"],
            params["emo_w2"], params["emo_b2"])

    return pl.pallas_call(
        _vit_fused_kernel,
        out_shape=jax.ShapeDtypeStruct((B, 256), jnp.float32),
        in_specs=[_VMEM] * len(args),
        out_specs=_VMEM,
    )(*args)


# ------------------------------ main -----------------------------------------
if __name__ == "__main__":
    key = jax.random.PRNGKey(0)
    k_param, k_x = jax.random.split(key)
    params = init_params(k_param)
    x = jax.random.normal(k_x, (BATCH, C_IN, IMG, IMG), dtype=jnp.float32)

    fwd = jax.jit(vit_forward)
    out = jax.block_until_ready(fwd(params, x))

    assert out.shape == (BATCH, 256), out.shape
    assert bool(jnp.all(jnp.isfinite(out)))
    print("KERNEL_OK")
</pallas_src>

<mosaic_0001>
module attributes {stable_mosaic.version = 11 : i64} {
  func.func @_vit_fused_kernel(%arg0: memref<16x768xf32, #tpu.memory_space<vmem>>, %arg1: memref<16x64xf32, #tpu.memory_space<vmem>>, %arg2: memref<8x8xf32, #tpu.memory_space<vmem>>, %arg3: memref<768x64xf32, #tpu.memory_space<vmem>>, %arg4: memref<2x1x64xf32, #tpu.memory_space<vmem>>, %arg5: memref<2x1x64xf32, #tpu.memory_space<vmem>>, %arg6: memref<2x64x192xf32, #tpu.memory_space<vmem>>, %arg7: memref<2x1x192xf32, #tpu.memory_space<vmem>>, %arg8: memref<2x64x64xf32, #tpu.memory_space<vmem>>, %arg9: memref<2x1x64xf32, #tpu.memory_space<vmem>>, %arg10: memref<2x1x64xf32, #tpu.memory_space<vmem>>, %arg11: memref<2x1x64xf32, #tpu.memory_space<vmem>>, %arg12: memref<2x64x128xf32, #tpu.memory_space<vmem>>, %arg13: memref<2x1x128xf32, #tpu.memory_space<vmem>>, %arg14: memref<2x128x64xf32, #tpu.memory_space<vmem>>, %arg15: memref<2x1x64xf32, #tpu.memory_space<vmem>>, %arg16: memref<1x64xf32, #tpu.memory_space<vmem>>, %arg17: memref<1x64xf32, #tpu.memory_space<vmem>>, %arg18: memref<64x1024xbf16, #tpu.memory_space<vmem>>, %arg19: memref<1x1024xf32, #tpu.memory_space<vmem>>, %arg20: memref<1024x512xbf16, #tpu.memory_space<vmem>>, %arg21: memref<1x512xf32, #tpu.memory_space<vmem>>, %arg22: memref<512x256xbf16, #tpu.memory_space<vmem>>, %arg23: memref<1x256xf32, #tpu.memory_space<vmem>>, %arg24: memref<2x256xf32, #tpu.memory_space<vmem>>) attributes {dimension_semantics = [], scalar_prefetch = 0 : i64, scratch_operands = 0 : i64, tpu.core_type = #tpu.core_type<tc>} {
    %c0 = arith.constant 0 : index
    %c0_0 = arith.constant 0 : index
    %0 = vector.load %arg2[%c0, %c0_0] : memref<8x8xf32, #tpu.memory_space<vmem>>, vector<8x8xf32>
    %c0_1 = arith.constant 0 : index
    %c0_2 = arith.constant 0 : index
    %1 = vector.load %arg0[%c0_1, %c0_2] : memref<16x768xf32, #tpu.memory_space<vmem>>, vector<16x768xf32>
    %c0_3 = arith.constant 0 : index
    %c0_4 = arith.constant 0 : index
    %2 = vector.load %arg3[%c0_3, %c0_4] : memref<768x64xf32, #tpu.memory_space<vmem>>, vector<768x64xf32>
    %cst = arith.constant dense<0.000000e+00> : vector<16x64xf32>
    %3 = tpu.matmul %1, %2, %cst {dimension_numbers = #tpu.dot_dimension_numbers<[1], [0], [0], [1], [0, 0, 1, 1], [], []>} : vector<16x768xf32>, vector<768x64xf32>, vector<16x64xf32> -> vector<16x64xf32>
    %c0_5 = arith.constant 0 : index
    %c0_6 = arith.constant 0 : index
    %4 = vector.load %arg1[%c0_5, %c0_6] : memref<16x64xf32, #tpu.memory_space<vmem>>, vector<16x64xf32>
    %5 = arith.addf %3, %4 : vector<16x64xf32>
    %c0_7 = arith.constant 0 : index
    %c0_8 = arith.constant 0 : index
    %c0_9 = arith.constant 0 : index
    %6 = vector.load %arg4[%c0_7, %c0_8, %c0_9] : memref<2x1x64xf32, #tpu.memory_space<vmem>>, vector<1x1x64xf32>
    %7 = vector.shape_cast %6 : vector<1x1x64xf32> to vector<1x64xf32>
    %c0_10 = arith.constant 0 : index
    %c0_11 = arith.constant 0 : index
    %c0_12 = arith.constant 0 : index
    %8 = vector.load %arg5[%c0_10, %c0_11, %c0_12] : memref<2x1x64xf32, #tpu.memory_space<vmem>>, vector<1x1x64xf32>
    %9 = vector.shape_cast %8 : vector<1x1x64xf32> to vector<1x64xf32>
    %cst_13 = arith.constant dense<0.000000e+00> : vector<16xf32>
    %10 = vector.multi_reduction <add>, %5, %cst_13 [1] : vector<16x64xf32> to vector<16xf32>
    %11 = vector.shape_cast %10 : vector<16xf32> to vector<16x1xf32>
    %cst_14 = arith.constant 6.400000e+01 : f32
    %12 = vector.broadcast %cst_14 : f32 to vector<16x1xf32>
    %13 = arith.divf %11, %12 : vector<16x1xf32>
    %14 = vector.broadcast %13 : vector<16x1xf32> to vector<16x64xf32>
    %15 = arith.subf %5, %14 : vector<16x64xf32>
    %16 = vector.broadcast %13 : vector<16x1xf32> to vector<16x64xf32>
    %17 = arith.subf %5, %16 : vector<16x64xf32>
    %18 = arith.mulf %15, %17 : vector<16x64xf32>
    %cst_15 = arith.constant dense<0.000000e+00> : vector<16xf32>
    %19 = vector.multi_reduction <add>, %18, %cst_15 [1] : vector<16x64xf32> to vector<16xf32>
    %20 = vector.shape_cast %19 : vector<16xf32> to vector<16x1xf32>
    %cst_16 = arith.constant 6.400000e+01 : f32
    %21 = vector.broadcast %cst_16 : f32 to vector<16x1xf32>
    %22 = arith.divf %20, %21 : vector<16x1xf32>
    %23 = vector.broadcast %13 : vector<16x1xf32> to vector<16x64xf32>
    %24 = arith.subf %5, %23 : vector<16x64xf32>
    %cst_17 = arith.constant 9.99999997E-7 : f32
    %25 = vector.broadcast %cst_17 : f32 to vector<16x1xf32>
    %26 = arith.addf %22, %25 : vector<16x1xf32>
    %27 = math.rsqrt %26 : vector<16x1xf32>
    %28 = vector.broadcast %27 : vector<16x1xf32> to vector<16x64xf32>
    %29 = arith.mulf %24, %28 : vector<16x64xf32>
    %30 = vector.broadcast %7 : vector<1x64xf32> to vector<16x64xf32>
    %31 = arith.mulf %29, %30 : vector<16x64xf32>
    %32 = vector.broadcast %9 : vector<1x64xf32> to vector<16x64xf32>
    %33 = arith.addf %31, %32 : vector<16x64xf32>
    %c0_18 = arith.constant 0 : index
    %c0_19 = arith.constant 0 : index
    %c0_20 = arith.constant 0 : index
    %34 = vector.load %arg6[%c0_18, %c0_19, %c0_20] : memref<2x64x192xf32, #tpu.memory_space<vmem>>, vector<1x64x192xf32>
    %35 = vector.shape_cast %34 : vector<1x64x192xf32> to vector<64x192xf32>
    %cst_21 = arith.constant dense<0.000000e+00> : vector<16x192xf32>
    %36 = tpu.matmul %33, %35, %cst_21 {dimension_numbers = #tpu.dot_dimension_numbers<[1], [0], [0], [1], [0, 0, 1, 1], [], []>} : vector<16x64xf32>, vector<64x192xf32>, vector<16x192xf32> -> vector<16x192xf32>
    %c0_22 = arith.constant 0 : index
    %c0_23 = arith.constant 0 : index
    %c0_24 = arith.constant 0 : index
    %37 = vector.load %arg7[%c0_22, %c0_23, %c0_24] : memref<2x1x192xf32, #tpu.memory_space<vmem>>, vector<1x1x192xf32>
    %38 = vector.shape_cast %37 : vector<1x1x192xf32> to vector<1x192xf32>
    %39 = vector.broadcast %38 : vector<1x192xf32> to vector<16x192xf32>
    %40 = arith.addf %36, %39 : vector<16x192xf32>
    %c0_25 = arith.constant 0 : index
    %c0_26 = arith.constant 0 : index
    %c0_27 = arith.constant 0 : index
    %41 = vector.load %arg8[%c0_25, %c0_26, %c0_27] : memref<2x64x64xf32, #tpu.memory_space<vmem>>, vector<1x64x64xf32>
    %42 = vector.shape_cast %41 : vector<1x64x64xf32> to vector<64x64xf32>
    %c0_28 = arith.constant 0 : index
    %c0_29 = arith.constant 0 : index
    %c0_30 = arith.constant 0 : index
    %43 = vector.load %arg9[%c0_28, %c0_29, %c0_30] : memref<2x1x64xf32, #tpu.memory_space<vmem>>, vector<1x1x64xf32>
    %44 = vector.shape_cast %43 : vector<1x1x64xf32> to vector<1x64xf32>
    %45 = vector.extract_strided_slice %40 {offsets = [0, 0], sizes = [16, 16], strides = [1, 1]} : vector<16x192xf32> to vector<16x16xf32>
    %46 = vector.extract_strided_slice %40 {offsets = [0, 64], sizes = [16, 16], strides = [1, 1]} : vector<16x192xf32> to vector<16x16xf32>
    %47 = vector.extract_strided_slice %40 {offsets = [0, 128], sizes = [16, 16], strides = [1, 1]} : vector<16x192xf32> to vector<16x16xf32>
    %48 = vector.shape_cast %45 : vector<16x16xf32> to vector<2x8x16xf32>
    %49 = vector.shape_cast %46 : vector<16x16xf32> to vector<2x8x16xf32>
    %50 = vector.shape_cast %47 : vector<16x16xf32> to vector<2x8x16xf32>
    "tpu.trace_start"() <{level = 10 : i32, message = "bqd,bkd->bqk"}> : () -> ()
    %cst_31 = arith.constant dense<0.000000e+00> : vector<2x8x8xf32>
    %51 = tpu.matmul %48, %49, %cst_31 {dimension_numbers = #tpu.dot_dimension_numbers<[2], [2], [1], [1], [0, 0, 0, 1, 1, 1], [0], [0]>} : vector<2x8x16xf32>, vector<2x8x16xf32>, vector<2x8x8xf32> -> vector<2x8x8xf32>
    "tpu.trace_stop"() : () -> ()
    %cst_32 = arith.constant 2.500000e-01 : f32
    %52 = vector.broadcast %cst_32 : f32 to vector<2x8x8xf32>
    %53 = arith.mulf %51, %52 : vector<2x8x8xf32>
    %54 = vector.shape_cast %0 : vector<8x8xf32> to vector<1x8x8xf32>
    %55 = vector.broadcast %54 : vector<1x8x8xf32> to vector<2x8x8xf32>
    %56 = arith.addf %53, %55 : vector<2x8x8xf32>
    %cst_33 = arith.constant dense<0xFF800000> : vector<2x8xf32>
    %57 = vector.multi_reduction <maximumf>, %56, %cst_33 [2] : vector<2x8x8xf32> to vector<2x8xf32>
    %58 = vector.shape_cast %57 : vector<2x8xf32> to vector<2x8x1xf32>
    %59 = vector.broadcast %58 : vector<2x8x1xf32> to vector<2x8x8xf32>
    %60 = arith.subf %56, %59 : vector<2x8x8xf32>
    %61 = math.exp %60 : vector<2x8x8xf32>
    %cst_34 = arith.constant dense<0.000000e+00> : vector<2x8xf32>
    %62 = vector.multi_reduction <add>, %61, %cst_34 [2] : vector<2x8x8xf32> to vector<2x8xf32>
    %63 = vector.shape_cast %62 : vector<2x8xf32> to vector<2x8x1xf32>
    %64 = tpu.reciprocal %63 {approx = true} : vector<2x8x1xf32> -> vector<2x8x1xf32>
    %65 = vector.broadcast %64 : vector<2x8x1xf32> to vector<2x8x8xf32>
    %66 = arith.mulf %61, %65 : vector<2x8x8xf32>
    "tpu.trace_start"() <{level = 10 : i32, message = "bqk,bkd->bqd"}> : () -> ()
    %cst_35 = arith.constant dense<0.000000e+00> : vector<2x8x16xf32>
    %67 = tpu.matmul %66, %50, %cst_35 {dimension_numbers = #tpu.dot_dimension_numbers<[2], [1], [1], [2], [0, 0, 0, 1, 1, 2], [0], [0]>} : vector<2x8x8xf32>, vector<2x8x16xf32>, vector<2x8x16xf32> -> vector<2x8x16xf32>
    "tpu.trace_stop"() : () -> ()
    %68 = vector.shape_cast %67 : vector<2x8x16xf32> to vector<16x16xf32>
    %69 = vector.extract_strided_slice %42 {offsets = [0, 0], sizes = [16, 64], strides = [1, 1]} : vector<64x64xf32> to vector<16x64xf32>
    %cst_36 = arith.constant dense<0.000000e+00> : vector<16x64xf32>
    %70 = tpu.matmul %68, %69, %cst_36 {dimension_numbers = #tpu.dot_dimension_numbers<[1], [0], [0], [1], [0, 0, 1, 1], [], []>} : vector<16x16xf32>, vector<16x64xf32>, vector<16x64xf32> -> vector<16x64xf32>
    %71 = vector.broadcast %44 : vector<1x64xf32> to vector<16x64xf32>
    %72 = arith.addf %71, %70 : vector<16x64xf32>
    %73 = vector.extract_strided_slice %40 {offsets = [0, 16], sizes = [16, 16], strides = [1, 1]} : vector<16x192xf32> to vector<16x16xf32>
    %74 = vector.extract_strided_slice %40 {offsets = [0, 80], sizes = [16, 16], strides = [1, 1]} : vector<16x192xf32> to vector<16x16xf32>
    %75 = vector.extract_strided_slice %40 {offsets = [0, 144], sizes = [16, 16], strides = [1, 1]} : vector<16x192xf32> to vector<16x16xf32>
    %76 = vector.shape_cast %73 : vector<16x16xf32> to vector<2x8x16xf32>
    %77 = vector.shape_cast %74 : vector<16x16xf32> to vector<2x8x16xf32>
    %78 = vector.shape_cast %75 : vector<16x16xf32> to vector<2x8x16xf32>
    "tpu.trace_start"() <{level = 10 : i32, message = "bqd,bkd->bqk"}> : () -> ()
    %cst_37 = arith.constant dense<0.000000e+00> : vector<2x8x8xf32>
    %79 = tpu.matmul %76, %77, %cst_37 {dimension_numbers = #tpu.dot_dimension_numbers<[2], [2], [1], [1], [0, 0, 0, 1, 1, 1], [0], [0]>} : vector<2x8x16xf32>, vector<2x8x16xf32>, vector<2x8x8xf32> -> vector<2x8x8xf32>
    "tpu.trace_stop"() : () -> ()
    %cst_38 = arith.constant 2.500000e-01 : f32
    %80 = vector.broadcast %cst_38 : f32 to vector<2x8x8xf32>
    %81 = arith.mulf %79, %80 : vector<2x8x8xf32>
    %82 = vector.shape_cast %0 : vector<8x8xf32> to vector<1x8x8xf32>
    %83 = vector.broadcast %82 : vector<1x8x8xf32> to vector<2x8x8xf32>
    %84 = arith.addf %81, %83 : vector<2x8x8xf32>
    %cst_39 = arith.constant dense<0xFF800000> : vector<2x8xf32>
    %85 = vector.multi_reduction <maximumf>, %84, %cst_39 [2] : vector<2x8x8xf32> to vector<2x8xf32>
    %86 = vector.shape_cast %85 : vector<2x8xf32> to vector<2x8x1xf32>
    %87 = vector.broadcast %86 : vector<2x8x1xf32> to vector<2x8x8xf32>
    %88 = arith.subf %84, %87 : vector<2x8x8xf32>
    %89 = math.exp %88 : vector<2x8x8xf32>
    %cst_40 = arith.constant dense<0.000000e+00> : vector<2x8xf32>
    %90 = vector.multi_reduction <add>, %89, %cst_40 [2] : vector<2x8x8xf32> to vector<2x8xf32>
    %91 = vector.shape_cast %90 : vector<2x8xf32> to vector<2x8x1xf32>
    %92 = tpu.reciprocal %91 {approx = true} : vector<2x8x1xf32> -> vector<2x8x1xf32>
    %93 = vector.broadcast %92 : vector<2x8x1xf32> to vector<2x8x8xf32>
    %94 = arith.mulf %89, %93 : vector<2x8x8xf32>
    "tpu.trace_start"() <{level = 10 : i32, message = "bqk,bkd->bqd"}> : () -> ()
    %cst_41 = arith.constant dense<0.000000e+00> : vector<2x8x16xf32>
    %95 = tpu.matmul %94, %78, %cst_41 {dimension_numbers = #tpu.dot_dimension_numbers<[2], [1], [1], [2], [0, 0, 0, 1, 1, 2], [0], [0]>} : vector<2x8x8xf32>, vector<2x8x16xf32>, vector<2x8x16xf32> -> vector<2x8x16xf32>
    "tpu.trace_stop"() : () -> ()
    %96 = vector.shape_cast %95 : vector<2x8x16xf32> to vector<16x16xf32>
    %97 = vector.extract_strided_slice %42 {offsets = [16, 0], sizes = [16, 64], strides = [1, 1]} : vector<64x64xf32> to vector<16x64xf32>
    %cst_42 = arith.constant dense<0.000000e+00> : vector<16x64xf32>
    %98 = tpu.matmul %96, %97, %cst_42 {dimension_numbers = #tpu.dot_dimension_numbers<[1], [0], [0], [1], [0, 0, 1, 1], [], []>} : vector<16x16xf32>, vector<16x64xf32>, vector<16x64xf32> -> vector<16x64xf32>
    %99 = arith.addf %72, %98 : vector<16x64xf32>
    %100 = vector.extract_strided_slice %40 {offsets = [0, 32], sizes = [16, 16], strides = [1, 1]} : vector<16x192xf32> to vector<16x16xf32>
    %101 = vector.extract_strided_slice %40 {offsets = [0, 96], sizes = [16, 16], strides = [1, 1]} : vector<16x192xf32> to vector<16x16xf32>
    %102 = vector.extract_strided_slice %40 {offsets = [0, 160], sizes = [16, 16], strides = [1, 1]} : vector<16x192xf32> to vector<16x16xf32>
    %103 = vector.shape_cast %100 : vector<16x16xf32> to vector<2x8x16xf32>
    %104 = vector.shape_cast %101 : vector<16x16xf32> to vector<2x8x16xf32>
    %105 = vector.shape_cast %102 : vector<16x16xf32> to vector<2x8x16xf32>
    "tpu.trace_start"() <{level = 10 : i32, message = "bqd,bkd->bqk"}> : () -> ()
    %cst_43 = arith.constant dense<0.000000e+00> : vector<2x8x8xf32>
    %106 = tpu.matmul %103, %104, %cst_43 {dimension_numbers = #tpu.dot_dimension_numbers<[2], [2], [1], [1], [0, 0, 0, 1, 1, 1], [0], [0]>} : vector<2x8x16xf32>, vector<2x8x16xf32>, vector<2x8x8xf32> -> vector<2x8x8xf32>
    "tpu.trace_stop"() : () -> ()
    %cst_44 = arith.constant 2.500000e-01 : f32
    %107 = vector.broadcast %cst_44 : f32 to vector<2x8x8xf32>
    %108 = arith.mulf %106, %107 : vector<2x8x8xf32>
    %109 = vector.shape_cast %0 : vector<8x8xf32> to vector<1x8x8xf32>
    %110 = vector.broadcast %109 : vector<1x8x8xf32> to vector<2x8x8xf32>
    %111 = arith.addf %108, %110 : vector<2x8x8xf32>
    %cst_45 = arith.constant dense<0xFF800000> : vector<2x8xf32>
    %112 = vector.multi_reduction <maximumf>, %111, %cst_45 [2] : vector<2x8x8xf32> to vector<2x8xf32>
    %113 = vector.shape_cast %112 : vector<2x8xf32> to vector<2x8x1xf32>
    %114 = vector.broadcast %113 : vector<2x8x1xf32> to vector<2x8x8xf32>
    %115 = arith.subf %111, %114 : vector<2x8x8xf32>
    %116 = math.exp %115 : vector<2x8x8xf32>
    %cst_46 = arith.constant dense<0.000000e+00> : vector<2x8xf32>
    %117 = vector.multi_reduction <add>, %116, %cst_46 [2] : vector<2x8x8xf32> to vector<2x8xf32>
    %118 = vector.shape_cast %117 : vector<2x8xf32> to vector<2x8x1xf32>
    %119 = tpu.reciprocal %118 {approx = true} : vector<2x8x1xf32> -> vector<2x8x1xf32>
    %120 = vector.broadcast %119 : vector<2x8x1xf32> to vector<2x8x8xf32>
    %121 = arith.mulf %116, %120 : vector<2x8x8xf32>
    "tpu.trace_start"() <{level = 10 : i32, message = "bqk,bkd->bqd"}> : () -> ()
    %cst_47 = arith.constant dense<0.000000e+00> : vector<2x8x16xf32>
    %122 = tpu.matmul %121, %105, %cst_47 {dimension_numbers = #tpu.dot_dimension_numbers<[2], [1], [1], [2], [0, 0, 0, 1, 1, 2], [0], [0]>} : vector<2x8x8xf32>, vector<2x8x16xf32>, vector<2x8x16xf32> -> vector<2x8x16xf32>
    "tpu.trace_stop"() : () -> ()
    %123 = vector.shape_cast %122 : vector<2x8x16xf32> to vector<16x16xf32>
    %124 = vector.extract_strided_slice %42 {offsets = [32, 0], sizes = [16, 64], strides = [1, 1]} : vector<64x64xf32> to vector<16x64xf32>
    %cst_48 = arith.constant dense<0.000000e+00> : vector<16x64xf32>
    %125 = tpu.matmul %123, %124, %cst_48 {dimension_numbers = #tpu.dot_dimension_numbers<[1], [0], [0], [1], [0, 0, 1, 1], [], []>} : vector<16x16xf32>, vector<16x64xf32>, vector<16x64xf32> -> vector<16x64xf32>
    %126 = arith.addf %99, %125 : vector<16x64xf32>
    %127 = vector.extract_strided_slice %40 {offsets = [0, 48], sizes = [16, 16], strides = [1, 1]} : vector<16x192xf32> to vector<16x16xf32>
    %128 = vector.extract_strided_slice %40 {offsets = [0, 112], sizes = [16, 16], strides = [1, 1]} : vector<16x192xf32> to vector<16x16xf32>
    %129 = vector.extract_strided_slice %40 {offsets = [0, 176], sizes = [16, 16], strides = [1, 1]} : vector<16x192xf32> to vector<16x16xf32>
    %130 = vector.shape_cast %127 : vector<16x16xf32> to vector<2x8x16xf32>
    %131 = vector.shape_cast %128 : vector<16x16xf32> to vector<2x8x16xf32>
    %132 = vector.shape_cast %129 : vector<16x16xf32> to vector<2x8x16xf32>
    "tpu.trace_start"() <{level = 10 : i32, message = "bqd,bkd->bqk"}> : () -> ()
    %cst_49 = arith.constant dense<0.000000e+00> : vector<2x8x8xf32>
    %133 = tpu.matmul %130, %131, %cst_49 {dimension_numbers = #tpu.dot_dimension_numbers<[2], [2], [1], [1], [0, 0, 0, 1, 1, 1], [0], [0]>} : vector<2x8x16xf32>, vector<2x8x16xf32>, vector<2x8x8xf32> -> vector<2x8x8xf32>
    "tpu.trace_stop"() : () -> ()
    %cst_50 = arith.constant 2.500000e-01 : f32
    %134 = vector.broadcast %cst_50 : f32 to vector<2x8x8xf32>
    %135 = arith.mulf %133, %134 : vector<2x8x8xf32>
    %136 = vector.shape_cast %0 : vector<8x8xf32> to vector<1x8x8xf32>
    %137 = vector.broadcast %136 : vector<1x8x8xf32> to vector<2x8x8xf32>
    %138 = arith.addf %135, %137 : vector<2x8x8xf32>
    %cst_51 = arith.constant dense<0xFF800000> : vector<2x8xf32>
    %139 = vector.multi_reduction <maximumf>, %138, %cst_51 [2] : vector<2x8x8xf32> to vector<2x8xf32>
    %140 = vector.shape_cast %139 : vector<2x8xf32> to vector<2x8x1xf32>
    %141 = vector.broadcast %140 : vector<2x8x1xf32> to vector<2x8x8xf32>
    %142 = arith.subf %138, %141 : vector<2x8x8xf32>
    %143 = math.exp %142 : vector<2x8x8xf32>
    %cst_52 = arith.constant dense<0.000000e+00> : vector<2x8xf32>
    %144 = vector.multi_reduction <add>, %143, %cst_52 [2] : vector<2x8x8xf32> to vector<2x8xf32>
    %145 = vector.shape_cast %144 : vector<2x8xf32> to vector<2x8x1xf32>
    %146 = tpu.reciprocal %145 {approx = true} : vector<2x8x1xf32> -> vector<2x8x1xf32>
    %147 = vector.broadcast %146 : vector<2x8x1xf32> to vector<2x8x8xf32>
    %148 = arith.mulf %143, %147 : vector<2x8x8xf32>
    "tpu.trace_start"() <{level = 10 : i32, message = "bqk,bkd->bqd"}> : () -> ()
    %cst_53 = arith.constant dense<0.000000e+00> : vector<2x8x16xf32>
    %149 = tpu.matmul %148, %132, %cst_53 {dimension_numbers = #tpu.dot_dimension_numbers<[2], [1], [1], [2], [0, 0, 0, 1, 1, 2], [0], [0]>} : vector<2x8x8xf32>, vector<2x8x16xf32>, vector<2x8x16xf32> -> vector<2x8x16xf32>
    "tpu.trace_stop"() : () -> ()
    %150 = vector.shape_cast %149 : vector<2x8x16xf32> to vector<16x16xf32>
    %151 = vector.extract_strided_slice %42 {offsets = [48, 0], sizes = [16, 64], strides = [1, 1]} : vector<64x64xf32> to vector<16x64xf32>
    %cst_54 = arith.constant dense<0.000000e+00> : vector<16x64xf32>
    %152 = tpu.matmul %150, %151, %cst_54 {dimension_numbers = #tpu.dot_dimension_numbers<[1], [0], [0], [1], [0, 0, 1, 1], [], []>} : vector<16x16xf32>, vector<16x64xf32>, vector<16x64xf32> -> vector<16x64xf32>
    %153 = arith.addf %126, %152 : vector<16x64xf32>
    %154 = arith.addf %5, %153 : vector<16x64xf32>
    %c0_55 = arith.constant 0 : index
    %c0_56 = arith.constant 0 : index
    %c0_57 = arith.constant 0 : index
    %155 = vector.load %arg10[%c0_55, %c0_56, %c0_57] : memref<2x1x64xf32, #tpu.memory_space<vmem>>, vector<1x1x64xf32>
    %156 = vector.shape_cast %155 : vector<1x1x64xf32> to vector<1x64xf32>
    %c0_58 = arith.constant 0 : index
    %c0_59 = arith.constant 0 : index
    %c0_60 = arith.constant 0 : index
    %157 = vector.load %arg11[%c0_58, %c0_59, %c0_60] : memref<2x1x64xf32, #tpu.memory_space<vmem>>, vector<1x1x64xf32>
    %158 = vector.shape_cast %157 : vector<1x1x64xf32> to vector<1x64xf32>
    %cst_61 = arith.constant dense<0.000000e+00> : vector<16xf32>
    %159 = vector.multi_reduction <add>, %154, %cst_61 [1] : vector<16x64xf32> to vector<16xf32>
    %160 = vector.shape_cast %159 : vector<16xf32> to vector<16x1xf32>
    %cst_62 = arith.constant 6.400000e+01 : f32
    %161 = vector.broadcast %cst_62 : f32 to vector<16x1xf32>
    %162 = arith.divf %160, %161 : vector<16x1xf32>
    %163 = vector.broadcast %162 : vector<16x1xf32> to vector<16x64xf32>
    %164 = arith.subf %154, %163 : vector<16x64xf32>
    %165 = vector.broadcast %162 : vector<16x1xf32> to vector<16x64xf32>
    %166 = arith.subf %154, %165 : vector<16x64xf32>
    %167 = arith.mulf %164, %166 : vector<16x64xf32>
    %cst_63 = arith.constant dense<0.000000e+00> : vector<16xf32>
    %168 = vector.multi_reduction <add>, %167, %cst_63 [1] : vector<16x64xf32> to vector<16xf32>
    %169 = vector.shape_cast %168 : vector<16xf32> to vector<16x1xf32>
    %cst_64 = arith.constant 6.400000e+01 : f32
    %170 = vector.broadcast %cst_64 : f32 to vector<16x1xf32>
    %171 = arith.divf %169, %170 : vector<16x1xf32>
    %172 = vector.broadcast %162 : vector<16x1xf32> to vector<16x64xf32>
    %173 = arith.subf %154, %172 : vector<16x64xf32>
    %cst_65 = arith.constant 9.99999997E-7 : f32
    %174 = vector.broadcast %cst_65 : f32 to vector<16x1xf32>
    %175 = arith.addf %171, %174 : vector<16x1xf32>
    %176 = math.rsqrt %175 : vector<16x1xf32>
    %177 = vector.broadcast %176 : vector<16x1xf32> to vector<16x64xf32>
    %178 = arith.mulf %173, %177 : vector<16x64xf32>
    %179 = vector.broadcast %156 : vector<1x64xf32> to vector<16x64xf32>
    %180 = arith.mulf %178, %179 : vector<16x64xf32>
    %181 = vector.broadcast %158 : vector<1x64xf32> to vector<16x64xf32>
    %182 = arith.addf %180, %181 : vector<16x64xf32>
    %c0_66 = arith.constant 0 : index
    %c0_67 = arith.constant 0 : index
    %c0_68 = arith.constant 0 : index
    %183 = vector.load %arg12[%c0_66, %c0_67, %c0_68] : memref<2x64x128xf32, #tpu.memory_space<vmem>>, vector<1x64x128xf32>
    %184 = vector.shape_cast %183 : vector<1x64x128xf32> to vector<64x128xf32>
    %cst_69 = arith.constant dense<0.000000e+00> : vector<16x128xf32>
    %185 = tpu.matmul %182, %184, %cst_69 {dimension_numbers = #tpu.dot_dimension_numbers<[1], [0], [0], [1], [0, 0, 1, 1], [], []>} : vector<16x64xf32>, vector<64x128xf32>, vector<16x128xf32> -> vector<16x128xf32>
    %c0_70 = arith.constant 0 : index
    %c0_71 = arith.constant 0 : index
    %c0_72 = arith.constant 0 : index
    %186 = vector.load %arg13[%c0_70, %c0_71, %c0_72] : memref<2x1x128xf32, #tpu.memory_space<vmem>>, vector<1x1x128xf32>
    %187 = vector.shape_cast %186 : vector<1x1x128xf32> to vector<1x128xf32>
    %188 = vector.broadcast %187 : vector<1x128xf32> to vector<16x128xf32>
    %189 = arith.addf %185, %188 : vector<16x128xf32>
    %cst_73 = arith.constant 5.000000e-01 : f32
    %190 = vector.broadcast %cst_73 : f32 to vector<16x128xf32>
    %191 = arith.mulf %190, %189 : vector<16x128xf32>
    %cst_74 = arith.constant 0.707106769 : f32
    %192 = vector.broadcast %cst_74 : f32 to vector<16x128xf32>
    %193 = arith.mulf %189, %192 : vector<16x128xf32>
    %cst_75 = arith.constant 0.000000e+00 : f32
    %194 = vector.broadcast %cst_75 : f32 to vector<16x128xf32>
    %195 = arith.cmpf oge, %193, %194 : vector<16x128xf32>
    %cst_76 = arith.constant 1.000000e+00 : f32
    %cst_77 = arith.constant -1.000000e+00 : f32
    %196 = vector.broadcast %cst_76 : f32 to vector<16x128xf32>
    %197 = vector.broadcast %cst_77 : f32 to vector<16x128xf32>
    %198 = arith.select %195, %196, %197 : vector<16x128xi1>, vector<16x128xf32>
    %199 = math.absf %193 : vector<16x128xf32>
    %cst_78 = arith.constant 0.327591091 : f32
    %200 = vector.broadcast %cst_78 : f32 to vector<16x128xf32>
    %201 = arith.mulf %200, %199 : vector<16x128xf32>
    %cst_79 = arith.constant 1.000000e+00 : f32
    %202 = vector.broadcast %cst_79 : f32 to vector<16x128xf32>
    %203 = arith.addf %202, %201 : vector<16x128xf32>
    %cst_80 = arith.constant 1.000000e+00 : f32
    %204 = vector.broadcast %cst_80 : f32 to vector<16x128xf32>
    %205 = arith.divf %204, %203 : vector<16x128xf32>
    %cst_81 = arith.constant 1.06140542 : f32
    %206 = vector.broadcast %cst_81 : f32 to vector<16x128xf32>
    %207 = arith.mulf %206, %205 : vector<16x128xf32>
    %cst_82 = arith.constant -1.45315206 : f32
    %208 = vector.broadcast %cst_82 : f32 to vector<16x128xf32>
    %209 = arith.addf %207, %208 : vector<16x128xf32>
    %210 = arith.mulf %209, %205 : vector<16x128xf32>
    %cst_83 = arith.constant 1.42141378 : f32
    %211 = vector.broadcast %cst_83 : f32 to vector<16x128xf32>
    %212 = arith.addf %210, %211 : vector<16x128xf32>
    %213 = arith.mulf %212, %205 : vector<16x128xf32>
    %cst_84 = arith.constant -0.284496725 : f32
    %214 = vector.broadcast %cst_84 : f32 to vector<16x128xf32>
    %215 = arith.addf %213, %214 : vector<16x128xf32>
    %216 = arith.mulf %215, %205 : vector<16x128xf32>
    %cst_85 = arith.constant 0.254829586 : f32
    %217 = vector.broadcast %cst_85 : f32 to vector<16x128xf32>
    %218 = arith.addf %216, %217 : vector<16x128xf32>
    %219 = arith.mulf %218, %205 : vector<16x128xf32>
    %cst_86 = arith.constant 0.000000e+00 : f32
    %220 = vector.broadcast %cst_86 : f32 to vector<16x128xf32>
    %221 = arith.subf %220, %199 : vector<16x128xf32>
    %222 = arith.mulf %221, %199 : vector<16x128xf32>
    %223 = math.exp %222 : vector<16x128xf32>
    %224 = arith.mulf %219, %223 : vector<16x128xf32>
    %cst_87 = arith.constant 1.000000e+00 : f32
    %225 = vector.broadcast %cst_87 : f32 to vector<16x128xf32>
    %226 = arith.subf %225, %224 : vector<16x128xf32>
    %227 = arith.mulf %198, %226 : vector<16x128xf32>
    %cst_88 = arith.constant 1.000000e+00 : f32
    %228 = vector.broadcast %cst_88 : f32 to vector<16x128xf32>
    %229 = arith.addf %228, %227 : vector<16x128xf32>
    %230 = arith.mulf %191, %229 : vector<16x128xf32>
    %c0_89 = arith.constant 0 : index
    %c0_90 = arith.constant 0 : index
    %c0_91 = arith.constant 0 : index
    %231 = vector.load %arg14[%c0_89, %c0_90, %c0_91] : memref<2x128x64xf32, #tpu.memory_space<vmem>>, vector<1x128x64xf32>
    %232 = vector.shape_cast %231 : vector<1x128x64xf32> to vector<128x64xf32>
    %cst_92 = arith.constant dense<0.000000e+00> : vector<16x64xf32>
    %233 = tpu.matmul %230, %232, %cst_92 {dimension_numbers = #tpu.dot_dimension_numbers<[1], [0], [0], [1], [0, 0, 1, 1], [], []>} : vector<16x128xf32>, vector<128x64xf32>, vector<16x64xf32> -> vector<16x64xf32>
    %c0_93 = arith.constant 0 : index
    %c0_94 = arith.constant 0 : index
    %c0_95 = arith.constant 0 : index
    %234 = vector.load %arg15[%c0_93, %c0_94, %c0_95] : memref<2x1x64xf32, #tpu.memory_space<vmem>>, vector<1x1x64xf32>
    %235 = vector.shape_cast %234 : vector<1x1x64xf32> to vector<1x64xf32>
    %236 = vector.broadcast %235 : vector<1x64xf32> to vector<16x64xf32>
    %237 = arith.addf %233, %236 : vector<16x64xf32>
    %238 = arith.addf %154, %237 : vector<16x64xf32>
    %c1 = arith.constant 1 : index
    %c0_96 = arith.constant 0 : index
    %c0_97 = arith.constant 0 : index
    %239 = vector.load %arg4[%c1, %c0_96, %c0_97] : memref<2x1x64xf32, #tpu.memory_space<vmem>>, vector<1x1x64xf32>
    %240 = vector.shape_cast %239 : vector<1x1x64xf32> to vector<1x64xf32>
    %c1_98 = arith.constant 1 : index
    %c0_99 = arith.constant 0 : index
    %c0_100 = arith.constant 0 : index
    %241 = vector.load %arg5[%c1_98, %c0_99, %c0_100] : memref<2x1x64xf32, #tpu.memory_space<vmem>>, vector<1x1x64xf32>
    %242 = vector.shape_cast %241 : vector<1x1x64xf32> to vector<1x64xf32>
    %cst_101 = arith.constant dense<0.000000e+00> : vector<16xf32>
    %243 = vector.multi_reduction <add>, %238, %cst_101 [1] : vector<16x64xf32> to vector<16xf32>
    %244 = vector.shape_cast %243 : vector<16xf32> to vector<16x1xf32>
    %cst_102 = arith.constant 6.400000e+01 : f32
    %245 = vector.broadcast %cst_102 : f32 to vector<16x1xf32>
    %246 = arith.divf %244, %245 : vector<16x1xf32>
    %247 = vector.broadcast %246 : vector<16x1xf32> to vector<16x64xf32>
    %248 = arith.subf %238, %247 : vector<16x64xf32>
    %249 = vector.broadcast %246 : vector<16x1xf32> to vector<16x64xf32>
    %250 = arith.subf %238, %249 : vector<16x64xf32>
    %251 = arith.mulf %248, %250 : vector<16x64xf32>
    %cst_103 = arith.constant dense<0.000000e+00> : vector<16xf32>
    %252 = vector.multi_reduction <add>, %251, %cst_103 [1] : vector<16x64xf32> to vector<16xf32>
    %253 = vector.shape_cast %252 : vector<16xf32> to vector<16x1xf32>
    %cst_104 = arith.constant 6.400000e+01 : f32
    %254 = vector.broadcast %cst_104 : f32 to vector<16x1xf32>
    %255 = arith.divf %253, %254 : vector<16x1xf32>
    %256 = vector.broadcast %246 : vector<16x1xf32> to vector<16x64xf32>
    %257 = arith.subf %238, %256 : vector<16x64xf32>
    %cst_105 = arith.constant 9.99999997E-7 : f32
    %258 = vector.broadcast %cst_105 : f32 to vector<16x1xf32>
    %259 = arith.addf %255, %258 : vector<16x1xf32>
    %260 = math.rsqrt %259 : vector<16x1xf32>
    %261 = vector.broadcast %260 : vector<16x1xf32> to vector<16x64xf32>
    %262 = arith.mulf %257, %261 : vector<16x64xf32>
    %263 = vector.broadcast %240 : vector<1x64xf32> to vector<16x64xf32>
    %264 = arith.mulf %262, %263 : vector<16x64xf32>
    %265 = vector.broadcast %242 : vector<1x64xf32> to vector<16x64xf32>
    %266 = arith.addf %264, %265 : vector<16x64xf32>
    %c1_106 = arith.constant 1 : index
    %c0_107 = arith.constant 0 : index
    %c0_108 = arith.constant 0 : index
    %267 = vector.load %arg6[%c1_106, %c0_107, %c0_108] : memref<2x64x192xf32, #tpu.memory_space<vmem>>, vector<1x64x192xf32>
    %268 = vector.shape_cast %267 : vector<1x64x192xf32> to vector<64x192xf32>
    %cst_109 = arith.constant dense<0.000000e+00> : vector<16x192xf32>
    %269 = tpu.matmul %266, %268, %cst_109 {dimension_numbers = #tpu.dot_dimension_numbers<[1], [0], [0], [1], [0, 0, 1, 1], [], []>} : vector<16x64xf32>, vector<64x192xf32>, vector<16x192xf32> -> vector<16x192xf32>
    %c1_110 = arith.constant 1 : index
    %c0_111 = arith.constant 0 : index
    %c0_112 = arith.constant 0 : index
    %270 = vector.load %arg7[%c1_110, %c0_111, %c0_112] : memref<2x1x192xf32, #tpu.memory_space<vmem>>, vector<1x1x192xf32>
    %271 = vector.shape_cast %270 : vector<1x1x192xf32> to vector<1x192xf32>
    %272 = vector.broadcast %271 : vector<1x192xf32> to vector<16x192xf32>
    %273 = arith.addf %269, %272 : vector<16x192xf32>
    %c1_113 = arith.constant 1 : index
    %c0_114 = arith.constant 0 : index
    %c0_115 = arith.constant 0 : index
    %274 = vector.load %arg8[%c1_113, %c0_114, %c0_115] : memref<2x64x64xf32, #tpu.memory_space<vmem>>, vector<1x64x64xf32>
    %275 = vector.shape_cast %274 : vector<1x64x64xf32> to vector<64x64xf32>
    %c1_116 = arith.constant 1 : index
    %c0_117 = arith.constant 0 : index
    %c0_118 = arith.constant 0 : index
    %276 = vector.load %arg9[%c1_116, %c0_117, %c0_118] : memref<2x1x64xf32, #tpu.memory_space<vmem>>, vector<1x1x64xf32>
    %277 = vector.shape_cast %276 : vector<1x1x64xf32> to vector<1x64xf32>
    %278 = vector.extract_strided_slice %273 {offsets = [0, 0], sizes = [16, 16], strides = [1, 1]} : vector<16x192xf32> to vector<16x16xf32>
    %279 = vector.extract_strided_slice %273 {offsets = [0, 64], sizes = [16, 16], strides = [1, 1]} : vector<16x192xf32> to vector<16x16xf32>
    %280 = vector.extract_strided_slice %273 {offsets = [0, 128], sizes = [16, 16], strides = [1, 1]} : vector<16x192xf32> to vector<16x16xf32>
    %281 = vector.shape_cast %278 : vector<16x16xf32> to vector<2x8x16xf32>
    %282 = vector.shape_cast %279 : vector<16x16xf32> to vector<2x8x16xf32>
    %283 = vector.shape_cast %280 : vector<16x16xf32> to vector<2x8x16xf32>
    "tpu.trace_start"() <{level = 10 : i32, message = "bqd,bkd->bqk"}> : () -> ()
    %cst_119 = arith.constant dense<0.000000e+00> : vector<2x8x8xf32>
    %284 = tpu.matmul %281, %282, %cst_119 {dimension_numbers = #tpu.dot_dimension_numbers<[2], [2], [1], [1], [0, 0, 0, 1, 1, 1], [0], [0]>} : vector<2x8x16xf32>, vector<2x8x16xf32>, vector<2x8x8xf32> -> vector<2x8x8xf32>
    "tpu.trace_stop"() : () -> ()
    %cst_120 = arith.constant 2.500000e-01 : f32
    %285 = vector.broadcast %cst_120 : f32 to vector<2x8x8xf32>
    %286 = arith.mulf %284, %285 : vector<2x8x8xf32>
    %287 = vector.shape_cast %0 : vector<8x8xf32> to vector<1x8x8xf32>
    %288 = vector.broadcast %287 : vector<1x8x8xf32> to vector<2x8x8xf32>
    %289 = arith.addf %286, %288 : vector<2x8x8xf32>
    %cst_121 = arith.constant dense<0xFF800000> : vector<2x8xf32>
    %290 = vector.multi_reduction <maximumf>, %289, %cst_121 [2] : vector<2x8x8xf32> to vector<2x8xf32>
    %291 = vector.shape_cast %290 : vector<2x8xf32> to vector<2x8x1xf32>
    %292 = vector.broadcast %291 : vector<2x8x1xf32> to vector<2x8x8xf32>
    %293 = arith.subf %289, %292 : vector<2x8x8xf32>
    %294 = math.exp %293 : vector<2x8x8xf32>
    %cst_122 = arith.constant dense<0.000000e+00> : vector<2x8xf32>
    %295 = vector.multi_reduction <add>, %294, %cst_122 [2] : vector<2x8x8xf32> to vector<2x8xf32>
    %296 = vector.shape_cast %295 : vector<2x8xf32> to vector<2x8x1xf32>
    %297 = tpu.reciprocal %296 {approx = true} : vector<2x8x1xf32> -> vector<2x8x1xf32>
    %298 = vector.broadcast %297 : vector<2x8x1xf32> to vector<2x8x8xf32>
    %299 = arith.mulf %294, %298 : vector<2x8x8xf32>
    "tpu.trace_start"() <{level = 10 : i32, message = "bqk,bkd->bqd"}> : () -> ()
    %cst_123 = arith.constant dense<0.000000e+00> : vector<2x8x16xf32>
    %300 = tpu.matmul %299, %283, %cst_123 {dimension_numbers = #tpu.dot_dimension_numbers<[2], [1], [1], [2], [0, 0, 0, 1, 1, 2], [0], [0]>} : vector<2x8x8xf32>, vector<2x8x16xf32>, vector<2x8x16xf32> -> vector<2x8x16xf32>
    "tpu.trace_stop"() : () -> ()
    %301 = vector.shape_cast %300 : vector<2x8x16xf32> to vector<16x16xf32>
    %302 = vector.extract_strided_slice %275 {offsets = [0, 0], sizes = [16, 64], strides = [1, 1]} : vector<64x64xf32> to vector<16x64xf32>
    %cst_124 = arith.constant dense<0.000000e+00> : vector<16x64xf32>
    %303 = tpu.matmul %301, %302, %cst_124 {dimension_numbers = #tpu.dot_dimension_numbers<[1], [0], [0], [1], [0, 0, 1, 1], [], []>} : vector<16x16xf32>, vector<16x64xf32>, vector<16x64xf32> -> vector<16x64xf32>
    %304 = vector.broadcast %277 : vector<1x64xf32> to vector<16x64xf32>
    %305 = arith.addf %304, %303 : vector<16x64xf32>
    %306 = vector.extract_strided_slice %273 {offsets = [0, 16], sizes = [16, 16], strides = [1, 1]} : vector<16x192xf32> to vector<16x16xf32>
    %307 = vector.extract_strided_slice %273 {offsets = [0, 80], sizes = [16, 16], strides = [1, 1]} : vector<16x192xf32> to vector<16x16xf32>
    %308 = vector.extract_strided_slice %273 {offsets = [0, 144], sizes = [16, 16], strides = [1, 1]} : vector<16x192xf32> to vector<16x16xf32>
    %309 = vector.shape_cast %306 : vector<16x16xf32> to vector<2x8x16xf32>
    %310 = vector.shape_cast %307 : vector<16x16xf32> to vector<2x8x16xf32>
    %311 = vector.shape_cast %308 : vector<16x16xf32> to vector<2x8x16xf32>
    "tpu.trace_start"() <{level = 10 : i32, message = "bqd,bkd->bqk"}> : () -> ()
    %cst_125 = arith.constant dense<0.000000e+00> : vector<2x8x8xf32>
    %312 = tpu.matmul %309, %310, %cst_125 {dimension_numbers = #tpu.dot_dimension_numbers<[2], [2], [1], [1], [0, 0, 0, 1, 1, 1], [0], [0]>} : vector<2x8x16xf32>, vector<2x8x16xf32>, vector<2x8x8xf32> -> vector<2x8x8xf32>
    "tpu.trace_stop"() : () -> ()
    %cst_126 = arith.constant 2.500000e-01 : f32
    %313 = vector.broadcast %cst_126 : f32 to vector<2x8x8xf32>
    %314 = arith.mulf %312, %313 : vector<2x8x8xf32>
    %315 = vector.shape_cast %0 : vector<8x8xf32> to vector<1x8x8xf32>
    %316 = vector.broadcast %315 : vector<1x8x8xf32> to vector<2x8x8xf32>
    %317 = arith.addf %314, %316 : vector<2x8x8xf32>
    %cst_127 = arith.constant dense<0xFF800000> : vector<2x8xf32>
    %318 = vector.multi_reduction <maximumf>, %317, %cst_127 [2] : vector<2x8x8xf32> to vector<2x8xf32>
    %319 = vector.shape_cast %318 : vector<2x8xf32> to vector<2x8x1xf32>
    %320 = vector.broadcast %319 : vector<2x8x1xf32> to vector<2x8x8xf32>
    %321 = arith.subf %317, %320 : vector<2x8x8xf32>
    %322 = math.exp %321 : vector<2x8x8xf32>
    %cst_128 = arith.constant dense<0.000000e+00> : vector<2x8xf32>
    %323 = vector.multi_reduction <add>, %322, %cst_128 [2] : vector<2x8x8xf32> to vector<2x8xf32>
    %324 = vector.shape_cast %323 : vector<2x8xf32> to vector<2x8x1xf32>
    %325 = tpu.reciprocal %324 {approx = true} : vector<2x8x1xf32> -> vector<2x8x1xf32>
    %326 = vector.broadcast %325 : vector<2x8x1xf32> to vector<2x8x8xf32>
    %327 = arith.mulf %322, %326 : vector<2x8x8xf32>
    "tpu.trace_start"() <{level = 10 : i32, message = "bqk,bkd->bqd"}> : () -> ()
    %cst_129 = arith.constant dense<0.000000e+00> : vector<2x8x16xf32>
    %328 = tpu.matmul %327, %311, %cst_129 {dimension_numbers = #tpu.dot_dimension_numbers<[2], [1], [1], [2], [0, 0, 0, 1, 1, 2], [0], [0]>} : vector<2x8x8xf32>, vector<2x8x16xf32>, vector<2x8x16xf32> -> vector<2x8x16xf32>
    "tpu.trace_stop"() : () -> ()
    %329 = vector.shape_cast %328 : vector<2x8x16xf32> to vector<16x16xf32>
    %330 = vector.extract_strided_slice %275 {offsets = [16, 0], sizes = [16, 64], strides = [1, 1]} : vector<64x64xf32> to vector<16x64xf32>
    %cst_130 = arith.constant dense<0.000000e+00> : vector<16x64xf32>
    %331 = tpu.matmul %329, %330, %cst_130 {dimension_numbers = #tpu.dot_dimension_numbers<[1], [0], [0], [1], [0, 0, 1, 1], [], []>} : vector<16x16xf32>, vector<16x64xf32>, vector<16x64xf32> -> vector<16x64xf32>
    %332 = arith.addf %305, %331 : vector<16x64xf32>
    %333 = vector.extract_strided_slice %273 {offsets = [0, 32], sizes = [16, 16], strides = [1, 1]} : vector<16x192xf32> to vector<16x16xf32>
    %334 = vector.extract_strided_slice %273 {offsets = [0, 96], sizes = [16, 16], strides = [1, 1]} : vector<16x192xf32> to vector<16x16xf32>
    %335 = vector.extract_strided_slice %273 {offsets = [0, 160], sizes = [16, 16], strides = [1, 1]} : vector<16x192xf32> to vector<16x16xf32>
    %336 = vector.shape_cast %333 : vector<16x16xf32> to vector<2x8x16xf32>
    %337 = vector.shape_cast %334 : vector<16x16xf32> to vector<2x8x16xf32>
    %338 = vector.shape_cast %335 : vector<16x16xf32> to vector<2x8x16xf32>
    "tpu.trace_start"() <{level = 10 : i32, message = "bqd,bkd->bqk"}> : () -> ()
    %cst_131 = arith.constant dense<0.000000e+00> : vector<2x8x8xf32>
    %339 = tpu.matmul %336, %337, %cst_131 {dimension_numbers = #tpu.dot_dimension_numbers<[2], [2], [1], [1], [0, 0, 0, 1, 1, 1], [0], [0]>} : vector<2x8x16xf32>, vector<2x8x16xf32>, vector<2x8x8xf32> -> vector<2x8x8xf32>
    "tpu.trace_stop"() : () -> ()
    %cst_132 = arith.constant 2.500000e-01 : f32
    %340 = vector.broadcast %cst_132 : f32 to vector<2x8x8xf32>
    %341 = arith.mulf %339, %340 : vector<2x8x8xf32>
    %342 = vector.shape_cast %0 : vector<8x8xf32> to vector<1x8x8xf32>
    %343 = vector.broadcast %342 : vector<1x8x8xf32> to vector<2x8x8xf32>
    %344 = arith.addf %341, %343 : vector<2x8x8xf32>
    %cst_133 = arith.constant dense<0xFF800000> : vector<2x8xf32>
    %345 = vector.multi_reduction <maximumf>, %344, %cst_133 [2] : vector<2x8x8xf32> to vector<2x8xf32>
    %346 = vector.shape_cast %345 : vector<2x8xf32> to vector<2x8x1xf32>
    %347 = vector.broadcast %346 : vector<2x8x1xf32> to vector<2x8x8xf32>
    %348 = arith.subf %344, %347 : vector<2x8x8xf32>
    %349 = math.exp %348 : vector<2x8x8xf32>
    %cst_134 = arith.constant dense<0.000000e+00> : vector<2x8xf32>
    %350 = vector.multi_reduction <add>, %349, %cst_134 [2] : vector<2x8x8xf32> to vector<2x8xf32>
    %351 = vector.shape_cast %350 : vector<2x8xf32> to vector<2x8x1xf32>
    %352 = tpu.reciprocal %351 {approx = true} : vector<2x8x1xf32> -> vector<2x8x1xf32>
    %353 = vector.broadcast %352 : vector<2x8x1xf32> to vector<2x8x8xf32>
    %354 = arith.mulf %349, %353 : vector<2x8x8xf32>
    "tpu.trace_start"() <{level = 10 : i32, message = "bqk,bkd->bqd"}> : () -> ()
    %cst_135 = arith.constant dense<0.000000e+00> : vector<2x8x16xf32>
    %355 = tpu.matmul %354, %338, %cst_135 {dimension_numbers = #tpu.dot_dimension_numbers<[2], [1], [1], [2], [0, 0, 0, 1, 1, 2], [0], [0]>} : vector<2x8x8xf32>, vector<2x8x16xf32>, vector<2x8x16xf32> -> vector<2x8x16xf32>
    "tpu.trace_stop"() : () -> ()
    %356 = vector.shape_cast %355 : vector<2x8x16xf32> to vector<16x16xf32>
    %357 = vector.extract_strided_slice %275 {offsets = [32, 0], sizes = [16, 64], strides = [1, 1]} : vector<64x64xf32> to vector<16x64xf32>
    %cst_136 = arith.constant dense<0.000000e+00> : vector<16x64xf32>
    %358 = tpu.matmul %356, %357, %cst_136 {dimension_numbers = #tpu.dot_dimension_numbers<[1], [0], [0], [1], [0, 0, 1, 1], [], []>} : vector<16x16xf32>, vector<16x64xf32>, vector<16x64xf32> -> vector<16x64xf32>
    %359 = arith.addf %332, %358 : vector<16x64xf32>
    %360 = vector.extract_strided_slice %273 {offsets = [0, 48], sizes = [16, 16], strides = [1, 1]} : vector<16x192xf32> to vector<16x16xf32>
    %361 = vector.extract_strided_slice %273 {offsets = [0, 112], sizes = [16, 16], strides = [1, 1]} : vector<16x192xf32> to vector<16x16xf32>
    %362 = vector.extract_strided_slice %273 {offsets = [0, 176], sizes = [16, 16], strides = [1, 1]} : vector<16x192xf32> to vector<16x16xf32>
    %363 = vector.shape_cast %360 : vector<16x16xf32> to vector<2x8x16xf32>
    %364 = vector.shape_cast %361 : vector<16x16xf32> to vector<2x8x16xf32>
    %365 = vector.shape_cast %362 : vector<16x16xf32> to vector<2x8x16xf32>
    "tpu.trace_start"() <{level = 10 : i32, message = "bqd,bkd->bqk"}> : () -> ()
    %cst_137 = arith.constant dense<0.000000e+00> : vector<2x8x8xf32>
    %366 = tpu.matmul %363, %364, %cst_137 {dimension_numbers = #tpu.dot_dimension_numbers<[2], [2], [1], [1], [0, 0, 0, 1, 1, 1], [0], [0]>} : vector<2x8x16xf32>, vector<2x8x16xf32>, vector<2x8x8xf32> -> vector<2x8x8xf32>
    "tpu.trace_stop"() : () -> ()
    %cst_138 = arith.constant 2.500000e-01 : f32
    %367 = vector.broadcast %cst_138 : f32 to vector<2x8x8xf32>
    %368 = arith.mulf %366, %367 : vector<2x8x8xf32>
    %369 = vector.shape_cast %0 : vector<8x8xf32> to vector<1x8x8xf32>
    %370 = vector.broadcast %369 : vector<1x8x8xf32> to vector<2x8x8xf32>
    %371 = arith.addf %368, %370 : vector<2x8x8xf32>
    %cst_139 = arith.constant dense<0xFF800000> : vector<2x8xf32>
    %372 = vector.multi_reduction <maximumf>, %371, %cst_139 [2] : vector<2x8x8xf32> to vector<2x8xf32>
    %373 = vector.shape_cast %372 : vector<2x8xf32> to vector<2x8x1xf32>
    %374 = vector.broadcast %373 : vector<2x8x1xf32> to vector<2x8x8xf32>
    %375 = arith.subf %371, %374 : vector<2x8x8xf32>
    %376 = math.exp %375 : vector<2x8x8xf32>
    %cst_140 = arith.constant dense<0.000000e+00> : vector<2x8xf32>
    %377 = vector.multi_reduction <add>, %376, %cst_140 [2] : vector<2x8x8xf32> to vector<2x8xf32>
    %378 = vector.shape_cast %377 : vector<2x8xf32> to vector<2x8x1xf32>
    %379 = tpu.reciprocal %378 {approx = true} : vector<2x8x1xf32> -> vector<2x8x1xf32>
    %380 = vector.broadcast %379 : vector<2x8x1xf32> to vector<2x8x8xf32>
    %381 = arith.mulf %376, %380 : vector<2x8x8xf32>
    "tpu.trace_start"() <{level = 10 : i32, message = "bqk,bkd->bqd"}> : () -> ()
    %cst_141 = arith.constant dense<0.000000e+00> : vector<2x8x16xf32>
    %382 = tpu.matmul %381, %365, %cst_141 {dimension_numbers = #tpu.dot_dimension_numbers<[2], [1], [1], [2], [0, 0, 0, 1, 1, 2], [0], [0]>} : vector<2x8x8xf32>, vector<2x8x16xf32>, vector<2x8x16xf32> -> vector<2x8x16xf32>
    "tpu.trace_stop"() : () -> ()
    %383 = vector.shape_cast %382 : vector<2x8x16xf32> to vector<16x16xf32>
    %384 = vector.extract_strided_slice %275 {offsets = [48, 0], sizes = [16, 64], strides = [1, 1]} : vector<64x64xf32> to vector<16x64xf32>
    %cst_142 = arith.constant dense<0.000000e+00> : vector<16x64xf32>
    %385 = tpu.matmul %383, %384, %cst_142 {dimension_numbers = #tpu.dot_dimension_numbers<[1], [0], [0], [1], [0, 0, 1, 1], [], []>} : vector<16x16xf32>, vector<16x64xf32>, vector<16x64xf32> -> vector<16x64xf32>
    %386 = arith.addf %359, %385 : vector<16x64xf32>
    %387 = arith.addf %238, %386 : vector<16x64xf32>
    %c1_143 = arith.constant 1 : index
    %c0_144 = arith.constant 0 : index
    %c0_145 = arith.constant 0 : index
    %388 = vector.load %arg10[%c1_143, %c0_144, %c0_145] : memref<2x1x64xf32, #tpu.memory_space<vmem>>, vector<1x1x64xf32>
    %389 = vector.shape_cast %388 : vector<1x1x64xf32> to vector<1x64xf32>
    %c1_146 = arith.constant 1 : index
    %c0_147 = arith.constant 0 : index
    %c0_148 = arith.constant 0 : index
    %390 = vector.load %arg11[%c1_146, %c0_147, %c0_148] : memref<2x1x64xf32, #tpu.memory_space<vmem>>, vector<1x1x64xf32>
    %391 = vector.shape_cast %390 : vector<1x1x64xf32> to vector<1x64xf32>
    %cst_149 = arith.constant dense<0.000000e+00> : vector<16xf32>
    %392 = vector.multi_reduction <add>, %387, %cst_149 [1] : vector<16x64xf32> to vector<16xf32>
    %393 = vector.shape_cast %392 : vector<16xf32> to vector<16x1xf32>
    %cst_150 = arith.constant 6.400000e+01 : f32
    %394 = vector.broadcast %cst_150 : f32 to vector<16x1xf32>
    %395 = arith.divf %393, %394 : vector<16x1xf32>
    %396 = vector.broadcast %395 : vector<16x1xf32> to vector<16x64xf32>
    %397 = arith.subf %387, %396 : vector<16x64xf32>
    %398 = vector.broadcast %395 : vector<16x1xf32> to vector<16x64xf32>
    %399 = arith.subf %387, %398 : vector<16x64xf32>
    %400 = arith.mulf %397, %399 : vector<16x64xf32>
    %cst_151 = arith.constant dense<0.000000e+00> : vector<16xf32>
    %401 = vector.multi_reduction <add>, %400, %cst_151 [1] : vector<16x64xf32> to vector<16xf32>
    %402 = vector.shape_cast %401 : vector<16xf32> to vector<16x1xf32>
    %cst_152 = arith.constant 6.400000e+01 : f32
    %403 = vector.broadcast %cst_152 : f32 to vector<16x1xf32>
    %404 = arith.divf %402, %403 : vector<16x1xf32>
    %405 = vector.broadcast %395 : vector<16x1xf32> to vector<16x64xf32>
    %406 = arith.subf %387, %405 : vector<16x64xf32>
    %cst_153 = arith.constant 9.99999997E-7 : f32
    %407 = vector.broadcast %cst_153 : f32 to vector<16x1xf32>
    %408 = arith.addf %404, %407 : vector<16x1xf32>
    %409 = math.rsqrt %408 : vector<16x1xf32>
    %410 = vector.broadcast %409 : vector<16x1xf32> to vector<16x64xf32>
    %411 = arith.mulf %406, %410 : vector<16x64xf32>
    %412 = vector.broadcast %389 : vector<1x64xf32> to vector<16x64xf32>
    %413 = arith.mulf %411, %412 : vector<16x64xf32>
    %414 = vector.broadcast %391 : vector<1x64xf32> to vector<16x64xf32>
    %415 = arith.addf %413, %414 : vector<16x64xf32>
    %c1_154 = arith.constant 1 : index
    %c0_155 = arith.constant 0 : index
    %c0_156 = arith.constant 0 : index
    %416 = vector.load %arg12[%c1_154, %c0_155, %c0_156] : memref<2x64x128xf32, #tpu.memory_space<vmem>>, vector<1x64x128xf32>
    %417 = vector.shape_cast %416 : vector<1x64x128xf32> to vector<64x128xf32>
    %cst_157 = arith.constant dense<0.000000e+00> : vector<16x128xf32>
    %418 = tpu.matmul %415, %417, %cst_157 {dimension_numbers = #tpu.dot_dimension_numbers<[1], [0], [0], [1], [0, 0, 1, 1], [], []>} : vector<16x64xf32>, vector<64x128xf32>, vector<16x128xf32> -> vector<16x128xf32>
    %c1_158 = arith.constant 1 : index
    %c0_159 = arith.constant 0 : index
    %c0_160 = arith.constant 0 : index
    %419 = vector.load %arg13[%c1_158, %c0_159, %c0_160] : memref<2x1x128xf32, #tpu.memory_space<vmem>>, vector<1x1x128xf32>
    %420 = vector.shape_cast %419 : vector<1x1x128xf32> to vector<1x128xf32>
    %421 = vector.broadcast %420 : vector<1x128xf32> to vector<16x128xf32>
    %422 = arith.addf %418, %421 : vector<16x128xf32>
    %cst_161 = arith.constant 5.000000e-01 : f32
    %423 = vector.broadcast %cst_161 : f32 to vector<16x128xf32>
    %424 = arith.mulf %423, %422 : vector<16x128xf32>
    %cst_162 = arith.constant 0.707106769 : f32
    %425 = vector.broadcast %cst_162 : f32 to vector<16x128xf32>
    %426 = arith.mulf %422, %425 : vector<16x128xf32>
    %cst_163 = arith.constant 0.000000e+00 : f32
    %427 = vector.broadcast %cst_163 : f32 to vector<16x128xf32>
    %428 = arith.cmpf oge, %426, %427 : vector<16x128xf32>
    %cst_164 = arith.constant 1.000000e+00 : f32
    %cst_165 = arith.constant -1.000000e+00 : f32
    %429 = vector.broadcast %cst_164 : f32 to vector<16x128xf32>
    %430 = vector.broadcast %cst_165 : f32 to vector<16x128xf32>
    %431 = arith.select %428, %429, %430 : vector<16x128xi1>, vector<16x128xf32>
    %432 = math.absf %426 : vector<16x128xf32>
    %cst_166 = arith.constant 0.327591091 : f32
    %433 = vector.broadcast %cst_166 : f32 to vector<16x128xf32>
    %434 = arith.mulf %433, %432 : vector<16x128xf32>
    %cst_167 = arith.constant 1.000000e+00 : f32
    %435 = vector.broadcast %cst_167 : f32 to vector<16x128xf32>
    %436 = arith.addf %435, %434 : vector<16x128xf32>
    %cst_168 = arith.constant 1.000000e+00 : f32
    %437 = vector.broadcast %cst_168 : f32 to vector<16x128xf32>
    %438 = arith.divf %437, %436 : vector<16x128xf32>
    %cst_169 = arith.constant 1.06140542 : f32
    %439 = vector.broadcast %cst_169 : f32 to vector<16x128xf32>
    %440 = arith.mulf %439, %438 : vector<16x128xf32>
    %cst_170 = arith.constant -1.45315206 : f32
    %441 = vector.broadcast %cst_170 : f32 to vector<16x128xf32>
    %442 = arith.addf %440, %441 : vector<16x128xf32>
    %443 = arith.mulf %442, %438 : vector<16x128xf32>
    %cst_171 = arith.constant 1.42141378 : f32
    %444 = vector.broadcast %cst_171 : f32 to vector<16x128xf32>
    %445 = arith.addf %443, %444 : vector<16x128xf32>
    %446 = arith.mulf %445, %438 : vector<16x128xf32>
    %cst_172 = arith.constant -0.284496725 : f32
    %447 = vector.broadcast %cst_172 : f32 to vector<16x128xf32>
    %448 = arith.addf %446, %447 : vector<16x128xf32>
    %449 = arith.mulf %448, %438 : vector<16x128xf32>
    %cst_173 = arith.constant 0.254829586 : f32
    %450 = vector.broadcast %cst_173 : f32 to vector<16x128xf32>
    %451 = arith.addf %449, %450 : vector<16x128xf32>
    %452 = arith.mulf %451, %438 : vector<16x128xf32>
    %cst_174 = arith.constant 0.000000e+00 : f32
    %453 = vector.broadcast %cst_174 : f32 to vector<16x128xf32>
    %454 = arith.subf %453, %432 : vector<16x128xf32>
    %455 = arith.mulf %454, %432 : vector<16x128xf32>
    %456 = math.exp %455 : vector<16x128xf32>
    %457 = arith.mulf %452, %456 : vector<16x128xf32>
    %cst_175 = arith.constant 1.000000e+00 : f32
    %458 = vector.broadcast %cst_175 : f32 to vector<16x128xf32>
    %459 = arith.subf %458, %457 : vector<16x128xf32>
    %460 = arith.mulf %431, %459 : vector<16x128xf32>
    %cst_176 = arith.constant 1.000000e+00 : f32
    %461 = vector.broadcast %cst_176 : f32 to vector<16x128xf32>
    %462 = arith.addf %461, %460 : vector<16x128xf32>
    %463 = arith.mulf %424, %462 : vector<16x128xf32>
    %c1_177 = arith.constant 1 : index
    %c0_178 = arith.constant 0 : index
    %c0_179 = arith.constant 0 : index
    %464 = vector.load %arg14[%c1_177, %c0_178, %c0_179] : memref<2x128x64xf32, #tpu.memory_space<vmem>>, vector<1x128x64xf32>
    %465 = vector.shape_cast %464 : vector<1x128x64xf32> to vector<128x64xf32>
    %cst_180 = arith.constant dense<0.000000e+00> : vector<16x64xf32>
    %466 = tpu.matmul %463, %465, %cst_180 {dimension_numbers = #tpu.dot_dimension_numbers<[1], [0], [0], [1], [0, 0, 1, 1], [], []>} : vector<16x128xf32>, vector<128x64xf32>, vector<16x64xf32> -> vector<16x64xf32>
    %c1_181 = arith.constant 1 : index
    %c0_182 = arith.constant 0 : index
    %c0_183 = arith.constant 0 : index
    %467 = vector.load %arg15[%c1_181, %c0_182, %c0_183] : memref<2x1x64xf32, #tpu.memory_space<vmem>>, vector<1x1x64xf32>
    %468 = vector.shape_cast %467 : vector<1x1x64xf32> to vector<1x64xf32>
    %469 = vector.broadcast %468 : vector<1x64xf32> to vector<16x64xf32>
    %470 = arith.addf %466, %469 : vector<16x64xf32>
    %471 = arith.addf %387, %470 : vector<16x64xf32>
    %c0_184 = arith.constant 0 : index
    %c0_185 = arith.constant 0 : index
    %472 = vector.load %arg16[%c0_184, %c0_185] : memref<1x64xf32, #tpu.memory_space<vmem>>, vector<1x64xf32>
    %c0_186 = arith.constant 0 : index
    %c0_187 = arith.constant 0 : index
    %473 = vector.load %arg17[%c0_186, %c0_187] : memref<1x64xf32, #tpu.memory_space<vmem>>, vector<1x64xf32>
    %cst_188 = arith.constant dense<0.000000e+00> : vector<16xf32>
    %474 = vector.multi_reduction <add>, %471, %cst_188 [1] : vector<16x64xf32> to vector<16xf32>
    %475 = vector.shape_cast %474 : vector<16xf32> to vector<16x1xf32>
    %cst_189 = arith.constant 6.400000e+01 : f32
    %476 = vector.broadcast %cst_189 : f32 to vector<16x1xf32>
    %477 = arith.divf %475, %476 : vector<16x1xf32>
    %478 = vector.broadcast %477 : vector<16x1xf32> to vector<16x64xf32>
    %479 = arith.subf %471, %478 : vector<16x64xf32>
    %480 = vector.broadcast %477 : vector<16x1xf32> to vector<16x64xf32>
    %481 = arith.subf %471, %480 : vector<16x64xf32>
    %482 = arith.mulf %479, %481 : vector<16x64xf32>
    %cst_190 = arith.constant dense<0.000000e+00> : vector<16xf32>
    %483 = vector.multi_reduction <add>, %482, %cst_190 [1] : vector<16x64xf32> to vector<16xf32>
    %484 = vector.shape_cast %483 : vector<16xf32> to vector<16x1xf32>
    %cst_191 = arith.constant 6.400000e+01 : f32
    %485 = vector.broadcast %cst_191 : f32 to vector<16x1xf32>
    %486 = arith.divf %484, %485 : vector<16x1xf32>
    %487 = vector.broadcast %477 : vector<16x1xf32> to vector<16x64xf32>
    %488 = arith.subf %471, %487 : vector<16x64xf32>
    %cst_192 = arith.constant 9.99999997E-7 : f32
    %489 = vector.broadcast %cst_192 : f32 to vector<16x1xf32>
    %490 = arith.addf %486, %489 : vector<16x1xf32>
    %491 = math.rsqrt %490 : vector<16x1xf32>
    %492 = vector.broadcast %491 : vector<16x1xf32> to vector<16x64xf32>
    %493 = arith.mulf %488, %492 : vector<16x64xf32>
    %494 = vector.broadcast %472 : vector<1x64xf32> to vector<16x64xf32>
    %495 = arith.mulf %493, %494 : vector<16x64xf32>
    %496 = vector.broadcast %473 : vector<1x64xf32> to vector<16x64xf32>
    %497 = arith.addf %495, %496 : vector<16x64xf32>
    %498 = vector.extract_strided_slice %497 {offsets = [0, 0], sizes = [1, 64], strides = [1, 1]} : vector<16x64xf32> to vector<1x64xf32>
    %499 = vector.extract_strided_slice %497 {offsets = [8, 0], sizes = [1, 64], strides = [1, 1]} : vector<16x64xf32> to vector<1x64xf32>
    %500 = tpu.concatenate %498, %499 in 0 : vector<1x64xf32>, vector<1x64xf32> -> vector<2x64xf32>
    %501 = arith.truncf %500 : vector<2x64xf32> to vector<2x64xbf16>
    %c0_193 = arith.constant 0 : index
    %c0_194 = arith.constant 0 : index
    %502 = vector.load %arg18[%c0_193, %c0_194] : memref<64x1024xbf16, #tpu.memory_space<vmem>>, vector<64x1024xbf16>
    %cst_195 = arith.constant dense<0.000000e+00> : vector<2x1024xf32>
    %503 = tpu.matmul %501, %502, %cst_195 {dimension_numbers = #tpu.dot_dimension_numbers<[1], [0], [0], [1], [0, 0, 1, 1], [], []>} : vector<2x64xbf16>, vector<64x1024xbf16>, vector<2x1024xf32> -> vector<2x1024xf32>
    %c0_196 = arith.constant 0 : index
    %c0_197 = arith.constant 0 : index
    %504 = vector.load %arg19[%c0_196, %c0_197] : memref<1x1024xf32, #tpu.memory_space<vmem>>, vector<1x1024xf32>
    %505 = vector.broadcast %504 : vector<1x1024xf32> to vector<2x1024xf32>
    %506 = arith.addf %503, %505 : vector<2x1024xf32>
    %507 = arith.truncf %506 : vector<2x1024xf32> to vector<2x1024xbf16>
    %c0_198 = arith.constant 0 : index
    %c0_199 = arith.constant 0 : index
    %508 = vector.load %arg20[%c0_198, %c0_199] : memref<1024x512xbf16, #tpu.memory_space<vmem>>, vector<1024x512xbf16>
    %cst_200 = arith.constant dense<0.000000e+00> : vector<2x512xf32>
    %509 = tpu.matmul %507, %508, %cst_200 {dimension_numbers = #tpu.dot_dimension_numbers<[1], [0], [0], [1], [0, 0, 1, 1], [], []>} : vector<2x1024xbf16>, vector<1024x512xbf16>, vector<2x512xf32> -> vector<2x512xf32>
    %c0_201 = arith.constant 0 : index
    %c0_202 = arith.constant 0 : index
    %510 = vector.load %arg21[%c0_201, %c0_202] : memref<1x512xf32, #tpu.memory_space<vmem>>, vector<1x512xf32>
    %511 = vector.broadcast %510 : vector<1x512xf32> to vector<2x512xf32>
    %512 = arith.addf %509, %511 : vector<2x512xf32>
    %cst_203 = arith.constant 5.000000e-01 : f32
    %513 = vector.broadcast %cst_203 : f32 to vector<2x512xf32>
    %514 = arith.mulf %513, %512 : vector<2x512xf32>
    %cst_204 = arith.constant 0.707106769 : f32
    %515 = vector.broadcast %cst_204 : f32 to vector<2x512xf32>
    %516 = arith.mulf %512, %515 : vector<2x512xf32>
    %cst_205 = arith.constant 0.000000e+00 : f32
    %517 = vector.broadcast %cst_205 : f32 to vector<2x512xf32>
    %518 = arith.cmpf oge, %516, %517 : vector<2x512xf32>
    %cst_206 = arith.constant 1.000000e+00 : f32
    %cst_207 = arith.constant -1.000000e+00 : f32
    %519 = vector.broadcast %cst_206 : f32 to vector<2x512xf32>
    %520 = vector.broadcast %cst_207 : f32 to vector<2x512xf32>
    %521 = arith.select %518, %519, %520 : vector<2x512xi1>, vector<2x512xf32>
    %522 = math.absf %516 : vector<2x512xf32>
    %cst_208 = arith.constant 0.327591091 : f32
    %523 = vector.broadcast %cst_208 : f32 to vector<2x512xf32>
    %524 = arith.mulf %523, %522 : vector<2x512xf32>
    %cst_209 = arith.constant 1.000000e+00 : f32
    %525 = vector.broadcast %cst_209 : f32 to vector<2x512xf32>
    %526 = arith.addf %525, %524 : vector<2x512xf32>
    %cst_210 = arith.constant 1.000000e+00 : f32
    %527 = vector.broadcast %cst_210 : f32 to vector<2x512xf32>
    %528 = arith.divf %527, %526 : vector<2x512xf32>
    %cst_211 = arith.constant 1.06140542 : f32
    %529 = vector.broadcast %cst_211 : f32 to vector<2x512xf32>
    %530 = arith.mulf %529, %528 : vector<2x512xf32>
    %cst_212 = arith.constant -1.45315206 : f32
    %531 = vector.broadcast %cst_212 : f32 to vector<2x512xf32>
    %532 = arith.addf %530, %531 : vector<2x512xf32>
    %533 = arith.mulf %532, %528 : vector<2x512xf32>
    %cst_213 = arith.constant 1.42141378 : f32
    %534 = vector.broadcast %cst_213 : f32 to vector<2x512xf32>
    %535 = arith.addf %533, %534 : vector<2x512xf32>
    %536 = arith.mulf %535, %528 : vector<2x512xf32>
    %cst_214 = arith.constant -0.284496725 : f32
    %537 = vector.broadcast %cst_214 : f32 to vector<2x512xf32>
    %538 = arith.addf %536, %537 : vector<2x512xf32>
    %539 = arith.mulf %538, %528 : vector<2x512xf32>
    %cst_215 = arith.constant 0.254829586 : f32
    %540 = vector.broadcast %cst_215 : f32 to vector<2x512xf32>
    %541 = arith.addf %539, %540 : vector<2x512xf32>
    %542 = arith.mulf %541, %528 : vector<2x512xf32>
    %cst_216 = arith.constant 0.000000e+00 : f32
    %543 = vector.broadcast %cst_216 : f32 to vector<2x512xf32>
    %544 = arith.subf %543, %522 : vector<2x512xf32>
    %545 = arith.mulf %544, %522 : vector<2x512xf32>
    %546 = math.exp %545 : vector<2x512xf32>
    %547 = arith.mulf %542, %546 : vector<2x512xf32>
    %cst_217 = arith.constant 1.000000e+00 : f32
    %548 = vector.broadcast %cst_217 : f32 to vector<2x512xf32>
    %549 = arith.subf %548, %547 : vector<2x512xf32>
    %550 = arith.mulf %521, %549 : vector<2x512xf32>
    %cst_218 = arith.constant 1.000000e+00 : f32
    %551 = vector.broadcast %cst_218 : f32 to vector<2x512xf32>
    %552 = arith.addf %551, %550 : vector<2x512xf32>
    %553 = arith.mulf %514, %552 : vector<2x512xf32>
    %554 = arith.truncf %553 : vector<2x512xf32> to vector<2x512xbf16>
    %c0_219 = arith.constant 0 : index
    %c0_220 = arith.constant 0 : index
    %555 = vector.load %arg22[%c0_219, %c0_220] : memref<512x256xbf16, #tpu.memory_space<vmem>>, vector<512x256xbf16>
    %cst_221 = arith.constant dense<0.000000e+00> : vector<2x256xf32>
    %556 = tpu.matmul %554, %555, %cst_221 {dimension_numbers = #tpu.dot_dimension_numbers<[1], [0], [0], [1], [0, 0, 1, 1], [], []>} : vector<2x512xbf16>, vector<512x256xbf16>, vector<2x256xf32> -> vector<2x256xf32>
    %c0_222 = arith.constant 0 : index
    %c0_223 = arith.constant 0 : index
    %557 = vector.load %arg23[%c0_222, %c0_223] : memref<1x256xf32, #tpu.memory_space<vmem>>, vector<1x256xf32>
    %558 = vector.broadcast %557 : vector<1x256xf32> to vector<2x256xf32>
    %559 = arith.addf %556, %558 : vector<2x256xf32>
    %c0_224 = arith.constant 0 : index
    %c0_225 = arith.constant 0 : index
    %560 = vector.load %arg24[%c0_224, %c0_225] : memref<2x256xf32, #tpu.memory_space<vmem>>, vector<2x256xf32>
    tpu.vector_store %arg24[%c0_224, %c0_225], %559 {strides = array<i32>} : memref<2x256xf32, #tpu.memory_space<vmem>>, vector<2x256xf32>,
    return
  }
}

</mosaic_0001>

<llo_original>
// kernel: vit_forward.1
$region0: #{vit_forward.1}
  #allocation0 [shape = 'u32[]', space=smem, size = 0x4, offset = 0x4, fixed_abs, tag = 'smem constant byte address 0x4 - core index']
  #allocation1 [shape = 'u32[72,128]{1,0:T(1,128)}', space=vmem, size = 0x9000, scoped, tag = 'internal scratch']
  %s0 = inlined_call_operand.vmem [shape: f32[16,768], index: 0, kind: input, shape index: {}]
  %s1 = inlined_call_operand.vmem [shape: f32[16,64], index: 1, kind: input, shape index: {}]
  %s2 = inlined_call_operand.vmem [shape: f32[8,8], index: 2, kind: input, shape index: {}]
  %s3 = inlined_call_operand.vmem [shape: f32[768,64], index: 3, kind: input, shape index: {}]
  %s4 = inlined_call_operand.vmem [shape: f32[2,1,64], index: 4, kind: input, shape index: {}]
  %s5 = inlined_call_operand.vmem [shape: f32[2,1,64], index: 5, kind: input, shape index: {}]
  %s6 = inlined_call_operand.vmem [shape: f32[2,64,192], index: 6, kind: input, shape index: {}]
  %s7 = inlined_call_operand.vmem [shape: f32[2,1,192], index: 7, kind: input, shape index: {}]
  %s8 = inlined_call_operand.vmem [shape: f32[2,64,64], index: 8, kind: input, shape index: {}]
  %s9 = inlined_call_operand.vmem [shape: f32[2,1,64], index: 9, kind: input, shape index: {}]
  %s10 = inlined_call_operand.vmem [shape: f32[2,1,64], index: 10, kind: input, shape index: {}]
  %s11 = inlined_call_operand.vmem [shape: f32[2,1,64], index: 11, kind: input, shape index: {}]
  %s12 = inlined_call_operand.vmem [shape: f32[2,64,128], index: 12, kind: input, shape index: {}]
  %s13 = inlined_call_operand.vmem [shape: f32[2,1,128], index: 13, kind: input, shape index: {}]
  %s14 = inlined_call_operand.vmem [shape: f32[2,128,64], index: 14, kind: input, shape index: {}]
  %s15 = inlined_call_operand.vmem [shape: f32[2,1,64], index: 15, kind: input, shape index: {}]
  %s16 = inlined_call_operand.vmem [shape: f32[1,64], index: 16, kind: input, shape index: {}]
  %s17 = inlined_call_operand.vmem [shape: f32[1,64], index: 17, kind: input, shape index: {}]
  %s18 = inlined_call_operand.vmem [shape: bf16[64,1024], index: 18, kind: input, shape index: {}]
  %s19 = inlined_call_operand.vmem [shape: f32[1,1024], index: 19, kind: input, shape index: {}]
  %s20 = inlined_call_operand.hbm [shape: bf16[1024,512], index: 20, kind: input, shape index: {}]
  %s21 = inlined_call_operand.vmem [shape: f32[1,512], index: 21, kind: input, shape index: {}]
  %s22 = inlined_call_operand.vmem [shape: bf16[512,256], index: 22, kind: input, shape index: {}]
  %s23 = inlined_call_operand.vmem [shape: f32[1,256], index: 23, kind: input, shape index: {}]
  %s24 = inlined_call_operand.hbm [shape: f32[2,256], index: 24, kind: output, shape index: {}]
  %s25 = sld [smem:[#allocation0]]
  $region110: #{vit_forward.1} parent=0
    _
  %s27 = ssub.s32 1, %s25
  %s28 = scalar_select 0, %s27, %s25
  $region1: #{vit_forward.1} parent=0
    #allocation2 [shape = 'u8[1048576]{0}', space=vmem, size = 0x100000, scoped, tag = 'input window, operand 20, single buffered']
    #allocation3 [shape = 's32[1]{0}', space=sflag, size = 0x4, scoped, tag = 'scoped memory for vit_forward.1']
    #allocation4 [shape = 's32[1]{0}', space=sflag, size = 0x4, scoped, tag = 'scoped memory for vit_forward.1']
    #allocation5 [shape = 'u8[2048]{0}', space=vmem, size = 0x800, scoped, tag = 'output window, operand 0, single buffered']
    %29 = vsyncpa [#allocation3], 0
    %30 = vsyncpa [#allocation4], 0
    // Predicated region
    $region2: #{vit_forward.1} parent=1 // pred_check
      _
    $region3: #{vit_forward.1} parent=1 // pred_check_branch
      %32 = sbr.rel (0) target = $region5
    $region4: #{vit_forward.1} parent=1 // pred_region
      _
    $region5: #{vit_forward.1} parent=1 // pred_fallthru
      _
    // Predicated region
    $region6: #{vit_forward.1} parent=1 // pred_check
      _
    $region7: #{vit_forward.1} parent=1 // pred_check_branch
      %34 = sbr.rel (0) target = $region9
    $region8: #{vit_forward.1} parent=1 // pred_region
      _
    $region9: #{vit_forward.1} parent=1 // pred_fallthru
      _
    // Predicated region
    $region10: #{vit_forward.1} parent=1 // pred_check
      _
    $region11: #{vit_forward.1} parent=1 // pred_check_branch
      %36 = sbr.rel (0) target = $region13
    $region12: #{vit_forward.1} parent=1 // pred_region
      _
    $region13: #{vit_forward.1} parent=1 // pred_fallthru
      _
    // Predicated region
    $region14: #{vit_forward.1} parent=1 // pred_check
      _
    $region15: #{vit_forward.1} parent=1 // pred_check_branch
      %38 = sbr.rel (0) target = $region17
    $region16: #{vit_forward.1} parent=1 // pred_region
      _
    $region17: #{vit_forward.1} parent=1 // pred_fallthru
      _
    // Predicated region
    $region18: #{vit_forward.1} parent=1 // pred_check
      _
    $region19: #{vit_forward.1} parent=1 // pred_check_branch
      %40 = sbr.rel (0) target = $region21
    $region20: #{vit_forward.1} parent=1 // pred_region
      _
    $region21: #{vit_forward.1} parent=1 // pred_fallthru
      _
    // Predicated region
    $region22: #{vit_forward.1} parent=1 // pred_check
      _
    $region23: #{vit_forward.1} parent=1 // pred_check_branch
      %42 = sbr.rel (0) target = $region25
    $region24: #{vit_forward.1} parent=1 // pred_region
      _
    $region25: #{vit_forward.1} parent=1 // pred_fallthru
      _
    // Predicated region
    $region26: #{vit_forward.1} parent=1 // pred_check
      _
    $region27: #{vit_forward.1} parent=1 // pred_check_branch
      %44 = sbr.rel (0) target = $region29
    $region28: #{vit_forward.1} parent=1 // pred_region
      _
    $region29: #{vit_forward.1} parent=1 // pred_fallthru
      _
    // Predicated region
    $region30: #{vit_forward.1} parent=1 // pred_check
      _
    $region31: #{vit_forward.1} parent=1 // pred_check_branch
      %46 = sbr.rel (0) target = $region33
    $region32: #{vit_forward.1} parent=1 // pred_region
      _
    $region33: #{vit_forward.1} parent=1 // pred_fallthru
      _
    // Predicated region
    $region34: #{vit_forward.1} parent=1 // pred_check
      _
    $region35: #{vit_forward.1} parent=1 // pred_check_branch
      %48 = sbr.rel (0) target = $region37
    $region36: #{vit_forward.1} parent=1 // pred_region
      _
    $region37: #{vit_forward.1} parent=1 // pred_fallthru
      _
    // Predicated region
    $region38: #{vit_forward.1} parent=1 // pred_check
      _
    $region39: #{vit_forward.1} parent=1 // pred_check_branch
      %50 = sbr.rel (0) target = $region41
    $region40: #{vit_forward.1} parent=1 // pred_region
      _
    $region41: #{vit_forward.1} parent=1 // pred_fallthru
      _
    // Predicated region
    $region42: #{vit_forward.1} parent=1 // pred_check
      _
    $region43: #{vit_forward.1} parent=1 // pred_check_branch
      %52 = sbr.rel (0) target = $region45
    $region44: #{vit_forward.1} parent=1 // pred_region
      _
    $region45: #{vit_forward.1} parent=1 // pred_fallthru
      _
    // Predicated region
    $region46: #{vit_forward.1} parent=1 // pred_check
      _
    $region47: #{vit_forward.1} parent=1 // pred_check_branch
      %54 = sbr.rel (0) target = $region49
    $region48: #{vit_forward.1} parent=1 // pred_region
      _
    $region49: #{vit_forward.1} parent=1 // pred_fallthru
      _
    // Predicated region
    $region50: #{vit_forward.1} parent=1 // pred_check
      _
    $region51: #{vit_forward.1} parent=1 // pred_check_branch
      %56 = sbr.rel (0) target = $region53
    $region52: #{vit_forward.1} parent=1 // pred_region
      _
    $region53: #{vit_forward.1} parent=1 // pred_fallthru
      _
    // Predicated region
    $region54: #{vit_forward.1} parent=1 // pred_check
      _
    $region55: #{vit_forward.1} parent=1 // pred_check_branch
      %58 = sbr.rel (0) target = $region57
    $region56: #{vit_forward.1} parent=1 // pred_region
      _
    $region57: #{vit_forward.1} parent=1 // pred_fallthru
      _
    // Predicated region
    $region58: #{vit_forward.1} parent=1 // pred_check
      _
    $region59: #{vit_forward.1} parent=1 // pred_check_branch
      %60 = sbr.rel (0) target = $region61
    $region60: #{vit_forward.1} parent=1 // pred_region
      _
    $region61: #{vit_forward.1} parent=1 // pred_fallthru
      _
    // Predicated region
    $region62: #{vit_forward.1} parent=1 // pred_check
      _
    $region63: #{vit_forward.1} parent=1 // pred_check_branch
      %62 = sbr.rel (0) target = $region65
    $region64: #{vit_forward.1} parent=1 // pred_region
      _
    $region65: #{vit_forward.1} parent=1 // pred_fallthru
      _
    // Predicated region
    $region66: #{vit_forward.1} parent=1 // pred_check
      _
    $region67: #{vit_forward.1} parent=1 // pred_check_branch
      %64 = sbr.rel (0) target = $region69
    $region68: #{vit_forward.1} parent=1 // pred_region
      _
    $region69: #{vit_forward.1} parent=1 // pred_fallthru
      _
    // Predicated region
    $region70: #{vit_forward.1} parent=1 // pred_check
      _
    $region71: #{vit_forward.1} parent=1 // pred_check_branch
      %66 = sbr.rel (0) target = $region73
    $region72: #{vit_forward.1} parent=1 // pred_region
      _
    $region73: #{vit_forward.1} parent=1 // pred_fallthru
      _
    // Predicated region
    $region74: #{vit_forward.1} parent=1 // pred_check
      _
    $region75: #{vit_forward.1} parent=1 // pred_check_branch
      %68 = sbr.rel (0) target = $region77
    $region76: #{vit_forward.1} parent=1 // pred_region
      _
    $region77: #{vit_forward.1} parent=1 // pred_fallthru
      _
    // Predicated region
    $region78: #{vit_forward.1} parent=1 // pred_check
      _
    $region79: #{vit_forward.1} parent=1 // pred_check_branch
      %70 = sbr.rel (0) target = $region81
    $region80: #{vit_forward.1} parent=1 // pred_region
      _
    $region81: #{vit_forward.1} parent=1 // pred_fallthru
      _
    // Predicated region
    $region82: #{vit_forward.1} parent=1 // pred_check
      _
    $region83: #{vit_forward.1} parent=1 // pred_check_branch
      %72 = sbr.rel (0) target = $region85
    $region84: #{vit_forward.1} parent=1 // pred_region
      %74 = vsyncadd [#allocation3], 0
      %s75 = sshll.u32 %s20, 4
      %s76 = int_to_ptr.hbm [resolvable:$true] %s75
      %s77 = sshll.u32 [#allocation2], 4
      %s78 = int_to_ptr.vmem [resolvable:$true] %s77
      %83 = dma.hbm_to_vmem [thread:$0]  %s76, 32768, %s78, [#allocation3], 256, 256, 16
    $region85: #{vit_forward.1} parent=1 // pred_fallthru
      _
    // Predicated region
    $region86: #{vit_forward.1} parent=1 // pred_check
      _
    $region87: #{vit_forward.1} parent=1 // pred_check_branch
      %85 = sbr.rel (0) target = $region89
    $region88: #{vit_forward.1} parent=1 // pred_region
      _
    $region89: #{vit_forward.1} parent=1 // pred_fallthru
      _
    // Predicated region
    $region90: #{vit_forward.1} parent=1 // pred_check
      _
    $region91: #{vit_forward.1} parent=1 // pred_check_branch
      %87 = sbr.rel (0) target = $region93
    $region92: #{vit_forward.1} parent=1 // pred_region
      _
    $region93: #{vit_forward.1} parent=1 // pred_fallthru
      _
    // Predicated region
    $region94: #{vit_forward.1} parent=1 // pred_check
      _
    $region95: #{vit_forward.1} parent=1 // pred_check_branch
      %89 = sbr.rel (0) target = $region97
    $region96: #{vit_forward.1} parent=1 // pred_region
      _
    $region97: #{vit_forward.1} parent=1 // pred_fallthru
      _
    // Predicated region
    $region98: #{vit_forward.1} parent=1 // pred_check
      _
    $region99: #{vit_forward.1} parent=1 // pred_check_branch
      %91 = sbr.rel (0) target = $region101
    $region100: #{vit_forward.1} parent=1 // pred_region
      %93 = dma.done [#allocation3], 32768
    $region101: #{vit_forward.1} parent=1 // pred_fallthru
      _
    %v95 = vld [vmem:[%s2] sm:$0xff]
    %v96 = vld [vmem:[%s0] sm:$0xff]
    %v97 = vld [vmem:[%s0 + $0x8] sm:$0xff]
    %v98 = vld [vmem:[%s0 + $0x10] sm:$0xff]
    %v99 = vld [vmem:[%s0 + $0x18] sm:$0xff]
    %v100 = vld [vmem:[%s0 + $0x20] sm:$0xff]
    %v101 = vld [vmem:[%s0 + $0x28] sm:$0xff]
    %v102 = vld [vmem:[%s0 + $0x30] sm:$0xff]
    %v103 = vld [vmem:[%s0 + $0x38] sm:$0xff]
    %v104 = vld [vmem:[%s0 + $0x40] sm:$0xff]
    %v105 = vld [vmem:[%s0 + $0x48] sm:$0xff]
    %v106 = vld [vmem:[%s0 + $0x50] sm:$0xff]
    %v107 = vld [vmem:[%s0 + $0x58] sm:$0xff]
    %v108 = vld [vmem:[%s3] sm:$0xff]
    %v109 = vld [vmem:[%s3 + $0x8] sm:$0xff]
    %v110 = vld [vmem:[%s3 + $0x10] sm:$0xff]
    %v111 = vld [vmem:[%s3 + $0x18] sm:$0xff]
    %v112 = vld [vmem:[%s3 + $0x20] sm:$0xff]
    %v113 = vld [vmem:[%s3 + $0x28] sm:$0xff]
    %v114 = vld [vmem:[%s3 + $0x30] sm:$0xff]
    %v115 = vld [vmem:[%s3 + $0x38] sm:$0xff]
    %v116 = vld [vmem:[%s3 + $0x40] sm:$0xff]
    %v117 = vld [vmem:[%s3 + $0x48] sm:$0xff]
    %v118 = vld [vmem:[%s3 + $0x50] sm:$0xff]
    %v119 = vld [vmem:[%s3 + $0x58] sm:$0xff]
    %v120 = vld [vmem:[%s3 + $0x60] sm:$0xff]
    %v121 = vld [vmem:[%s3 + $0x68] sm:$0xff]
    %v122 = vld [vmem:[%s3 + $0x70] sm:$0xff]
    %v123 = vld [vmem:[%s3 + $0x78] sm:$0xff]
    %v124 = vld [vmem:[%s3 + $0x80] sm:$0xff]
    %v125 = vld [vmem:[%s3 + $0x88] sm:$0xff]
    %v126 = vld [vmem:[%s3 + $0x90] sm:$0xff]
    %v127 = vld [vmem:[%s3 + $0x98] sm:$0xff]
    %v128 = vld [vmem:[%s3 + $0xa0] sm:$0xff]
    %v129 = vld [vmem:[%s3 + $0xa8] sm:$0xff]
    %v130 = vld [vmem:[%s3 + $0xb0] sm:$0xff]
    %v131 = vld [vmem:[%s3 + $0xb8] sm:$0xff]
    %v132 = vld [vmem:[%s3 + $0xc0] sm:$0xff]
    %v133 = vld [vmem:[%s3 + $0xc8] sm:$0xff]
    %v134 = vld [vmem:[%s3 + $0xd0] sm:$0xff]
    %v135 = vld [vmem:[%s3 + $0xd8] sm:$0xff]
    %v136 = vld [vmem:[%s3 + $0xe0] sm:$0xff]
    %v137 = vld [vmem:[%s3 + $0xe8] sm:$0xff]
    %v138 = vld [vmem:[%s3 + $0xf0] sm:$0xff]
    %v139 = vld [vmem:[%s3 + $0xf8] sm:$0xff]
    %v140 = vld [vmem:[%s3 + $0x100] sm:$0xff]
    %v141 = vld [vmem:[%s3 + $0x108] sm:$0xff]
    %v142 = vld [vmem:[%s3 + $0x110] sm:$0xff]
    %v143 = vld [vmem:[%s3 + $0x118] sm:$0xff]
    %v144 = vld [vmem:[%s3 + $0x120] sm:$0xff]
    %v145 = vld [vmem:[%s3 + $0x128] sm:$0xff]
    %v146 = vld [vmem:[%s3 + $0x130] sm:$0xff]
    %v147 = vld [vmem:[%s3 + $0x138] sm:$0xff]
    %v148 = vld [vmem:[%s3 + $0x140] sm:$0xff]
    %v149 = vld [vmem:[%s3 + $0x148] sm:$0xff]
    %v150 = vld [vmem:[%s3 + $0x150] sm:$0xff]
    %v151 = vld [vmem:[%s3 + $0x158] sm:$0xff]
    %v152 = vld [vmem:[%s3 + $0x160] sm:$0xff]
    %v153 = vld [vmem:[%s3 + $0x168] sm:$0xff]
    %v154 = vld [vmem:[%s3 + $0x170] sm:$0xff]
    %v155 = vld [vmem:[%s3 + $0x178] sm:$0xff]
    %v156 = vld [vmem:[%s3 + $0x180] sm:$0xff]
    %v157 = vld [vmem:[%s3 + $0x188] sm:$0xff]
    %v158 = vld [vmem:[%s3 + $0x190] sm:$0xff]
    %v159 = vld [vmem:[%s3 + $0x198] sm:$0xff]
    %v160 = vld [vmem:[%s3 + $0x1a0] sm:$0xff]
    %v161 = vld [vmem:[%s3 + $0x1a8] sm:$0xff]
    %v162 = vld [vmem:[%s3 + $0x1b0] sm:$0xff]
    %v163 = vld [vmem:[%s3 + $0x1b8] sm:$0xff]
    %v164 = vld [vmem:[%s3 + $0x1c0] sm:$0xff]
    %v165 = vld [vmem:[%s3 + $0x1c8] sm:$0xff]
    %v166 = vld [vmem:[%s3 + $0x1d0] sm:$0xff]
    %v167 = vld [vmem:[%s3 + $0x1d8] sm:$0xff]
    %v168 = vld [vmem:[%s3 + $0x1e0] sm:$0xff]
    %v169 = vld [vmem:[%s3 + $0x1e8] sm:$0xff]
    %v170 = vld [vmem:[%s3 + $0x1f0] sm:$0xff]
    %v171 = vld [vmem:[%s3 + $0x1f8] sm:$0xff]
    %v172 = vld [vmem:[%s3 + $0x200] sm:$0xff]
    %v173 = vld [vmem:[%s3 + $0x208] sm:$0xff]
    %v174 = vld [vmem:[%s3 + $0x210] sm:$0xff]
    %v175 = vld [vmem:[%s3 + $0x218] sm:$0xff]
    %v176 = vld [vmem:[%s3 + $0x220] sm:$0xff]
    %v177 = vld [vmem:[%s3 + $0x228] sm:$0xff]
    %v178 = vld [vmem:[%s3 + $0x230] sm:$0xff]
    %v179 = vld [vmem:[%s3 + $0x238] sm:$0xff]
    %v180 = vld [vmem:[%s3 + $0x240] sm:$0xff]
    %v181 = vld [vmem:[%s3 + $0x248] sm:$0xff]
    %v182 = vld [vmem:[%s3 + $0x250] sm:$0xff]
    %v183 = vld [vmem:[%s3 + $0x258] sm:$0xff]
    %v184 = vld [vmem:[%s3 + $0x260] sm:$0xff]
    %v185 = vld [vmem:[%s3 + $0x268] sm:$0xff]
    %v186 = vld [vmem:[%s3 + $0x270] sm:$0xff]
    %v187 = vld [vmem:[%s3 + $0x278] sm:$0xff]
    %v188 = vld [vmem:[%s3 + $0x280] sm:$0xff]
    %v189 = vld [vmem:[%s3 + $0x288] sm:$0xff]
    %v190 = vld [vmem:[%s3 + $0x290] sm:$0xff]
    %v191 = vld [vmem:[%s3 + $0x298] sm:$0xff]
    %v192 = vld [vmem:[%s3 + $0x2a0] sm:$0xff]
    %v193 = vld [vmem:[%s3 + $0x2a8] sm:$0xff]
    %v194 = vld [vmem:[%s3 + $0x2b0] sm:$0xff]
    %v195 = vld [vmem:[%s3 + $0x2b8] sm:$0xff]
    %v196 = vld [vmem:[%s3 + $0x2c0] sm:$0xff]
    %v197 = vld [vmem:[%s3 + $0x2c8] sm:$0xff]
    %v198 = vld [vmem:[%s3 + $0x2d0] sm:$0xff]
    %v199 = vld [vmem:[%s3 + $0x2d8] sm:$0xff]
    %v200 = vld [vmem:[%s3 + $0x2e0] sm:$0xff]
    %v201 = vld [vmem:[%s3 + $0x2e8] sm:$0xff]
    %v202 = vld [vmem:[%s3 + $0x2f0] sm:$0xff]
    %v203 = vld [vmem:[%s3 + $0x2f8] sm:$0xff]
    %v204 = vld [vmem:[%s1] sm:$0xff]
    %v205 = vld [vmem:[%s1 + $0x8] sm:$0xff]
    %206 = vmatpush.msra.mxu0 %v123
    %207 = vmatpush.msra.mxu0 %v122
    %208 = vmatpush.msra.mxu0 %v121
    %209 = vmatpush.msra.mxu0 %v120
    %210 = vmatpush.msra.mxu0 %v119
    %211 = vmatpush.msra.mxu0 %v118
    %212 = vmatpush.msra.mxu0 %v117
    %213 = vmatpush.msra.mxu0 %v116
    %214 = vmatpush.msra.mxu0 %v115
    %215 = vmatpush.msra.mxu0 %v114
    %216 = vmatpush.msra.mxu0 %v113
    %217 = vmatpush.msra.mxu0 %v112
    %218 = vmatpush.msra.mxu0 %v111
    %219 = vmatpush.msra.mxu0 %v110
    %220 = vmatpush.msra.mxu0 %v109
    %221 = vmatpush.msra.mxu0 %v108
    %222 = vmatmul.f32.gmra.mxu0 %v96
    %v223 = vpop.f32.mrf.mxu0
    %v224 = vadd.f32 %v204, %v223
    %225 = vmatmul.f32.gmra.mxu0 %v102
    %v226 = vpop.f32.mrf.mxu0
    %v227 = vadd.f32 %v205, %v226
    %228 = vdwg.mxu0
    %229 = vmatpush.msra.mxu0 %v139
    %230 = vmatpush.msra.mxu0 %v138
    %231 = vmatpush.msra.mxu0 %v137
    %232 = vmatpush.msra.mxu0 %v136
    %233 = vmatpush.msra.mxu0 %v135
    %234 = vmatpush.msra.mxu0 %v134
    %235 = vmatpush.msra.mxu0 %v133
    %236 = vmatpush.msra.mxu0 %v132
    %237 = vmatpush.msra.mxu0 %v131
    %238 = vmatpush.msra.mxu0 %v130
    %239 = vmatpush.msra.mxu0 %v129
    %240 = vmatpush.msra.mxu0 %v128
    %241 = vmatpush.msra.mxu0 %v127
    %242 = vmatpush.msra.mxu0 %v126
    %243 = vmatpush.msra.mxu0 %v125
    %244 = vmatpush.msra.mxu0 %v124
    %245 = vmatmul.f32.gmra.mxu0 %v97
    %v246 = vpop.f32.mrf.mxu0
    %v247 = vadd.f32 %v224, %v246
    %248 = vmatmul.f32.gmra.mxu0 %v103
    %v249 = vpop.f32.mrf.mxu0
    %v250 = vadd.f32 %v227, %v249
    %251 = vdwg.mxu0
    %252 = vmatpush.msra.mxu0 %v155
    %253 = vmatpush.msra.mxu0 %v154
    %254 = vmatpush.msra.mxu0 %v153
    %255 = vmatpush.msra.mxu0 %v152
    %256 = vmatpush.msra.mxu0 %v151
    %257 = vmatpush.msra.mxu0 %v150
    %258 = vmatpush.msra.mxu0 %v149
    %259 = vmatpush.msra.mxu0 %v148
    %260 = vmatpush.msra.mxu0 %v147
    %261 = vmatpush.msra.mxu0 %v146
    %262 = vmatpush.msra.mxu0 %v145
    %263 = vmatpush.msra.mxu0 %v144
    %264 = vmatpush.msra.mxu0 %v143
    %265 = vmatpush.msra.mxu0 %v142
    %266 = vmatpush.msra.mxu0 %v141
    %267 = vmatpush.msra.mxu0 %v140
    %268 = vmatmul.f32.gmra.mxu0 %v98
    %v269 = vpop.f32.mrf.mxu0
    %v270 = vadd.f32 %v247, %v269
    %271 = vmatmul.f32.gmra.mxu0 %v104
    %v272 = vpop.f32.mrf.mxu0
    %v273 = vadd.f32 %v250, %v272
    %274 = vdwg.mxu0
    %275 = vmatpush.msra.mxu0 %v171
    %276 = vmatpush.msra.mxu0 %v170
    %277 = vmatpush.msra.mxu0 %v169
    %278 = vmatpush.msra.mxu0 %v168
    %279 = vmatpush.msra.mxu0 %v167
    %280 = vmatpush.msra.mxu0 %v166
    %281 = vmatpush.msra.mxu0 %v165
    %282 = vmatpush.msra.mxu0 %v164
    %283 = vmatpush.msra.mxu0 %v163
    %284 = vmatpush.msra.mxu0 %v162
    %285 = vmatpush.msra.mxu0 %v161
    %286 = vmatpush.msra.mxu0 %v160
    %287 = vmatpush.msra.mxu0 %v159
    %288 = vmatpush.msra.mxu0 %v158
    %289 = vmatpush.msra.mxu0 %v157
    %290 = vmatpush.msra.mxu0 %v156
    %291 = vmatmul.f32.gmra.mxu0 %v99
    %v292 = vpop.f32.mrf.mxu0
    %v293 = vadd.f32 %v270, %v292
    %294 = vmatmul.f32.gmra.mxu0 %v105
    %v295 = vpop.f32.mrf.mxu0
    %v296 = vadd.f32 %v273, %v295
    %297 = vdwg.mxu0
    %298 = vmatpush.msra.mxu0 %v187
    %299 = vmatpush.msra.mxu0 %v186
    %300 = vmatpush.msra.mxu0 %v185
    %301 = vmatpush.msra.mxu0 %v184
    %302 = vmatpush.msra.mxu0 %v183
    %303 = vmatpush.msra.mxu0 %v182
    %304 = vmatpush.msra.mxu0 %v181
    %305 = vmatpush.msra.mxu0 %v180
    %306 = vmatpush.msra.mxu0 %v179
    %307 = vmatpush.msra.mxu0 %v178
    %308 = vmatpush.msra.mxu0 %v177
    %309 = vmatpush.msra.mxu0 %v176
    %310 = vmatpush.msra.mxu0 %v175
    %311 = vmatpush.msra.mxu0 %v174
    %312 = vmatpush.msra.mxu0 %v173
    %313 = vmatpush.msra.mxu0 %v172
    %314 = vmatmul.f32.gmra.mxu0 %v100
    %v315 = vpop.f32.mrf.mxu0
    %v316 = vadd.f32 %v293, %v315
    %317 = vmatmul.f32.gmra.mxu0 %v106
    %v318 = vpop.f32.mrf.mxu0
    %v319 = vadd.f32 %v296, %v318
    %320 = vdwg.mxu0
    %321 = vmatpush.msra.mxu0 %v203
    %322 = vmatpush.msra.mxu0 %v202
    %323 = vmatpush.msra.mxu0 %v201
    %324 = vmatpush.msra.mxu0 %v200
    %325 = vmatpush.msra.mxu0 %v199
    %326 = vmatpush.msra.mxu0 %v198
    %327 = vmatpush.msra.mxu0 %v197
    %328 = vmatpush.msra.mxu0 %v196
    %329 = vmatpush.msra.mxu0 %v195
    %330 = vmatpush.msra.mxu0 %v194
    %331 = vmatpush.msra.mxu0 %v193
    %332 = vmatpush.msra.mxu0 %v192
    %333 = vmatpush.msra.mxu0 %v191
    %334 = vmatpush.msra.mxu0 %v190
    %335 = vmatpush.msra.mxu0 %v189
    %336 = vmatpush.msra.mxu0 %v188
    %337 = vmatmul.f32.gmra.mxu0 %v101
    %v338 = vpop.f32.mrf.mxu0
    %v339 = vadd.f32 %v316, %v338
    %340 = vmatmul.f32.gmra.mxu0 %v107
    %v341 = vpop.f32.mrf.mxu0
    %v342 = vadd.f32 %v319, %v341
    %343 = vdwg.mxu0
    %v344 = vld [vmem:[%s4] sm:$0x1]
    %v345 = vld [vmem:[%s5] sm:$0x1]
    %vm346 = vcmask 523264
    %v347 = vsel %vm346, %v339, 0.0
    %348 = vadd.xlane.f32.xlu0 %v347
    %v349 = vpop.xlane.xlu0 %348
    %v350 = vsel %vm346, %v342, 0.0
    %351 = vadd.xlane.f32.xlu0 %v350
    %v352 = vpop.xlane.xlu0 %351
    %v353 = vrcp.pop 64.0
    %v354 = vmul.f32 64.0, %v353
    %v355 = vsub.f32 1.0, %v354
    %v356 = vmul.f32 %v353, %v355
    %v357 = vadd.f32 %v353, %v356
    %vm358 = vweird.f32 %v353
    %v359 = vsel %vm358, %v353, %v357
    %v360 = vmul.f32 %v349, %v359
    %v361 = vmul.f32 %v352, %v359
    %v362 = vsub.f32 %v339, %v360
    %v363 = vsub.f32 %v342, %v361
    %v364 = vmul.f32 %v362, %v362
    %v365 = vmul.f32 %v363, %v363
    %v366 = vsel %vm346, %v364, 0.0
    %367 = vadd.xlane.f32.xlu0 %v366
    %v368 = vpop.xlane.xlu0 %367
    %v369 = vsel %vm346, %v365, 0.0
    %370 = vadd.xlane.f32.xlu0 %v369
    %v371 = vpop.xlane.xlu0 %370
    %v372 = vmul.f32 %v368, %v359
    %v373 = vmul.f32 %v371, %v359
    %v374 = vadd.f32 %v372, 1e-06
    %v375 = vadd.f32 %v373, 1e-06
    %v376 = vrsqrt.pop %v374
    %v377 = vmul.f32 %v376, %v374
    %v378 = vmul.f32 %v377, %v376
    %v379 = vmul.f32 0.5, %v378
    %v380 = vsub.f32 1.5, %v379
    %v381 = vmul.f32 %v376, %v380
    %vm382 = vweird.f32 %v374
    %vm383 = vweird.f32 %v376
    %vm384 = vmor %vm382, %vm383
    %v385 = vsel %vm384, %v376, %v381
    %v386 = vrsqrt.pop %v375
    %v387 = vmul.f32 %v386, %v375
    %v388 = vmul.f32 %v387, %v386
    %v389 = vmul.f32 0.5, %v388
    %v390 = vsub.f32 1.5, %v389
    %v391 = vmul.f32 %v386, %v390
    %vm392 = vweird.f32 %v375
    %vm393 = vweird.f32 %v386
    %vm394 = vmor %vm392, %vm393
    %v395 = vsel %vm394, %v386, %v391
    %v396 = vmul.f32 %v362, %v385
    %v397 = vmul.f32 %v363, %v395
    %v399 = vperm.slane %v344, 0
    %v401 = vmul.f32 %v396, %v399
    %v402 = vmul.f32 %v397, %v399
    %v404 = vperm.slane %v345, 0
    %v406 = vadd.f32 %v401, %v404
    %v407 = vadd.f32 %v402, %v404
    %v408 = vld [vmem:[%s6] sm:$0xff]
    %v409 = vld [vmem:[%s6 + $0x8] sm:$0xff]
    %v410 = vld [vmem:[%s6 + $0x10] sm:$0xff]
    %v411 = vld [vmem:[%s6 + $0x18] sm:$0xff]
    %v412 = vld [vmem:[%s6 + $0x20] sm:$0xff]
    %v413 = vld [vmem:[%s6 + $0x28] sm:$0xff]
    %v414 = vld [vmem:[%s6 + $0x30] sm:$0xff]
    %v415 = vld [vmem:[%s6 + $0x38] sm:$0xff]
    %v416 = vld [vmem:[%s6 + $0x40] sm:$0xff]
    %v417 = vld [vmem:[%s6 + $0x48] sm:$0xff]
    %v418 = vld [vmem:[%s6 + $0x50] sm:$0xff]
    %v419 = vld [vmem:[%s6 + $0x58] sm:$0xff]
    %v420 = vld [vmem:[%s6 + $0x60] sm:$0xff]
    %v421 = vld [vmem:[%s6 + $0x68] sm:$0xff]
    %v422 = vld [vmem:[%s6 + $0x70] sm:$0xff]
    %v423 = vld [vmem:[%s6 + $0x78] sm:$0xff]
    %v424 = vld [vmem:[%s7] sm:$0x3]
    %v426 = vperm.slane %v424, 0
    %v427 = vperm.slane %v424, 1
    %v431 = vsel %vm346, %v406, 0
    %v434 = vsel %vm346, %v407, 0
    %436 = vmatpush.msra.mxu0 0.0
    %437 = vmatpush.msra.mxu0 0.0
    %438 = vmatpush.msra.mxu0 0.0
    %439 = vmatpush.msra.mxu0 0.0
    %440 = vmatpush.msra.mxu0 0.0
    %441 = vmatpush.msra.mxu0 0.0
    %442 = vmatpush.msra.mxu0 0.0
    %443 = vmatpush.msra.mxu0 0.0
    %444 = vmatpush.msra.mxu0 %v422
    %445 = vmatpush.msra.mxu0 %v420
    %446 = vmatpush.msra.mxu0 %v418
    %447 = vmatpush.msra.mxu0 %v416
    %448 = vmatpush.msra.mxu0 %v414
    %449 = vmatpush.msra.mxu0 %v412
    %450 = vmatpush.msra.mxu0 %v410
    %451 = vmatpush.msra.mxu0 %v408
    %452 = vmatmul.f32.gmra.mxu0 %v431
    %v453 = vpop.f32.mrf.mxu0
    %v454 = vadd.f32 %v426, %v453
    %455 = vmatmul.f32.gmra.mxu0 %v434
    %v456 = vpop.f32.mrf.mxu0
    %v457 = vadd.f32 %v426, %v456
    %458 = vdwg.mxu0
    %459 = vmatpush.msra.mxu0 0.0
    %460 = vmatpush.msra.mxu0 0.0
    %461 = vmatpush.msra.mxu0 0.0
    %462 = vmatpush.msra.mxu0 0.0
    %463 = vmatpush.msra.mxu0 0.0
    %464 = vmatpush.msra.mxu0 0.0
    %465 = vmatpush.msra.mxu0 0.0
    %466 = vmatpush.msra.mxu0 0.0
    %467 = vmatpush.msra.mxu0 %v423
    %468 = vmatpush.msra.mxu0 %v421
    %469 = vmatpush.msra.mxu0 %v419
    %470 = vmatpush.msra.mxu0 %v417
    %471 = vmatpush.msra.mxu0 %v415
    %472 = vmatpush.msra.mxu0 %v413
    %473 = vmatpush.msra.mxu0 %v411
    %474 = vmatpush.msra.mxu0 %v409
    %475 = vmatmul.f32.gmra.mxu0 %v431
    %v476 = vpop.f32.mrf.mxu0
    %v477 = vadd.f32 %v427, %v476
    %478 = vmatmul.f32.gmra.mxu0 %v434
    %v479 = vpop.f32.mrf.mxu0
    %v480 = vadd.f32 %v427, %v479
    %481 = vdwg.mxu0
    %v482 = vld [vmem:[%s8] sm:$0xff]
    %v483 = vld [vmem:[%s8 + $0x8] sm:$0xff]
    %v484 = vld [vmem:[%s8 + $0x10] sm:$0xff]
    %v485 = vld [vmem:[%s8 + $0x18] sm:$0xff]
    %v486 = vld [vmem:[%s8 + $0x20] sm:$0xff]
    %v487 = vld [vmem:[%s8 + $0x28] sm:$0xff]
    %v488 = vld [vmem:[%s8 + $0x30] sm:$0xff]
    %v489 = vld [vmem:[%s8 + $0x38] sm:$0xff]
    %v490 = vld [vmem:[%s9] sm:$0x1]
    %492 = vrot.lane.b32.xlu0 %v454, 64
    %v493 = vpop.permute.xlu0 %492
    %vm494 = vcmask 130048
    %v495 = vsel %vm494, %v454, 0
    %v497 = vsel %vm494, %v493, 0
    %499 = vmatpush.xpose.msra.mxu0 0.0
    %500 = vmatpush.xpose.msra.mxu0 0.0
    %501 = vmatpush.xpose.msra.mxu0 0.0
    %502 = vmatpush.xpose.msra.mxu0 0.0
    %503 = vmatpush.xpose.msra.mxu0 0.0
    %504 = vmatpush.xpose.msra.mxu0 0.0
    %505 = vmatpush.xpose.msra.mxu0 0.0
    %506 = vmatpush.xpose.msra.mxu0 0.0
    %507 = vmatpush.xpose.msra.mxu0 0.0
    %508 = vmatpush.xpose.msra.mxu0 0.0
    %509 = vmatpush.xpose.msra.mxu0 0.0
    %510 = vmatpush.xpose.msra.mxu0 0.0
    %511 = vmatpush.xpose.msra.mxu0 0.0
    %512 = vmatpush.xpose.msra.mxu0 0.0
    %513 = vmatpush.xpose.msra.mxu0 0.0
    %514 = vmatpush.xpose.msra.mxu0 %v497
    %515 = vmatmul.f32.gmra.mxu0 %v495
    %v516 = vpop.f32.mrf.mxu0
    %v517 = vadd.f32 0.0, %v516
    %518 = vdwg.mxu0
    %520 = vrot.lane.b32.xlu0 %v457, 64
    %v521 = vpop.permute.xlu0 %520
    %v522 = vsel %vm494, %v457, 0
    %v524 = vsel %vm494, %v521, 0
    %526 = vmatpush.xpose.msra.mxu0 0.0
    %527 = vmatpush.xpose.msra.mxu0 0.0
    %528 = vmatpush.xpose.msra.mxu0 0.0
    %529 = vmatpush.xpose.msra.mxu0 0.0
    %530 = vmatpush.xpose.msra.mxu0 0.0
    %531 = vmatpush.xpose.msra.mxu0 0.0
    %532 = vmatpush.xpose.msra.mxu0 0.0
    %533 = vmatpush.xpose.msra.mxu0 0.0
    %534 = vmatpush.xpose.msra.mxu0 0.0
    %535 = vmatpush.xpose.msra.mxu0 0.0
    %536 = vmatpush.xpose.msra.mxu0 0.0
    %537 = vmatpush.xpose.msra.mxu0 0.0
    %538 = vmatpush.xpose.msra.mxu0 0.0
    %539 = vmatpush.xpose.msra.mxu0 0.0
    %540 = vmatpush.xpose.msra.mxu0 0.0
    %541 = vmatpush.xpose.msra.mxu0 %v524
    %542 = vmatmul.f32.gmra.mxu0 %v522
    %v543 = vpop.f32.mrf.mxu0
    %v544 = vadd.f32 0.0, %v543
    %545 = vdwg.mxu0
    %v546 = vmul.f32 %v517, 0.25
    %v547 = vmul.f32 %v544, 0.25
    %v548 = vadd.f32 %v546, %v95
    %v549 = vadd.f32 %v547, %v95
    %vm550 = vcmask 64512
    %v551 = vsel %vm550, %v548, -inf
    %552 = vmax.xlane.f32.xlu0 %v551
    %v553 = vpop.xlane.xlu0 %552
    %v554 = vsel %vm550, %v549, -inf
    %555 = vmax.xlane.f32.xlu0 %v554
    %v556 = vpop.xlane.xlu0 %555
    %v557 = vsub.f32 %v548, %v553
    %v558 = vsub.f32 %v549, %v556
    %v559 = vmul.f32 %v557, 1.442695
    %v560 = vpow.pop %v559
    %v561 = vmul.f32 %v558, 1.442695
    %v562 = vpow.pop %v561
    %v563 = vsel %vm550, %v560, 0.0
    %564 = vadd.xlane.f32.xlu0 %v563
    %v565 = vpop.xlane.xlu0 %564
    %v566 = vsel %vm550, %v562, 0.0
    %567 = vadd.xlane.f32.xlu0 %v566
    %v568 = vpop.xlane.xlu0 %567
    %v569 = vrcp.pop %v565
    %v570 = vrcp.pop %v568
    %v571 = vmul.f32 %v560, %v569
    %v572 = vmul.f32 %v562, %v570
    %v574 = vsel %vm550, %v571, 0
    %576 = vmatpush.msra.mxu0 0.0
    %577 = vmatpush.msra.mxu0 0.0
    %578 = vmatpush.msra.mxu0 0.0
    %579 = vmatpush.msra.mxu0 0.0
    %580 = vmatpush.msra.mxu0 0.0
    %581 = vmatpush.msra.mxu0 0.0
    %582 = vmatpush.msra.mxu0 0.0
    %583 = vmatpush.msra.mxu0 0.0
    %584 = vmatpush.msra.mxu0 0.0
    %585 = vmatpush.msra.mxu0 0.0
    %586 = vmatpush.msra.mxu0 0.0
    %587 = vmatpush.msra.mxu0 0.0
    %588 = vmatpush.msra.mxu0 0.0
    %589 = vmatpush.msra.mxu0 0.0
    %590 = vmatpush.msra.mxu0 0.0
    %591 = vmatpush.msra.mxu0 %v477
    %592 = vmatmul.f32.gmra.mxu0 %v574
    %v593 = vpop.f32.mrf.mxu0
    %v594 = vadd.f32 0.0, %v593
    %595 = vdwg.mxu0
    %v597 = vsel %vm550, %v572, 0
    %599 = vmatpush.msra.mxu0 0.0
    %600 = vmatpush.msra.mxu0 0.0
    %601 = vmatpush.msra.mxu0 0.0
    %602 = vmatpush.msra.mxu0 0.0
    %603 = vmatpush.msra.mxu0 0.0
    %604 = vmatpush.msra.mxu0 0.0
    %605 = vmatpush.msra.mxu0 0.0
    %606 = vmatpush.msra.mxu0 0.0
    %607 = vmatpush.msra.mxu0 0.0
    %608 = vmatpush.msra.mxu0 0.0
    %609 = vmatpush.msra.mxu0 0.0
    %610 = vmatpush.msra.mxu0 0.0
    %611 = vmatpush.msra.mxu0 0.0
    %612 = vmatpush.msra.mxu0 0.0
    %613 = vmatpush.msra.mxu0 0.0
    %614 = vmatpush.msra.mxu0 %v480
    %615 = vmatmul.f32.gmra.mxu0 %v597
    %v616 = vpop.f32.mrf.mxu0
    %v617 = vadd.f32 0.0, %v616
    %618 = vdwg.mxu0
    %v620 = vsel %vm494, %v594, 0
    %v623 = vsel %vm494, %v617, 0
    %625 = vmatpush.msra.mxu0 0.0
    %626 = vmatpush.msra.mxu0 0.0
    %627 = vmatpush.msra.mxu0 0.0
    %628 = vmatpush.msra.mxu0 0.0
    %629 = vmatpush.msra.mxu0 0.0
    %630 = vmatpush.msra.mxu0 0.0
    %631 = vmatpush.msra.mxu0 0.0
    %632 = vmatpush.msra.mxu0 0.0
    %633 = vmatpush.msra.mxu0 0.0
    %634 = vmatpush.msra.mxu0 0.0
    %635 = vmatpush.msra.mxu0 0.0
    %636 = vmatpush.msra.mxu0 0.0
    %637 = vmatpush.msra.mxu0 0.0
    %638 = vmatpush.msra.mxu0 0.0
    %639 = vmatpush.msra.mxu0 %v483
    %640 = vmatpush.msra.mxu0 %v482
    %641 = vmatmul.f32.gmra.mxu0 %v620
    %v642 = vpop.f32.mrf.mxu0
    %v643 = vadd.f32 0.0, %v642
    %644 = vmatmul.f32.gmra.mxu0 %v623
    %v645 = vpop.f32.mrf.mxu0
    %v646 = vadd.f32 0.0, %v645
    %647 = vdwg.mxu0
    %v649 = vperm.slane %v490, 0
    %v651 = vadd.f32 %v649, %v643
    %v652 = vadd.f32 %v649, %v646
    %653 = vrot.lane.b32.xlu0 %v454, 112
    %v654 = vpop.permute.xlu0 %653
    %655 = vrot.lane.b32.xlu0 %v454, 48
    %v656 = vpop.permute.xlu0 %655
    %v657 = vsel %vm494, %v654, 0
    %v659 = vsel %vm494, %v656, 0
    %661 = vmatpush.xpose.msra.mxu0 0.0
    %662 = vmatpush.xpose.msra.mxu0 0.0
    %663 = vmatpush.xpose.msra.mxu0 0.0
    %664 = vmatpush.xpose.msra.mxu0 0.0
    %665 = vmatpush.xpose.msra.mxu0 0.0
    %666 = vmatpush.xpose.msra.mxu0 0.0
    %667 = vmatpush.xpose.msra.mxu0 0.0
    %668 = vmatpush.xpose.msra.mxu0 0.0
    %669 = vmatpush.xpose.msra.mxu0 0.0
    %670 = vmatpush.xpose.msra.mxu0 0.0
    %671 = vmatpush.xpose.msra.mxu0 0.0
    %672 = vmatpush.xpose.msra.mxu0 0.0
    %673 = vmatpush.xpose.msra.mxu0 0.0
    %674 = vmatpush.xpose.msra.mxu0 0.0
    %675 = vmatpush.xpose.msra.mxu0 0.0
    %676 = vmatpush.xpose.msra.mxu0 %v659
    %677 = vmatmul.f32.gmra.mxu0 %v657
    %v678 = vpop.f32.mrf.mxu0
    %v679 = vadd.f32 0.0, %v678
    %680 = vdwg.mxu0
    %681 = vrot.lane.b32.xlu0 %v457, 112
    %v682 = vpop.permute.xlu0 %681
    %683 = vrot.lane.b32.xlu0 %v457, 48
    %v684 = vpop.permute.xlu0 %683
    %v685 = vsel %vm494, %v682, 0
    %v687 = vsel %vm494, %v684, 0
    %689 = vmatpush.xpose.msra.mxu0 0.0
    %690 = vmatpush.xpose.msra.mxu0 0.0
    %691 = vmatpush.xpose.msra.mxu0 0.0
    %692 = vmatpush.xpose.msra.mxu0 0.0
    %693 = vmatpush.xpose.msra.mxu0 0.0
    %694 = vmatpush.xpose.msra.mxu0 0.0
    %695 = vmatpush.xpose.msra.mxu0 0.0
    %696 = vmatpush.xpose.msra.mxu0 0.0
    %697 = vmatpush.xpose.msra.mxu0 0.0
    %698 = vmatpush.xpose.msra.mxu0 0.0
    %699 = vmatpush.xpose.msra.mxu0 0.0
    %700 = vmatpush.xpose.msra.mxu0 0.0
    %701 = vmatpush.xpose.msra.mxu0 0.0
    %702 = vmatpush.xpose.msra.mxu0 0.0
    %703 = vmatpush.xpose.msra.mxu0 0.0
    %704 = vmatpush.xpose.msra.mxu0 %v687
    %705 = vmatmul.f32.gmra.mxu0 %v685
    %v706 = vpop.f32.mrf.mxu0
    %v707 = vadd.f32 0.0, %v706
    %708 = vdwg.mxu0
    %v709 = vmul.f32 %v679, 0.25
    %v710 = vmul.f32 %v707, 0.25
    %v711 = vadd.f32 %v709, %v95
    %v712 = vadd.f32 %v710, %v95
    %v713 = vsel %vm550, %v711, -inf
    %714 = vmax.xlane.f32.xlu0 %v713
    %v715 = vpop.xlane.xlu0 %714
    %v716 = vsel %vm550, %v712, -inf
    %717 = vmax.xlane.f32.xlu0 %v716
    %v718 = vpop.xlane.xlu0 %717
    %v719 = vsub.f32 %v711, %v715
    %v720 = vsub.f32 %v712, %v718
    %v721 = vmul.f32 %v719, 1.442695
    %v722 = vpow.pop %v721
    %v723 = vmul.f32 %v720, 1.442695
    %v724 = vpow.pop %v723
    %v725 = vsel %vm550, %v722, 0.0
    %726 = vadd.xlane.f32.xlu0 %v725
    %v727 = vpop.xlane.xlu0 %726
    %v728 = vsel %vm550, %v724, 0.0
    %729 = vadd.xlane.f32.xlu0 %v728
    %v730 = vpop.xlane.xlu0 %729
    %v731 = vrcp.pop %v727
    %v732 = vrcp.pop %v730
    %v733 = vmul.f32 %v722, %v731
    %v734 = vmul.f32 %v724, %v732
    %736 = vrot.lane.b32.xlu0 %v477, 112
    %v737 = vpop.permute.xlu0 %736
    %v740 = vsel %vm550, %v733, 0
    %742 = vmatpush.msra.mxu0 0.0
    %743 = vmatpush.msra.mxu0 0.0
    %744 = vmatpush.msra.mxu0 0.0
    %745 = vmatpush.msra.mxu0 0.0
    %746 = vmatpush.msra.mxu0 0.0
    %747 = vmatpush.msra.mxu0 0.0
    %748 = vmatpush.msra.mxu0 0.0
    %749 = vmatpush.msra.mxu0 0.0
    %750 = vmatpush.msra.mxu0 0.0
    %751 = vmatpush.msra.mxu0 0.0
    %752 = vmatpush.msra.mxu0 0.0
    %753 = vmatpush.msra.mxu0 0.0
    %754 = vmatpush.msra.mxu0 0.0
    %755 = vmatpush.msra.mxu0 0.0
    %756 = vmatpush.msra.mxu0 0.0
    %757 = vmatpush.msra.mxu0 %v737
    %758 = vmatmul.f32.gmra.mxu0 %v740
    %v759 = vpop.f32.mrf.mxu0
    %v760 = vadd.f32 0.0, %v759
    %761 = vdwg.mxu0
    %763 = vrot.lane.b32.xlu0 %v480, 112
    %v764 = vpop.permute.xlu0 %763
    %v767 = vsel %vm550, %v734, 0
    %769 = vmatpush.msra.mxu0 0.0
    %770 = vmatpush.msra.mxu0 0.0
    %771 = vmatpush.msra.mxu0 0.0
    %772 = vmatpush.msra.mxu0 0.0
    %773 = vmatpush.msra.mxu0 0.0
    %774 = vmatpush.msra.mxu0 0.0
    %775 = vmatpush.msra.mxu0 0.0
    %776 = vmatpush.msra.mxu0 0.0
    %777 = vmatpush.msra.mxu0 0.0
    %778 = vmatpush.msra.mxu0 0.0
    %779 = vmatpush.msra.mxu0 0.0
    %780 = vmatpush.msra.mxu0 0.0
    %781 = vmatpush.msra.mxu0 0.0
    %782 = vmatpush.msra.mxu0 0.0
    %783 = vmatpush.msra.mxu0 0.0
    %784 = vmatpush.msra.mxu0 %v764
    %785 = vmatmul.f32.gmra.mxu0 %v767
    %v786 = vpop.f32.mrf.mxu0
    %v787 = vadd.f32 0.0, %v786
    %788 = vdwg.mxu0
    %v790 = vsel %vm494, %v760, 0
    %v793 = vsel %vm494, %v787, 0
    %795 = vmatpush.msra.mxu0 0.0
    %796 = vmatpush.msra.mxu0 0.0
    %797 = vmatpush.msra.mxu0 0.0
    %798 = vmatpush.msra.mxu0 0.0
    %799 = vmatpush.msra.mxu0 0.0
    %800 = vmatpush.msra.mxu0 0.0
    %801 = vmatpush.msra.mxu0 0.0
    %802 = vmatpush.msra.mxu0 0.0
    %803 = vmatpush.msra.mxu0 0.0
    %804 = vmatpush.msra.mxu0 0.0
    %805 = vmatpush.msra.mxu0 0.0
    %806 = vmatpush.msra.mxu0 0.0
    %807 = vmatpush.msra.mxu0 0.0
    %808 = vmatpush.msra.mxu0 0.0
    %809 = vmatpush.msra.mxu0 %v485
    %810 = vmatpush.msra.mxu0 %v484
    %811 = vmatmul.f32.gmra.mxu0 %v790
    %v812 = vpop.f32.mrf.mxu0
    %v813 = vadd.f32 0.0, %v812
    %814 = vmatmul.f32.gmra.mxu0 %v793
    %v815 = vpop.f32.mrf.mxu0
    %v816 = vadd.f32 0.0, %v815
    %817 = vdwg.mxu0
    %v818 = vadd.f32 %v651, %v813
    %v819 = vadd.f32 %v652, %v816
    %820 = vrot.lane.b32.xlu0 %v454, 96
    %v821 = vpop.permute.xlu0 %820
    %822 = vrot.lane.b32.xlu0 %v454, 32
    %v823 = vpop.permute.xlu0 %822
    %v824 = vsel %vm494, %v821, 0
    %v826 = vsel %vm494, %v823, 0
    %828 = vmatpush.xpose.msra.mxu0 0.0
    %829 = vmatpush.xpose.msra.mxu0 0.0
    %830 = vmatpush.xpose.msra.mxu0 0.0
    %831 = vmatpush.xpose.msra.mxu0 0.0
    %832 = vmatpush.xpose.msra.mxu0 0.0
    %833 = vmatpush.xpose.msra.mxu0 0.0
    %834 = vmatpush.xpose.msra.mxu0 0.0
    %835 = vmatpush.xpose.msra.mxu0 0.0
    %836 = vmatpush.xpose.msra.mxu0 0.0
    %837 = vmatpush.xpose.msra.mxu0 0.0
    %838 = vmatpush.xpose.msra.mxu0 0.0
    %839 = vmatpush.xpose.msra.mxu0 0.0
    %840 = vmatpush.xpose.msra.mxu0 0.0
    %841 = vmatpush.xpose.msra.mxu0 0.0
    %842 = vmatpush.xpose.msra.mxu0 0.0
    %843 = vmatpush.xpose.msra.mxu0 %v826
    %844 = vmatmul.f32.gmra.mxu0 %v824
    %v845 = vpop.f32.mrf.mxu0
    %v846 = vadd.f32 0.0, %v845
    %847 = vdwg.mxu0
    %848 = vrot.lane.b32.xlu0 %v457, 96
    %v849 = vpop.permute.xlu0 %848
    %850 = vrot.lane.b32.xlu0 %v457, 32
    %v851 = vpop.permute.xlu0 %850
    %v852 = vsel %vm494, %v849, 0
    %v854 = vsel %vm494, %v851, 0
    %856 = vmatpush.xpose.msra.mxu0 0.0
    %857 = vmatpush.xpose.msra.mxu0 0.0
    %858 = vmatpush.xpose.msra.mxu0 0.0
    %859 = vmatpush.xpose.msra.mxu0 0.0
    %860 = vmatpush.xpose.msra.mxu0 0.0
    %861 = vmatpush.xpose.msra.mxu0 0.0
    %862 = vmatpush.xpose.msra.mxu0 0.0
    %863 = vmatpush.xpose.msra.mxu0 0.0
    %864 = vmatpush.xpose.msra.mxu0 0.0
    %865 = vmatpush.xpose.msra.mxu0 0.0
    %866 = vmatpush.xpose.msra.mxu0 0.0
    %867 = vmatpush.xpose.msra.mxu0 0.0
    %868 = vmatpush.xpose.msra.mxu0 0.0
    %869 = vmatpush.xpose.msra.mxu0 0.0
    %870 = vmatpush.xpose.msra.mxu0 0.0
    %871 = vmatpush.xpose.msra.mxu0 %v854
    %872 = vmatmul.f32.gmra.mxu0 %v852
    %v873 = vpop.f32.mrf.mxu0
    %v874 = vadd.f32 0.0, %v873
    %875 = vdwg.mxu0
    %v876 = vmul.f32 %v846, 0.25
    %v877 = vmul.f32 %v874, 0.25
    %v878 = vadd.f32 %v876, %v95
    %v879 = vadd.f32 %v877, %v95
    %v880 = vsel %vm550, %v878, -inf
    %881 = vmax.xlane.f32.xlu0 %v880
    %v882 = vpop.xlane.xlu0 %881
    %v883 = vsel %vm550, %v879, -inf
    %884 = vmax.xlane.f32.xlu0 %v883
    %v885 = vpop.xlane.xlu0 %884
    %v886 = vsub.f32 %v878, %v882
    %v887 = vsub.f32 %v879, %v885
    %v888 = vmul.f32 %v886, 1.442695
    %v889 = vpow.pop %v888
    %v890 = vmul.f32 %v887, 1.442695
    %v891 = vpow.pop %v890
    %v892 = vsel %vm550, %v889, 0.0
    %893 = vadd.xlane.f32.xlu0 %v892
    %v894 = vpop.xlane.xlu0 %893
    %v895 = vsel %vm550, %v891, 0.0
    %896 = vadd.xlane.f32.xlu0 %v895
    %v897 = vpop.xlane.xlu0 %896
    %v898 = vrcp.pop %v894
    %v899 = vrcp.pop %v897
    %v900 = vmul.f32 %v889, %v898
    %v901 = vmul.f32 %v891, %v899
    %902 = vrot.lane.b32.xlu0 %v477, 96
    %v903 = vpop.permute.xlu0 %902
    %v906 = vsel %vm550, %v900, 0
    %908 = vmatpush.msra.mxu0 0.0
    %909 = vmatpush.msra.mxu0 0.0
    %910 = vmatpush.msra.mxu0 0.0
    %911 = vmatpush.msra.mxu0 0.0
    %912 = vmatpush.msra.mxu0 0.0
    %913 = vmatpush.msra.mxu0 0.0
    %914 = vmatpush.msra.mxu0 0.0
    %915 = vmatpush.msra.mxu0 0.0
    %916 = vmatpush.msra.mxu0 0.0
    %917 = vmatpush.msra.mxu0 0.0
    %918 = vmatpush.msra.mxu0 0.0
    %919 = vmatpush.msra.mxu0 0.0
    %920 = vmatpush.msra.mxu0 0.0
    %921 = vmatpush.msra.mxu0 0.0
    %922 = vmatpush.msra.mxu0 0.0
    %923 = vmatpush.msra.mxu0 %v903
    %924 = vmatmul.f32.gmra.mxu0 %v906
    %v925 = vpop.f32.mrf.mxu0
    %v926 = vadd.f32 0.0, %v925
    %927 = vdwg.mxu0
    %928 = vrot.lane.b32.xlu0 %v480, 96
    %v929 = vpop.permute.xlu0 %928
    %v932 = vsel %vm550, %v901, 0
    %934 = vmatpush.msra.mxu0 0.0
    %935 = vmatpush.msra.mxu0 0.0
    %936 = vmatpush.msra.mxu0 0.0
    %937 = vmatpush.msra.mxu0 0.0
    %938 = vmatpush.msra.mxu0 0.0
    %939 = vmatpush.msra.mxu0 0.0
    %940 = vmatpush.msra.mxu0 0.0
    %941 = vmatpush.msra.mxu0 0.0
    %942 = vmatpush.msra.mxu0 0.0
    %943 = vmatpush.msra.mxu0 0.0
    %944 = vmatpush.msra.mxu0 0.0
    %945 = vmatpush.msra.mxu0 0.0
    %946 = vmatpush.msra.mxu0 0.0
    %947 = vmatpush.msra.mxu0 0.0
    %948 = vmatpush.msra.mxu0 0.0
    %949 = vmatpush.msra.mxu0 %v929
    %950 = vmatmul.f32.gmra.mxu0 %v932
    %v951 = vpop.f32.mrf.mxu0
    %v952 = vadd.f32 0.0, %v951
    %953 = vdwg.mxu0
    %v955 = vsel %vm494, %v926, 0
    %v958 = vsel %vm494, %v952, 0
    %960 = vmatpush.msra.mxu0 0.0
    %961 = vmatpush.msra.mxu0 0.0
    %962 = vmatpush.msra.mxu0 0.0
    %963 = vmatpush.msra.mxu0 0.0
    %964 = vmatpush.msra.mxu0 0.0
    %965 = vmatpush.msra.mxu0 0.0
    %966 = vmatpush.msra.mxu0 0.0
    %967 = vmatpush.msra.mxu0 0.0
    %968 = vmatpush.msra.mxu0 0.0
    %969 = vmatpush.msra.mxu0 0.0
    %970 = vmatpush.msra.mxu0 0.0
    %971 = vmatpush.msra.mxu0 0.0
    %972 = vmatpush.msra.mxu0 0.0
    %973 = vmatpush.msra.mxu0 0.0
    %974 = vmatpush.msra.mxu0 %v487
    %975 = vmatpush.msra.mxu0 %v486
    %976 = vmatmul.f32.gmra.mxu0 %v955
    %v977 = vpop.f32.mrf.mxu0
    %v978 = vadd.f32 0.0, %v977
    %979 = vmatmul.f32.gmra.mxu0 %v958
    %v980 = vpop.f32.mrf.mxu0
    %v981 = vadd.f32 0.0, %v980
    %982 = vdwg.mxu0
    %v983 = vadd.f32 %v818, %v978
    %v984 = vadd.f32 %v819, %v981
    %985 = vrot.lane.b32.xlu0 %v454, 80
    %v986 = vpop.permute.xlu0 %985
    %987 = vrot.lane.b32.xlu0 %v454, 16
    %v988 = vpop.permute.xlu0 %987
    %v989 = vsel %vm494, %v986, 0
    %v991 = vsel %vm494, %v988, 0
    %993 = vmatpush.xpose.msra.mxu0 0.0
    %994 = vmatpush.xpose.msra.mxu0 0.0
    %995 = vmatpush.xpose.msra.mxu0 0.0
    %996 = vmatpush.xpose.msra.mxu0 0.0
    %997 = vmatpush.xpose.msra.mxu0 0.0
    %998 = vmatpush.xpose.msra.mxu0 0.0
    %999 = vmatpush.xpose.msra.mxu0 0.0
    %1000 = vmatpush.xpose.msra.mxu0 0.0
    %1001 = vmatpush.xpose.msra.mxu0 0.0
    %1002 = vmatpush.xpose.msra.mxu0 0.0
    %1003 = vmatpush.xpose.msra.mxu0 0.0
    %1004 = vmatpush.xpose.msra.mxu0 0.0
    %1005 = vmatpush.xpose.msra.mxu0 0.0
    %1006 = vmatpush.xpose.msra.mxu0 0.0
    %1007 = vmatpush.xpose.msra.mxu0 0.0
    %1008 = vmatpush.xpose.msra.mxu0 %v991
    %1009 = vmatmul.f32.gmra.mxu0 %v989
    %v1010 = vpop.f32.mrf.mxu0
    %v1011 = vadd.f32 0.0, %v1010
    %1012 = vdwg.mxu0
    %1013 = vrot.lane.b32.xlu0 %v457, 80
    %v1014 = vpop.permute.xlu0 %1013
    %1015 = vrot.lane.b32.xlu0 %v457, 16
    %v1016 = vpop.permute.xlu0 %1015
    %v1017 = vsel %vm494, %v1014, 0
    %v1019 = vsel %vm494, %v1016, 0
    %1021 = vmatpush.xpose.msra.mxu0 0.0
    %1022 = vmatpush.xpose.msra.mxu0 0.0
    %1023 = vmatpush.xpose.msra.mxu0 0.0
    %1024 = vmatpush.xpose.msra.mxu0 0.0
    %1025 = vmatpush.xpose.msra.mxu0 0.0
    %1026 = vmatpush.xpose.msra.mxu0 0.0
    %1027 = vmatpush.xpose.msra.mxu0 0.0
    %1028 = vmatpush.xpose.msra.mxu0 0.0
    %1029 = vmatpush.xpose.msra.mxu0 0.0
    %1030 = vmatpush.xpose.msra.mxu0 0.0
    %1031 = vmatpush.xpose.msra.mxu0 0.0
    %1032 = vmatpush.xpose.msra.mxu0 0.0
    %1033 = vmatpush.xpose.msra.mxu0 0.0
    %1034 = vmatpush.xpose.msra.mxu0 0.0
    %1035 = vmatpush.xpose.msra.mxu0 0.0
    %1036 = vmatpush.xpose.msra.mxu0 %v1019
    %1037 = vmatmul.f32.gmra.mxu0 %v1017
    %v1038 = vpop.f32.mrf.mxu0
    %v1039 = vadd.f32 0.0, %v1038
    %1040 = vdwg.mxu0
    %v1041 = vmul.f32 %v1011, 0.25
    %v1042 = vmul.f32 %v1039, 0.25
    %v1043 = vadd.f32 %v1041, %v95
    %v1044 = vadd.f32 %v1042, %v95
    %v1045 = vsel %vm550, %v1043, -inf
    %1046 = vmax.xlane.f32.xlu0 %v1045
    %v1047 = vpop.xlane.xlu0 %1046
    %v1048 = vsel %vm550, %v1044, -inf
    %1049 = vmax.xlane.f32.xlu0 %v1048
    %v1050 = vpop.xlane.xlu0 %1049
    %v1051 = vsub.f32 %v1043, %v1047
    %v1052 = vsub.f32 %v1044, %v1050
    %v1053 = vmul.f32 %v1051, 1.442695
    %v1054 = vpow.pop %v1053
    %v1055 = vmul.f32 %v1052, 1.442695
    %v1056 = vpow.pop %v1055
    %v1057 = vsel %vm550, %v1054, 0.0
    %1058 = vadd.xlane.f32.xlu0 %v1057
    %v1059 = vpop.xlane.xlu0 %1058
    %v1060 = vsel %vm550, %v1056, 0.0
    %1061 = vadd.xlane.f32.xlu0 %v1060
    %v1062 = vpop.xlane.xlu0 %1061
    %v1063 = vrcp.pop %v1059
    %v1064 = vrcp.pop %v1062
    %v1065 = vmul.f32 %v1054, %v1063
    %v1066 = vmul.f32 %v1056, %v1064
    %1067 = vrot.lane.b32.xlu0 %v477, 80
    %v1068 = vpop.permute.xlu0 %1067
    %v1071 = vsel %vm550, %v1065, 0
    %1073 = vmatpush.msra.mxu0 0.0
    %1074 = vmatpush.msra.mxu0 0.0
    %1075 = vmatpush.msra.mxu0 0.0
    %1076 = vmatpush.msra.mxu0 0.0
    %1077 = vmatpush.msra.mxu0 0.0
    %1078 = vmatpush.msra.mxu0 0.0
    %1079 = vmatpush.msra.mxu0 0.0
    %1080 = vmatpush.msra.mxu0 0.0
    %1081 = vmatpush.msra.mxu0 0.0
    %1082 = vmatpush.msra.mxu0 0.0
    %1083 = vmatpush.msra.mxu0 0.0
    %1084 = vmatpush.msra.mxu0 0.0
    %1085 = vmatpush.msra.mxu0 0.0
    %1086 = vmatpush.msra.mxu0 0.0
    %1087 = vmatpush.msra.mxu0 0.0
    %1088 = vmatpush.msra.mxu0 %v1068
    %1089 = vmatmul.f32.gmra.mxu0 %v1071
    %v1090 = vpop.f32.mrf.mxu0
    %v1091 = vadd.f32 0.0, %v1090
    %1092 = vdwg.mxu0
    %1093 = vrot.lane.b32.xlu0 %v480, 80
    %v1094 = vpop.permute.xlu0 %1093
    %v1097 = vsel %vm550, %v1066, 0
    %1099 = vmatpush.msra.mxu0 0.0
    %1100 = vmatpush.msra.mxu0 0.0
    %1101 = vmatpush.msra.mxu0 0.0
    %1102 = vmatpush.msra.mxu0 0.0
    %1103 = vmatpush.msra.mxu0 0.0
    %1104 = vmatpush.msra.mxu0 0.0
    %1105 = vmatpush.msra.mxu0 0.0
    %1106 = vmatpush.msra.mxu0 0.0
    %1107 = vmatpush.msra.mxu0 0.0
    %1108 = vmatpush.msra.mxu0 0.0
    %1109 = vmatpush.msra.mxu0 0.0
    %1110 = vmatpush.msra.mxu0 0.0
    %1111 = vmatpush.msra.mxu0 0.0
    %1112 = vmatpush.msra.mxu0 0.0
    %1113 = vmatpush.msra.mxu0 0.0
    %1114 = vmatpush.msra.mxu0 %v1094
    %1115 = vmatmul.f32.gmra.mxu0 %v1097
    %v1116 = vpop.f32.mrf.mxu0
    %v1117 = vadd.f32 0.0, %v1116
    %1118 = vdwg.mxu0
    %v1120 = vsel %vm494, %v1091, 0
    %v1123 = vsel %vm494, %v1117, 0
    %1125 = vmatpush.msra.mxu0 0.0
    %1126 = vmatpush.msra.mxu0 0.0
    %1127 = vmatpush.msra.mxu0 0.0
    %1128 = vmatpush.msra.mxu0 0.0
    %1129 = vmatpush.msra.mxu0 0.0
    %1130 = vmatpush.msra.mxu0 0.0
    %1131 = vmatpush.msra.mxu0 0.0
    %1132 = vmatpush.msra.mxu0 0.0
    %1133 = vmatpush.msra.mxu0 0.0
    %1134 = vmatpush.msra.mxu0 0.0
    %1135 = vmatpush.msra.mxu0 0.0
    %1136 = vmatpush.msra.mxu0 0.0
    %1137 = vmatpush.msra.mxu0 0.0
    %1138 = vmatpush.msra.mxu0 0.0
    %1139 = vmatpush.msra.mxu0 %v489
    %1140 = vmatpush.msra.mxu0 %v488
    %1141 = vmatmul.f32.gmra.mxu0 %v1120
    %v1142 = vpop.f32.mrf.mxu0
    %v1143 = vadd.f32 0.0, %v1142
    %1144 = vmatmul.f32.gmra.mxu0 %v1123
    %v1145 = vpop.f32.mrf.mxu0
    %v1146 = vadd.f32 0.0, %v1145
    %1147 = vdwg.mxu0
    %v1148 = vadd.f32 %v983, %v1143
    %v1149 = vadd.f32 %v984, %v1146
    %v1150 = vadd.f32 %v339, %v1148
    %v1151 = vadd.f32 %v342, %v1149
    %v1152 = vld [vmem:[%s10] sm:$0x1]
    %v1153 = vld [vmem:[%s11] sm:$0x1]
    %v1154 = vsel %vm346, %v1150, 0.0
    %1155 = vadd.xlane.f32.xlu0 %v1154
    %v1156 = vpop.xlane.xlu0 %1155
    %v1157 = vsel %vm346, %v1151, 0.0
    %1158 = vadd.xlane.f32.xlu0 %v1157
    %v1159 = vpop.xlane.xlu0 %1158
    %v1160 = vmul.f32 %v1156, %v359
    %v1161 = vmul.f32 %v1159, %v359
    %v1162 = vsub.f32 %v1150, %v1160
    %v1163 = vsub.f32 %v1151, %v1161
    %v1164 = vmul.f32 %v1162, %v1162
    %v1165 = vmul.f32 %v1163, %v1163
    %v1166 = vsel %vm346, %v1164, 0.0
    %1167 = vadd.xlane.f32.xlu0 %v1166
    %v1168 = vpop.xlane.xlu0 %1167
    %v1169 = vsel %vm346, %v1165, 0.0
    %1170 = vadd.xlane.f32.xlu0 %v1169
    %v1171 = vpop.xlane.xlu0 %1170
    %v1172 = vmul.f32 %v1168, %v359
    %v1173 = vmul.f32 %v1171, %v359
    %v1174 = vadd.f32 %v1172, 1e-06
    %v1175 = vadd.f32 %v1173, 1e-06
    %v1176 = vrsqrt.pop %v1174
    %v1177 = vmul.f32 %v1176, %v1174
    %v1178 = vmul.f32 %v1177, %v1176
    %v1179 = vmul.f32 0.5, %v1178
    %v1180 = vsub.f32 1.5, %v1179
    %v1181 = vmul.f32 %v1176, %v1180
    %vm1182 = vweird.f32 %v1174
    %vm1183 = vweird.f32 %v1176
    %vm1184 = vmor %vm1182, %vm1183
    %v1185 = vsel %vm1184, %v1176, %v1181
    %v1186 = vrsqrt.pop %v1175
    %v1187 = vmul.f32 %v1186, %v1175
    %v1188 = vmul.f32 %v1187, %v1186
    %v1189 = vmul.f32 0.5, %v1188
    %v1190 = vsub.f32 1.5, %v1189
    %v1191 = vmul.f32 %v1186, %v1190
    %vm1192 = vweird.f32 %v1175
    %vm1193 = vweird.f32 %v1186
    %vm1194 = vmor %vm1192, %vm1193
    %v1195 = vsel %vm1194, %v1186, %v1191
    %v1196 = vmul.f32 %v1162, %v1185
    %v1197 = vmul.f32 %v1163, %v1195
    %v1199 = vperm.slane %v1152, 0
    %v1201 = vmul.f32 %v1196, %v1199
    %v1202 = vmul.f32 %v1197, %v1199
    %v1204 = vperm.slane %v1153, 0
    %v1206 = vadd.f32 %v1201, %v1204
    %v1207 = vadd.f32 %v1202, %v1204
    %v1208 = vld [vmem:[%s12] sm:$0xff]
    %v1209 = vld [vmem:[%s12 + $0x8] sm:$0xff]
    %v1210 = vld [vmem:[%s12 + $0x10] sm:$0xff]
    %v1211 = vld [vmem:[%s12 + $0x18] sm:$0xff]
    %v1212 = vld [vmem:[%s12 + $0x20] sm:$0xff]
    %v1213 = vld [vmem:[%s12 + $0x28] sm:$0xff]
    %v1214 = vld [vmem:[%s12 + $0x30] sm:$0xff]
    %v1215 = vld [vmem:[%s12 + $0x38] sm:$0xff]
    %v1216 = vld [vmem:[%s13] sm:$0x1]
    %v1218 = vperm.slane %v1216, 0
    %v1221 = vsel %vm346, %v1206, 0
    %v1224 = vsel %vm346, %v1207, 0
    %1226 = vmatpush.msra.mxu0 0.0
    %1227 = vmatpush.msra.mxu0 0.0
    %1228 = vmatpush.msra.mxu0 0.0
    %1229 = vmatpush.msra.mxu0 0.0
    %1230 = vmatpush.msra.mxu0 0.0
    %1231 = vmatpush.msra.mxu0 0.0
    %1232 = vmatpush.msra.mxu0 0.0
    %1233 = vmatpush.msra.mxu0 0.0
    %1234 = vmatpush.msra.mxu0 %v1215
    %1235 = vmatpush.msra.mxu0 %v1214
    %1236 = vmatpush.msra.mxu0 %v1213
    %1237 = vmatpush.msra.mxu0 %v1212
    %1238 = vmatpush.msra.mxu0 %v1211
    %1239 = vmatpush.msra.mxu0 %v1210
    %1240 = vmatpush.msra.mxu0 %v1209
    %1241 = vmatpush.msra.mxu0 %v1208
    %1242 = vmatmul.f32.gmra.mxu0 %v1221
    %v1243 = vpop.f32.mrf.mxu0
    %v1244 = vadd.f32 %v1218, %v1243
    %1245 = vmatmul.f32.gmra.mxu0 %v1224
    %v1246 = vpop.f32.mrf.mxu0
    %v1247 = vadd.f32 %v1218, %v1246
    %1248 = vdwg.mxu0
    %v1249 = vmul.f32 %v1244, 0.5
    %v1250 = vmul.f32 %v1247, 0.5
    %v1251 = vmul.f32 %v1244, 0.70710677
    %v1252 = vmul.f32 %v1247, 0.70710677
    %vm1253 = vcmp.ge.f32.partialorder %v1251, 0.0
    %vm1254 = vcmp.ge.f32.partialorder %v1252, 0.0
    %v1255 = vsel %vm1253, 1.0, -1.0
    %v1256 = vsel %vm1254, 1.0, -1.0
    %v1257 = vand.u32 2147483647, %v1251
    %v1258 = vand.u32 2147483647, %v1252
    %v1259 = vmul.f32 %v1257, 0.3275911
    %v1260 = vmul.f32 %v1258, 0.3275911
    %v1261 = vadd.f32 %v1259, 1.0
    %v1262 = vadd.f32 %v1260, 1.0
    %v1263 = vrcp.pop %v1261
    %v1264 = vmul.f32 %v1261, %v1263
    %v1265 = vsub.f32 1.0, %v1264
    %v1266 = vmul.f32 %v1263, %v1265
    %v1267 = vadd.f32 %v1263, %v1266
    %vm1268 = vweird.f32 %v1261
    %vm1269 = vweird.f32 %v1263
    %vm1270 = vmor %vm1268, %vm1269
    %v1271 = vsel %vm1270, %v1263, %v1267
    %v1272 = vand.u32 2147483647, %v1261
    %vm1273 = vcmp.eq.f32.partialorder %v1272, 8.507059e+37
    %v1274 = vand.u32 %v1261, 2147483648
    %v1275 = vor.u32 1.1754944e-38, %v1274
    %v1276 = vsel %vm1273, %v1275, %v1271
    %v1277 = vmul.f32 1.0, %v1276
    %v1278 = vrcp.pop %v1262
    %v1279 = vmul.f32 %v1262, %v1278
    %v1280 = vsub.f32 1.0, %v1279
    %v1281 = vmul.f32 %v1278, %v1280
    %v1282 = vadd.f32 %v1278, %v1281
    %vm1283 = vweird.f32 %v1262
    %vm1284 = vweird.f32 %v1278
    %vm1285 = vmor %vm1283, %vm1284
    %v1286 = vsel %vm1285, %v1278, %v1282
    %v1287 = vand.u32 2147483647, %v1262
    %vm1288 = vcmp.eq.f32.partialorder %v1287, 8.507059e+37
    %v1289 = vand.u32 %v1262, 2147483648
    %v1290 = vor.u32 1.1754944e-38, %v1289
    %v1291 = vsel %vm1288, %v1290, %v1286
    %v1292 = vmul.f32 1.0, %v1291
    %v1293 = vmul.f32 %v1277, 1.0614054
    %v1294 = vmul.f32 %v1292, 1.0614054
    %v1295 = vadd.f32 %v1293, -1.4531521
    %v1296 = vadd.f32 %v1294, -1.4531521
    %v1297 = vmul.f32 %v1295, %v1277
    %v1298 = vmul.f32 %v1296, %v1292
    %v1299 = vadd.f32 %v1297, 1.4214138
    %v1300 = vadd.f32 %v1298, 1.4214138
    %v1301 = vmul.f32 %v1299, %v1277
    %v1302 = vmul.f32 %v1300, %v1292
    %v1303 = vadd.f32 %v1301, -0.28449672
    %v1304 = vadd.f32 %v1302, -0.28449672
    %v1305 = vmul.f32 %v1303, %v1277
    %v1306 = vmul.f32 %v1304, %v1292
    %v1307 = vadd.f32 %v1305, 0.2548296
    %v1308 = vadd.f32 %v1306, 0.2548296
    %v1309 = vmul.f32 %v1307, %v1277
    %v1310 = vmul.f32 %v1308, %v1292
    %v1311 = vsub.f32 0.0, %v1257
    %v1312 = vsub.f32 0.0, %v1258
    %v1313 = vmul.f32 %v1311, %v1257
    %v1314 = vmul.f32 %v1312, %v1258
    %v1315 = vmul.f32 %v1313, 1.442695
    %v1316 = vpow.pop %v1315
    %v1317 = vmul.f32 %v1314, 1.442695
    %v1318 = vpow.pop %v1317
    %v1319 = vmul.f32 %v1309, %v1316
    %v1320 = vmul.f32 %v1310, %v1318
    %v1321 = vsub.f32 1.0, %v1319
    %v1322 = vsub.f32 1.0, %v1320
    %v1323 = vmul.f32 %v1255, %v1321
    %v1324 = vmul.f32 %v1256, %v1322
    %v1325 = vadd.f32 %v1323, 1.0
    %v1326 = vadd.f32 %v1324, 1.0
    %v1327 = vmul.f32 %v1249, %v1325
    %v1328 = vmul.f32 %v1250, %v1326
    %v1329 = vld [vmem:[%s14] sm:$0xff]
    %v1330 = vld [vmem:[%s14 + $0x8] sm:$0xff]
    %v1331 = vld [vmem:[%s14 + $0x10] sm:$0xff]
    %v1332 = vld [vmem:[%s14 + $0x18] sm:$0xff]
    %v1333 = vld [vmem:[%s14 + $0x20] sm:$0xff]
    %v1334 = vld [vmem:[%s14 + $0x28] sm:$0xff]
    %v1335 = vld [vmem:[%s14 + $0x30] sm:$0xff]
    %v1336 = vld [vmem:[%s14 + $0x38] sm:$0xff]
    %v1337 = vld [vmem:[%s14 + $0x40] sm:$0xff]
    %v1338 = vld [vmem:[%s14 + $0x48] sm:$0xff]
    %v1339 = vld [vmem:[%s14 + $0x50] sm:$0xff]
    %v1340 = vld [vmem:[%s14 + $0x58] sm:$0xff]
    %v1341 = vld [vmem:[%s14 + $0x60] sm:$0xff]
    %v1342 = vld [vmem:[%s14 + $0x68] sm:$0xff]
    %v1343 = vld [vmem:[%s14 + $0x70] sm:$0xff]
    %v1344 = vld [vmem:[%s14 + $0x78] sm:$0xff]
    %v1345 = vld [vmem:[%s15] sm:$0x1]
    %v1347 = vperm.slane %v1345, 0
    %1349 = vmatpush.msra.mxu0 %v1344
    %1350 = vmatpush.msra.mxu0 %v1343
    %1351 = vmatpush.msra.mxu0 %v1342
    %1352 = vmatpush.msra.mxu0 %v1341
    %1353 = vmatpush.msra.mxu0 %v1340
    %1354 = vmatpush.msra.mxu0 %v1339
    %1355 = vmatpush.msra.mxu0 %v1338
    %1356 = vmatpush.msra.mxu0 %v1337
    %1357 = vmatpush.msra.mxu0 %v1336
    %1358 = vmatpush.msra.mxu0 %v1335
    %1359 = vmatpush.msra.mxu0 %v1334
    %1360 = vmatpush.msra.mxu0 %v1333
    %1361 = vmatpush.msra.mxu0 %v1332
    %1362 = vmatpush.msra.mxu0 %v1331
    %1363 = vmatpush.msra.mxu0 %v1330
    %1364 = vmatpush.msra.mxu0 %v1329
    %1365 = vmatmul.f32.gmra.mxu0 %v1327
    %v1366 = vpop.f32.mrf.mxu0
    %v1367 = vadd.f32 %v1347, %v1366
    %1368 = vmatmul.f32.gmra.mxu0 %v1328
    %v1369 = vpop.f32.mrf.mxu0
    %v1370 = vadd.f32 %v1347, %v1369
    %1371 = vdwg.mxu0
    %v1372 = vadd.f32 %v1150, %v1367
    %v1373 = vadd.f32 %v1151, %v1370
    %s1374 = scalar_lea.vmem %s4, 1
    %v1375 = vld [vmem:[%s1374] sm:$0x1]
    %s1376 = scalar_lea.vmem %s5, 1
    %v1377 = vld [vmem:[%s1376] sm:$0x1]
    %v1378 = vsel %vm346, %v1372, 0.0
    %1379 = vadd.xlane.f32.xlu0 %v1378
    %v1380 = vpop.xlane.xlu0 %1379
    %v1381 = vsel %vm346, %v1373, 0.0
    %1382 = vadd.xlane.f32.xlu0 %v1381
    %v1383 = vpop.xlane.xlu0 %1382
    %v1384 = vmul.f32 %v1380, %v359
    %v1385 = vmul.f32 %v1383, %v359
    %v1386 = vsub.f32 %v1372, %v1384
    %v1387 = vsub.f32 %v1373, %v1385
    %v1388 = vmul.f32 %v1386, %v1386
    %v1389 = vmul.f32 %v1387, %v1387
    %v1390 = vsel %vm346, %v1388, 0.0
    %1391 = vadd.xlane.f32.xlu0 %v1390
    %v1392 = vpop.xlane.xlu0 %1391
    %v1393 = vsel %vm346, %v1389, 0.0
    %1394 = vadd.xlane.f32.xlu0 %v1393
    %v1395 = vpop.xlane.xlu0 %1394
    %v1396 = vmul.f32 %v1392, %v359
    %v1397 = vmul.f32 %v1395, %v359
    %v1398 = vadd.f32 %v1396, 1e-06
    %v1399 = vadd.f32 %v1397, 1e-06
    %v1400 = vrsqrt.pop %v1398
    %v1401 = vmul.f32 %v1400, %v1398
    %v1402 = vmul.f32 %v1401, %v1400
    %v1403 = vmul.f32 0.5, %v1402
    %v1404 = vsub.f32 1.5, %v1403
    %v1405 = vmul.f32 %v1400, %v1404
    %vm1406 = vweird.f32 %v1398
    %vm1407 = vweird.f32 %v1400
    %vm1408 = vmor %vm1406, %vm1407
    %v1409 = vsel %vm1408, %v1400, %v1405
    %v1410 = vrsqrt.pop %v1399
    %v1411 = vmul.f32 %v1410, %v1399
    %v1412 = vmul.f32 %v1411, %v1410
    %v1413 = vmul.f32 0.5, %v1412
    %v1414 = vsub.f32 1.5, %v1413
    %v1415 = vmul.f32 %v1410, %v1414
    %vm1416 = vweird.f32 %v1399
    %vm1417 = vweird.f32 %v1410
    %vm1418 = vmor %vm1416, %vm1417
    %v1419 = vsel %vm1418, %v1410, %v1415
    %v1420 = vmul.f32 %v1386, %v1409
    %v1421 = vmul.f32 %v1387, %v1419
    %v1423 = vperm.slane %v1375, 0
    %v1425 = vmul.f32 %v1420, %v1423
    %v1426 = vmul.f32 %v1421, %v1423
    %v1428 = vperm.slane %v1377, 0
    %v1430 = vadd.f32 %v1425, %v1428
    %v1431 = vadd.f32 %v1426, %v1428
    %s1432 = scalar_lea.vmem %s6, 128
    %v1433 = vld [vmem:[%s1432] sm:$0xff]
    %v1434 = vld [vmem:[%s1432 + $0x8] sm:$0xff]
    %v1435 = vld [vmem:[%s1432 + $0x10] sm:$0xff]
    %v1436 = vld [vmem:[%s1432 + $0x18] sm:$0xff]
    %v1437 = vld [vmem:[%s1432 + $0x20] sm:$0xff]
    %v1438 = vld [vmem:[%s1432 + $0x28] sm:$0xff]
    %v1439 = vld [vmem:[%s1432 + $0x30] sm:$0xff]
    %v1440 = vld [vmem:[%s1432 + $0x38] sm:$0xff]
    %v1441 = vld [vmem:[%s1432 + $0x40] sm:$0xff]
    %v1442 = vld [vmem:[%s1432 + $0x48] sm:$0xff]
    %v1443 = vld [vmem:[%s1432 + $0x50] sm:$0xff]
    %v1444 = vld [vmem:[%s1432 + $0x58] sm:$0xff]
    %v1445 = vld [vmem:[%s1432 + $0x60] sm:$0xff]
    %v1446 = vld [vmem:[%s1432 + $0x68] sm:$0xff]
    %v1447 = vld [vmem:[%s1432 + $0x70] sm:$0xff]
    %v1448 = vld [vmem:[%s1432 + $0x78] sm:$0xff]
    %s1449 = scalar_lea.vmem %s7, 2
    %v1450 = vld [vmem:[%s1449] sm:$0x3]
    %v1452 = vperm.slane %v1450, 0
    %v1453 = vperm.slane %v1450, 1
    %v1457 = vsel %vm346, %v1430, 0
    %v1460 = vsel %vm346, %v1431, 0
    %1462 = vmatpush.msra.mxu0 0.0
    %1463 = vmatpush.msra.mxu0 0.0
    %1464 = vmatpush.msra.mxu0 0.0
    %1465 = vmatpush.msra.mxu0 0.0
    %1466 = vmatpush.msra.mxu0 0.0
    %1467 = vmatpush.msra.mxu0 0.0
    %1468 = vmatpush.msra.mxu0 0.0
    %1469 = vmatpush.msra.mxu0 0.0
    %1470 = vmatpush.msra.mxu0 %v1447
    %1471 = vmatpush.msra.mxu0 %v1445
    %1472 = vmatpush.msra.mxu0 %v1443
    %1473 = vmatpush.msra.mxu0 %v1441
    %1474 = vmatpush.msra.mxu0 %v1439
    %1475 = vmatpush.msra.mxu0 %v1437
    %1476 = vmatpush.msra.mxu0 %v1435
    %1477 = vmatpush.msra.mxu0 %v1433
    %1478 = vmatmul.f32.gmra.mxu0 %v1457
    %v1479 = vpop.f32.mrf.mxu0
    %v1480 = vadd.f32 %v1452, %v1479
    %1481 = vmatmul.f32.gmra.mxu0 %v1460
    %v1482 = vpop.f32.mrf.mxu0
    %v1483 = vadd.f32 %v1452, %v1482
    %1484 = vdwg.mxu0
    %1485 = vmatpush.msra.mxu0 0.0
    %1486 = vmatpush.msra.mxu0 0.0
    %1487 = vmatpush.msra.mxu0 0.0
    %1488 = vmatpush.msra.mxu0 0.0
    %1489 = vmatpush.msra.mxu0 0.0
    %1490 = vmatpush.msra.mxu0 0.0
    %1491 = vmatpush.msra.mxu0 0.0
    %1492 = vmatpush.msra.mxu0 0.0
    %1493 = vmatpush.msra.mxu0 %v1448
    %1494 = vmatpush.msra.mxu0 %v1446
    %1495 = vmatpush.msra.mxu0 %v1444
    %1496 = vmatpush.msra.mxu0 %v1442
    %1497 = vmatpush.msra.mxu0 %v1440
    %1498 = vmatpush.msra.mxu0 %v1438
    %1499 = vmatpush.msra.mxu0 %v1436
    %1500 = vmatpush.msra.mxu0 %v1434
    %1501 = vmatmul.f32.gmra.mxu0 %v1457
    %v1502 = vpop.f32.mrf.mxu0
    %v1503 = vadd.f32 %v1453, %v1502
    %1504 = vmatmul.f32.gmra.mxu0 %v1460
    %v1505 = vpop.f32.mrf.mxu0
    %v1506 = vadd.f32 %v1453, %v1505
    %1507 = vdwg.mxu0
    %s1508 = scalar_lea.vmem %s8, 64
    %v1509 = vld [vmem:[%s1508] sm:$0xff]
    %v1510 = vld [vmem:[%s1508 + $0x8] sm:$0xff]
    %v1511 = vld [vmem:[%s1508 + $0x10] sm:$0xff]
    %v1512 = vld [vmem:[%s1508 + $0x18] sm:$0xff]
    %v1513 = vld [vmem:[%s1508 + $0x20] sm:$0xff]
    %v1514 = vld [vmem:[%s1508 + $0x28] sm:$0xff]
    %v1515 = vld [vmem:[%s1508 + $0x30] sm:$0xff]
    %v1516 = vld [vmem:[%s1508 + $0x38] sm:$0xff]
    %s1517 = scalar_lea.vmem %s9, 1
    %v1518 = vld [vmem:[%s1517] sm:$0x1]
    %1520 = vrot.lane.b32.xlu0 %v1480, 64
    %v1521 = vpop.permute.xlu0 %1520
    %v1522 = vsel %vm494, %v1480, 0
    %v1524 = vsel %vm494, %v1521, 0
    %1526 = vmatpush.xpose.msra.mxu0 0.0
    %1527 = vmatpush.xpose.msra.mxu0 0.0
    %1528 = vmatpush.xpose.msra.mxu0 0.0
    %1529 = vmatpush.xpose.msra.mxu0 0.0
    %1530 = vmatpush.xpose.msra.mxu0 0.0
    %1531 = vmatpush.xpose.msra.mxu0 0.0
    %1532 = vmatpush.xpose.msra.mxu0 0.0
    %1533 = vmatpush.xpose.msra.mxu0 0.0
    %1534 = vmatpush.xpose.msra.mxu0 0.0
    %1535 = vmatpush.xpose.msra.mxu0 0.0
    %1536 = vmatpush.xpose.msra.mxu0 0.0
    %1537 = vmatpush.xpose.msra.mxu0 0.0
    %1538 = vmatpush.xpose.msra.mxu0 0.0
    %1539 = vmatpush.xpose.msra.mxu0 0.0
    %1540 = vmatpush.xpose.msra.mxu0 0.0
    %1541 = vmatpush.xpose.msra.mxu0 %v1524
    %1542 = vmatmul.f32.gmra.mxu0 %v1522
    %v1543 = vpop.f32.mrf.mxu0
    %v1544 = vadd.f32 0.0, %v1543
    %1545 = vdwg.mxu0
    %1547 = vrot.lane.b32.xlu0 %v1483, 64
    %v1548 = vpop.permute.xlu0 %1547
    %v1549 = vsel %vm494, %v1483, 0
    %v1551 = vsel %vm494, %v1548, 0
    %1553 = vmatpush.xpose.msra.mxu0 0.0
    %1554 = vmatpush.xpose.msra.mxu0 0.0
    %1555 = vmatpush.xpose.msra.mxu0 0.0
    %1556 = vmatpush.xpose.msra.mxu0 0.0
    %1557 = vmatpush.xpose.msra.mxu0 0.0
    %1558 = vmatpush.xpose.msra.mxu0 0.0
    %1559 = vmatpush.xpose.msra.mxu0 0.0
    %1560 = vmatpush.xpose.msra.mxu0 0.0
    %1561 = vmatpush.xpose.msra.mxu0 0.0
    %1562 = vmatpush.xpose.msra.mxu0 0.0
    %1563 = vmatpush.xpose.msra.mxu0 0.0
    %1564 = vmatpush.xpose.msra.mxu0 0.0
    %1565 = vmatpush.xpose.msra.mxu0 0.0
    %1566 = vmatpush.xpose.msra.mxu0 0.0
    %1567 = vmatpush.xpose.msra.mxu0 0.0
    %1568 = vmatpush.xpose.msra.mxu0 %v1551
    %1569 = vmatmul.f32.gmra.mxu0 %v1549
    %v1570 = vpop.f32.mrf.mxu0
    %v1571 = vadd.f32 0.0, %v1570
    %1572 = vdwg.mxu0
    %v1573 = vmul.f32 %v1544, 0.25
    %v1574 = vmul.f32 %v1571, 0.25
    %v1575 = vadd.f32 %v1573, %v95
    %v1576 = vadd.f32 %v1574, %v95
    %v1577 = vsel %vm550, %v1575, -inf
    %1578 = vmax.xlane.f32.xlu0 %v1577
    %v1579 = vpop.xlane.xlu0 %1578
    %v1580 = vsel %vm550, %v1576, -inf
    %1581 = vmax.xlane.f32.xlu0 %v1580
    %v1582 = vpop.xlane.xlu0 %1581
    %v1583 = vsub.f32 %v1575, %v1579
    %v1584 = vsub.f32 %v1576, %v1582
    %v1585 = vmul.f32 %v1583, 1.442695
    %v1586 = vpow.pop %v1585
    %v1587 = vmul.f32 %v1584, 1.442695
    %v1588 = vpow.pop %v1587
    %v1589 = vsel %vm550, %v1586, 0.0
    %1590 = vadd.xlane.f32.xlu0 %v1589
    %v1591 = vpop.xlane.xlu0 %1590
    %v1592 = vsel %vm550, %v1588, 0.0
    %1593 = vadd.xlane.f32.xlu0 %v1592
    %v1594 = vpop.xlane.xlu0 %1593
    %v1595 = vrcp.pop %v1591
    %v1596 = vrcp.pop %v1594
    %v1597 = vmul.f32 %v1586, %v1595
    %v1598 = vmul.f32 %v1588, %v1596
    %v1600 = vsel %vm550, %v1597, 0
    %1602 = vmatpush.msra.mxu0 0.0
    %1603 = vmatpush.msra.mxu0 0.0
    %1604 = vmatpush.msra.mxu0 0.0
    %1605 = vmatpush.msra.mxu0 0.0
    %1606 = vmatpush.msra.mxu0 0.0
    %1607 = vmatpush.msra.mxu0 0.0
    %1608 = vmatpush.msra.mxu0 0.0
    %1609 = vmatpush.msra.mxu0 0.0
    %1610 = vmatpush.msra.mxu0 0.0
    %1611 = vmatpush.msra.mxu0 0.0
    %1612 = vmatpush.msra.mxu0 0.0
    %1613 = vmatpush.msra.mxu0 0.0
    %1614 = vmatpush.msra.mxu0 0.0
    %1615 = vmatpush.msra.mxu0 0.0
    %1616 = vmatpush.msra.mxu0 0.0
    %1617 = vmatpush.msra.mxu0 %v1503
    %1618 = vmatmul.f32.gmra.mxu0 %v1600
    %v1619 = vpop.f32.mrf.mxu0
    %v1620 = vadd.f32 0.0, %v1619
    %1621 = vdwg.mxu0
    %v1623 = vsel %vm550, %v1598, 0
    %1625 = vmatpush.msra.mxu0 0.0
    %1626 = vmatpush.msra.mxu0 0.0
    %1627 = vmatpush.msra.mxu0 0.0
    %1628 = vmatpush.msra.mxu0 0.0
    %1629 = vmatpush.msra.mxu0 0.0
    %1630 = vmatpush.msra.mxu0 0.0
    %1631 = vmatpush.msra.mxu0 0.0
    %1632 = vmatpush.msra.mxu0 0.0
    %1633 = vmatpush.msra.mxu0 0.0
    %1634 = vmatpush.msra.mxu0 0.0
    %1635 = vmatpush.msra.mxu0 0.0
    %1636 = vmatpush.msra.mxu0 0.0
    %1637 = vmatpush.msra.mxu0 0.0
    %1638 = vmatpush.msra.mxu0 0.0
    %1639 = vmatpush.msra.mxu0 0.0
    %1640 = vmatpush.msra.mxu0 %v1506
    %1641 = vmatmul.f32.gmra.mxu0 %v1623
    %v1642 = vpop.f32.mrf.mxu0
    %v1643 = vadd.f32 0.0, %v1642
    %1644 = vdwg.mxu0
    %v1646 = vsel %vm494, %v1620, 0
    %v1649 = vsel %vm494, %v1643, 0
    %1651 = vmatpush.msra.mxu0 0.0
    %1652 = vmatpush.msra.mxu0 0.0
    %1653 = vmatpush.msra.mxu0 0.0
    %1654 = vmatpush.msra.mxu0 0.0
    %1655 = vmatpush.msra.mxu0 0.0
    %1656 = vmatpush.msra.mxu0 0.0
    %1657 = vmatpush.msra.mxu0 0.0
    %1658 = vmatpush.msra.mxu0 0.0
    %1659 = vmatpush.msra.mxu0 0.0
    %1660 = vmatpush.msra.mxu0 0.0
    %1661 = vmatpush.msra.mxu0 0.0
    %1662 = vmatpush.msra.mxu0 0.0
    %1663 = vmatpush.msra.mxu0 0.0
    %1664 = vmatpush.msra.mxu0 0.0
    %1665 = vmatpush.msra.mxu0 %v1510
    %1666 = vmatpush.msra.mxu0 %v1509
    %1667 = vmatmul.f32.gmra.mxu0 %v1646
    %v1668 = vpop.f32.mrf.mxu0
    %v1669 = vadd.f32 0.0, %v1668
    %1670 = vmatmul.f32.gmra.mxu0 %v1649
    %v1671 = vpop.f32.mrf.mxu0
    %v1672 = vadd.f32 0.0, %v1671
    %1673 = vdwg.mxu0
    %v1675 = vperm.slane %v1518, 0
    %v1677 = vadd.f32 %v1675, %v1669
    %v1678 = vadd.f32 %v1675, %v1672
    %1679 = vrot.lane.b32.xlu0 %v1480, 112
    %v1680 = vpop.permute.xlu0 %1679
    %1681 = vrot.lane.b32.xlu0 %v1480, 48
    %v1682 = vpop.permute.xlu0 %1681
    %v1683 = vsel %vm494, %v1680, 0
    %v1685 = vsel %vm494, %v1682, 0
    %1687 = vmatpush.xpose.msra.mxu0 0.0
    %1688 = vmatpush.xpose.msra.mxu0 0.0
    %1689 = vmatpush.xpose.msra.mxu0 0.0
    %1690 = vmatpush.xpose.msra.mxu0 0.0
    %1691 = vmatpush.xpose.msra.mxu0 0.0
    %1692 = vmatpush.xpose.msra.mxu0 0.0
    %1693 = vmatpush.xpose.msra.mxu0 0.0
    %1694 = vmatpush.xpose.msra.mxu0 0.0
    %1695 = vmatpush.xpose.msra.mxu0 0.0
    %1696 = vmatpush.xpose.msra.mxu0 0.0
    %1697 = vmatpush.xpose.msra.mxu0 0.0
    %1698 = vmatpush.xpose.msra.mxu0 0.0
    %1699 = vmatpush.xpose.msra.mxu0 0.0
    %1700 = vmatpush.xpose.msra.mxu0 0.0
    %1701 = vmatpush.xpose.msra.mxu0 0.0
    %1702 = vmatpush.xpose.msra.mxu0 %v1685
    %1703 = vmatmul.f32.gmra.mxu0 %v1683
    %v1704 = vpop.f32.mrf.mxu0
    %v1705 = vadd.f32 0.0, %v1704
    %1706 = vdwg.mxu0
    %1707 = vrot.lane.b32.xlu0 %v1483, 112
    %v1708 = vpop.permute.xlu0 %1707
    %1709 = vrot.lane.b32.xlu0 %v1483, 48
    %v1710 = vpop.permute.xlu0 %1709
    %v1711 = vsel %vm494, %v1708, 0
    %v1713 = vsel %vm494, %v1710, 0
    %1715 = vmatpush.xpose.msra.mxu0 0.0
    %1716 = vmatpush.xpose.msra.mxu0 0.0
    %1717 = vmatpush.xpose.msra.mxu0 0.0
    %1718 = vmatpush.xpose.msra.mxu0 0.0
    %1719 = vmatpush.xpose.msra.mxu0 0.0
    %1720 = vmatpush.xpose.msra.mxu0 0.0
    %1721 = vmatpush.xpose.msra.mxu0 0.0
    %1722 = vmatpush.xpose.msra.mxu0 0.0
    %1723 = vmatpush.xpose.msra.mxu0 0.0
    %1724 = vmatpush.xpose.msra.mxu0 0.0
    %1725 = vmatpush.xpose.msra.mxu0 0.0
    %1726 = vmatpush.xpose.msra.mxu0 0.0
    %1727 = vmatpush.xpose.msra.mxu0 0.0
    %1728 = vmatpush.xpose.msra.mxu0 0.0
    %1729 = vmatpush.xpose.msra.mxu0 0.0
    %1730 = vmatpush.xpose.msra.mxu0 %v1713
    %1731 = vmatmul.f32.gmra.mxu0 %v1711
    %v1732 = vpop.f32.mrf.mxu0
    %v1733 = vadd.f32 0.0, %v1732
    %1734 = vdwg.mxu0
    %v1735 = vmul.f32 %v1705, 0.25
    %v1736 = vmul.f32 %v1733, 0.25
    %v1737 = vadd.f32 %v1735, %v95
    %v1738 = vadd.f32 %v1736, %v95
    %v1739 = vsel %vm550, %v1737, -inf
    %1740 = vmax.xlane.f32.xlu0 %v1739
    %v1741 = vpop.xlane.xlu0 %1740
    %v1742 = vsel %vm550, %v1738, -inf
    %1743 = vmax.xlane.f32.xlu0 %v1742
    %v1744 = vpop.xlane.xlu0 %1743
    %v1745 = vsub.f32 %v1737, %v1741
    %v1746 = vsub.f32 %v1738, %v1744
    %v1747 = vmul.f32 %v1745, 1.442695
    %v1748 = vpow.pop %v1747
    %v1749 = vmul.f32 %v1746, 1.442695
    %v1750 = vpow.pop %v1749
    %v1751 = vsel %vm550, %v1748, 0.0
    %1752 = vadd.xlane.f32.xlu0 %v1751
    %v1753 = vpop.xlane.xlu0 %1752
    %v1754 = vsel %vm550, %v1750, 0.0
    %1755 = vadd.xlane.f32.xlu0 %v1754
    %v1756 = vpop.xlane.xlu0 %1755
    %v1757 = vrcp.pop %v1753
    %v1758 = vrcp.pop %v1756
    %v1759 = vmul.f32 %v1748, %v1757
    %v1760 = vmul.f32 %v1750, %v1758
    %1762 = vrot.lane.b32.xlu0 %v1503, 112
    %v1763 = vpop.permute.xlu0 %1762
    %v1766 = vsel %vm550, %v1759, 0
    %1768 = vmatpush.msra.mxu0 0.0
    %1769 = vmatpush.msra.mxu0 0.0
    %1770 = vmatpush.msra.mxu0 0.0
    %1771 = vmatpush.msra.mxu0 0.0
    %1772 = vmatpush.msra.mxu0 0.0
    %1773 = vmatpush.msra.mxu0 0.0
    %1774 = vmatpush.msra.mxu0 0.0
    %1775 = vmatpush.msra.mxu0 0.0
    %1776 = vmatpush.msra.mxu0 0.0
    %1777 = vmatpush.msra.mxu0 0.0
    %1778 = vmatpush.msra.mxu0 0.0
    %1779 = vmatpush.msra.mxu0 0.0
    %1780 = vmatpush.msra.mxu0 0.0
    %1781 = vmatpush.msra.mxu0 0.0
    %1782 = vmatpush.msra.mxu0 0.0
    %1783 = vmatpush.msra.mxu0 %v1763
    %1784 = vmatmul.f32.gmra.mxu0 %v1766
    %v1785 = vpop.f32.mrf.mxu0
    %v1786 = vadd.f32 0.0, %v1785
    %1787 = vdwg.mxu0
    %1789 = vrot.lane.b32.xlu0 %v1506, 112
    %v1790 = vpop.permute.xlu0 %1789
    %v1793 = vsel %vm550, %v1760, 0
    %1795 = vmatpush.msra.mxu0 0.0
    %1796 = vmatpush.msra.mxu0 0.0
    %1797 = vmatpush.msra.mxu0 0.0
    %1798 = vmatpush.msra.mxu0 0.0
    %1799 = vmatpush.msra.mxu0 0.0
    %1800 = vmatpush.msra.mxu0 0.0
    %1801 = vmatpush.msra.mxu0 0.0
    %1802 = vmatpush.msra.mxu0 0.0
    %1803 = vmatpush.msra.mxu0 0.0
    %1804 = vmatpush.msra.mxu0 0.0
    %1805 = vmatpush.msra.mxu0 0.0
    %1806 = vmatpush.msra.mxu0 0.0
    %1807 = vmatpush.msra.mxu0 0.0
    %1808 = vmatpush.msra.mxu0 0.0
    %1809 = vmatpush.msra.mxu0 0.0
    %1810 = vmatpush.msra.mxu0 %v1790
    %1811 = vmatmul.f32.gmra.mxu0 %v1793
    %v1812 = vpop.f32.mrf.mxu0
    %v1813 = vadd.f32 0.0, %v1812
    %1814 = vdwg.mxu0
    %v1816 = vsel %vm494, %v1786, 0
    %v1819 = vsel %vm494, %v1813, 0
    %1821 = vmatpush.msra.mxu0 0.0
    %1822 = vmatpush.msra.mxu0 0.0
    %1823 = vmatpush.msra.mxu0 0.0
    %1824 = vmatpush.msra.mxu0 0.0
    %1825 = vmatpush.msra.mxu0 0.0
    %1826 = vmatpush.msra.mxu0 0.0
    %1827 = vmatpush.msra.mxu0 0.0
    %1828 = vmatpush.msra.mxu0 0.0
    %1829 = vmatpush.msra.mxu0 0.0
    %1830 = vmatpush.msra.mxu0 0.0
    %1831 = vmatpush.msra.mxu0 0.0
    %1832 = vmatpush.msra.mxu0 0.0
    %1833 = vmatpush.msra.mxu0 0.0
    %1834 = vmatpush.msra.mxu0 0.0
    %1835 = vmatpush.msra.mxu0 %v1512
    %1836 = vmatpush.msra.mxu0 %v1511
    %1837 = vmatmul.f32.gmra.mxu0 %v1816
    %v1838 = vpop.f32.mrf.mxu0
    %v1839 = vadd.f32 0.0, %v1838
    %1840 = vmatmul.f32.gmra.mxu0 %v1819
    %v1841 = vpop.f32.mrf.mxu0
    %v1842 = vadd.f32 0.0, %v1841
    %1843 = vdwg.mxu0
    %v1844 = vadd.f32 %v1677, %v1839
    %v1845 = vadd.f32 %v1678, %v1842
    %1846 = vrot.lane.b32.xlu0 %v1480, 96
    %v1847 = vpop.permute.xlu0 %1846
    %1848 = vrot.lane.b32.xlu0 %v1480, 32
    %v1849 = vpop.permute.xlu0 %1848
    %v1850 = vsel %vm494, %v1847, 0
    %v1852 = vsel %vm494, %v1849, 0
    %1854 = vmatpush.xpose.msra.mxu0 0.0
    %1855 = vmatpush.xpose.msra.mxu0 0.0
    %1856 = vmatpush.xpose.msra.mxu0 0.0
    %1857 = vmatpush.xpose.msra.mxu0 0.0
    %1858 = vmatpush.xpose.msra.mxu0 0.0
    %1859 = vmatpush.xpose.msra.mxu0 0.0
    %1860 = vmatpush.xpose.msra.mxu0 0.0
    %1861 = vmatpush.xpose.msra.mxu0 0.0
    %1862 = vmatpush.xpose.msra.mxu0 0.0
    %1863 = vmatpush.xpose.msra.mxu0 0.0
    %1864 = vmatpush.xpose.msra.mxu0 0.0
    %1865 = vmatpush.xpose.msra.mxu0 0.0
    %1866 = vmatpush.xpose.msra.mxu0 0.0
    %1867 = vmatpush.xpose.msra.mxu0 0.0
    %1868 = vmatpush.xpose.msra.mxu0 0.0
    %1869 = vmatpush.xpose.msra.mxu0 %v1852
    %1870 = vmatmul.f32.gmra.mxu0 %v1850
    %v1871 = vpop.f32.mrf.mxu0
    %v1872 = vadd.f32 0.0, %v1871
    %1873 = vdwg.mxu0
    %1874 = vrot.lane.b32.xlu0 %v1483, 96
    %v1875 = vpop.permute.xlu0 %1874
    %1876 = vrot.lane.b32.xlu0 %v1483, 32
    %v1877 = vpop.permute.xlu0 %1876
    %v1878 = vsel %vm494, %v1875, 0
    %v1880 = vsel %vm494, %v1877, 0
    %1882 = vmatpush.xpose.msra.mxu0 0.0
    %1883 = vmatpush.xpose.msra.mxu0 0.0
    %1884 = vmatpush.xpose.msra.mxu0 0.0
    %1885 = vmatpush.xpose.msra.mxu0 0.0
    %1886 = vmatpush.xpose.msra.mxu0 0.0
    %1887 = vmatpush.xpose.msra.mxu0 0.0
    %1888 = vmatpush.xpose.msra.mxu0 0.0
    %1889 = vmatpush.xpose.msra.mxu0 0.0
    %1890 = vmatpush.xpose.msra.mxu0 0.0
    %1891 = vmatpush.xpose.msra.mxu0 0.0
    %1892 = vmatpush.xpose.msra.mxu0 0.0
    %1893 = vmatpush.xpose.msra.mxu0 0.0
    %1894 = vmatpush.xpose.msra.mxu0 0.0
    %1895 = vmatpush.xpose.msra.mxu0 0.0
    %1896 = vmatpush.xpose.msra.mxu0 0.0
    %1897 = vmatpush.xpose.msra.mxu0 %v1880
    %1898 = vmatmul.f32.gmra.mxu0 %v1878
    %v1899 = vpop.f32.mrf.mxu0
    %v1900 = vadd.f32 0.0, %v1899
    %1901 = vdwg.mxu0
    %v1902 = vmul.f32 %v1872, 0.25
    %v1903 = vmul.f32 %v1900, 0.25
    %v1904 = vadd.f32 %v1902, %v95
    %v1905 = vadd.f32 %v1903, %v95
    %v1906 = vsel %vm550, %v1904, -inf
    %1907 = vmax.xlane.f32.xlu0 %v1906
    %v1908 = vpop.xlane.xlu0 %1907
    %v1909 = vsel %vm550, %v1905, -inf
    %1910 = vmax.xlane.f32.xlu0 %v1909
    %v1911 = vpop.xlane.xlu0 %1910
    %v1912 = vsub.f32 %v1904, %v1908
    %v1913 = vsub.f32 %v1905, %v1911
    %v1914 = vmul.f32 %v1912, 1.442695
    %v1915 = vpow.pop %v1914
    %v1916 = vmul.f32 %v1913, 1.442695
    %v1917 = vpow.pop %v1916
    %v1918 = vsel %vm550, %v1915, 0.0
    %1919 = vadd.xlane.f32.xlu0 %v1918
    %v1920 = vpop.xlane.xlu0 %1919
    %v1921 = vsel %vm550, %v1917, 0.0
    %1922 = vadd.xlane.f32.xlu0 %v1921
    %v1923 = vpop.xlane.xlu0 %1922
    %v1924 = vrcp.pop %v1920
    %v1925 = vrcp.pop %v1923
    %v1926 = vmul.f32 %v1915, %v1924
    %v1927 = vmul.f32 %v1917, %v1925
    %1928 = vrot.lane.b32.xlu0 %v1503, 96
    %v1929 = vpop.permute.xlu0 %1928
    %v1932 = vsel %vm550, %v1926, 0
    %1934 = vmatpush.msra.mxu0 0.0
    %1935 = vmatpush.msra.mxu0 0.0
    %1936 = vmatpush.msra.mxu0 0.0
    %1937 = vmatpush.msra.mxu0 0.0
    %1938 = vmatpush.msra.mxu0 0.0
    %1939 = vmatpush.msra.mxu0 0.0
    %1940 = vmatpush.msra.mxu0 0.0
    %1941 = vmatpush.msra.mxu0 0.0
    %1942 = vmatpush.msra.mxu0 0.0
    %1943 = vmatpush.msra.mxu0 0.0
    %1944 = vmatpush.msra.mxu0 0.0
    %1945 = vmatpush.msra.mxu0 0.0
    %1946 = vmatpush.msra.mxu0 0.0
    %1947 = vmatpush.msra.mxu0 0.0
    %1948 = vmatpush.msra.mxu0 0.0
    %1949 = vmatpush.msra.mxu0 %v1929
    %1950 = vmatmul.f32.gmra.mxu0 %v1932
    %v1951 = vpop.f32.mrf.mxu0
    %v1952 = vadd.f32 0.0, %v1951
    %1953 = vdwg.mxu0
    %1954 = vrot.lane.b32.xlu0 %v1506, 96
    %v1955 = vpop.permute.xlu0 %1954
    %v1958 = vsel %vm550, %v1927, 0
    %1960 = vmatpush.msra.mxu0 0.0
    %1961 = vmatpush.msra.mxu0 0.0
    %1962 = vmatpush.msra.mxu0 0.0
    %1963 = vmatpush.msra.mxu0 0.0
    %1964 = vmatpush.msra.mxu0 0.0
    %1965 = vmatpush.msra.mxu0 0.0
    %1966 = vmatpush.msra.mxu0 0.0
    %1967 = vmatpush.msra.mxu0 0.0
    %1968 = vmatpush.msra.mxu0 0.0
    %1969 = vmatpush.msra.mxu0 0.0
    %1970 = vmatpush.msra.mxu0 0.0
    %1971 = vmatpush.msra.mxu0 0.0
    %1972 = vmatpush.msra.mxu0 0.0
    %1973 = vmatpush.msra.mxu0 0.0
    %1974 = vmatpush.msra.mxu0 0.0
    %1975 = vmatpush.msra.mxu0 %v1955
    %1976 = vmatmul.f32.gmra.mxu0 %v1958
    %v1977 = vpop.f32.mrf.mxu0
    %v1978 = vadd.f32 0.0, %v1977
    %1979 = vdwg.mxu0
    %v1981 = vsel %vm494, %v1952, 0
    %v1984 = vsel %vm494, %v1978, 0
    %1986 = vmatpush.msra.mxu0 0.0
    %1987 = vmatpush.msra.mxu0 0.0
    %1988 = vmatpush.msra.mxu0 0.0
    %1989 = vmatpush.msra.mxu0 0.0
    %1990 = vmatpush.msra.mxu0 0.0
    %1991 = vmatpush.msra.mxu0 0.0
    %1992 = vmatpush.msra.mxu0 0.0
    %1993 = vmatpush.msra.mxu0 0.0
    %1994 = vmatpush.msra.mxu0 0.0
    %1995 = vmatpush.msra.mxu0 0.0
    %1996 = vmatpush.msra.mxu0 0.0
    %1997 = vmatpush.msra.mxu0 0.0
    %1998 = vmatpush.msra.mxu0 0.0
    %1999 = vmatpush.msra.mxu0 0.0
    %2000 = vmatpush.msra.mxu0 %v1514
    %2001 = vmatpush.msra.mxu0 %v1513
    %2002 = vmatmul.f32.gmra.mxu0 %v1981
    %v2003 = vpop.f32.mrf.mxu0
    %v2004 = vadd.f32 0.0, %v2003
    %2005 = vmatmul.f32.gmra.mxu0 %v1984
    %v2006 = vpop.f32.mrf.mxu0
    %v2007 = vadd.f32 0.0, %v2006
    %2008 = vdwg.mxu0
    %v2009 = vadd.f32 %v1844, %v2004
    %v2010 = vadd.f32 %v1845, %v2007
    %2011 = vrot.lane.b32.xlu0 %v1480, 80
    %v2012 = vpop.permute.xlu0 %2011
    %2013 = vrot.lane.b32.xlu0 %v1480, 16
    %v2014 = vpop.permute.xlu0 %2013
    %v2015 = vsel %vm494, %v2012, 0
    %v2017 = vsel %vm494, %v2014, 0
    %2019 = vmatpush.xpose.msra.mxu0 0.0
    %2020 = vmatpush.xpose.msra.mxu0 0.0
    %2021 = vmatpush.xpose.msra.mxu0 0.0
    %2022 = vmatpush.xpose.msra.mxu0 0.0
    %2023 = vmatpush.xpose.msra.mxu0 0.0
    %2024 = vmatpush.xpose.msra.mxu0 0.0
    %2025 = vmatpush.xpose.msra.mxu0 0.0
    %2026 = vmatpush.xpose.msra.mxu0 0.0
    %2027 = vmatpush.xpose.msra.mxu0 0.0
    %2028 = vmatpush.xpose.msra.mxu0 0.0
    %2029 = vmatpush.xpose.msra.mxu0 0.0
    %2030 = vmatpush.xpose.msra.mxu0 0.0
    %2031 = vmatpush.xpose.msra.mxu0 0.0
    %2032 = vmatpush.xpose.msra.mxu0 0.0
    %2033 = vmatpush.xpose.msra.mxu0 0.0
    %2034 = vmatpush.xpose.msra.mxu0 %v2017
    %2035 = vmatmul.f32.gmra.mxu0 %v2015
    %v2036 = vpop.f32.mrf.mxu0
    %v2037 = vadd.f32 0.0, %v2036
    %2038 = vdwg.mxu0
    %2039 = vrot.lane.b32.xlu0 %v1483, 80
    %v2040 = vpop.permute.xlu0 %2039
    %2041 = vrot.lane.b32.xlu0 %v1483, 16
    %v2042 = vpop.permute.xlu0 %2041
    %v2043 = vsel %vm494, %v2040, 0
    %v2045 = vsel %vm494, %v2042, 0
    %2047 = vmatpush.xpose.msra.mxu0 0.0
    %2048 = vmatpush.xpose.msra.mxu0 0.0
    %2049 = vmatpush.xpose.msra.mxu0 0.0
    %2050 = vmatpush.xpose.msra.mxu0 0.0
    %2051 = vmatpush.xpose.msra.mxu0 0.0
    %2052 = vmatpush.xpose.msra.mxu0 0.0
    %2053 = vmatpush.xpose.msra.mxu0 0.0
    %2054 = vmatpush.xpose.msra.mxu0 0.0
    %2055 = vmatpush.xpose.msra.mxu0 0.0
    %2056 = vmatpush.xpose.msra.mxu0 0.0
    %2057 = vmatpush.xpose.msra.mxu0 0.0
    %2058 = vmatpush.xpose.msra.mxu0 0.0
    %2059 = vmatpush.xpose.msra.mxu0 0.0
    %2060 = vmatpush.xpose.msra.mxu0 0.0
    %2061 = vmatpush.xpose.msra.mxu0 0.0
    %2062 = vmatpush.xpose.msra.mxu0 %v2045
    %2063 = vmatmul.f32.gmra.mxu0 %v2043
    %v2064 = vpop.f32.mrf.mxu0
    %v2065 = vadd.f32 0.0, %v2064
    %2066 = vdwg.mxu0
    %v2067 = vmul.f32 %v2037, 0.25
    %v2068 = vmul.f32 %v2065, 0.25
    %v2069 = vadd.f32 %v2067, %v95
    %v2070 = vadd.f32 %v2068, %v95
    %v2071 = vsel %vm550, %v2069, -inf
    %2072 = vmax.xlane.f32.xlu0 %v2071
    %v2073 = vpop.xlane.xlu0 %2072
    %v2074 = vsel %vm550, %v2070, -inf
    %2075 = vmax.xlane.f32.xlu0 %v2074
    %v2076 = vpop.xlane.xlu0 %2075
    %v2077 = vsub.f32 %v2069, %v2073
    %v2078 = vsub.f32 %v2070, %v2076
    %v2079 = vmul.f32 %v2077, 1.442695
    %v2080 = vpow.pop %v2079
    %v2081 = vmul.f32 %v2078, 1.442695
    %v2082 = vpow.pop %v2081
    %v2083 = vsel %vm550, %v2080, 0.0
    %2084 = vadd.xlane.f32.xlu0 %v2083
    %v2085 = vpop.xlane.xlu0 %2084
    %v2086 = vsel %vm550, %v2082, 0.0
    %2087 = vadd.xlane.f32.xlu0 %v2086
    %v2088 = vpop.xlane.xlu0 %2087
    %v2089 = vrcp.pop %v2085
    %v2090 = vrcp.pop %v2088
    %v2091 = vmul.f32 %v2080, %v2089
    %v2092 = vmul.f32 %v2082, %v2090
    %2093 = vrot.lane.b32.xlu0 %v1503, 80
    %v2094 = vpop.permute.xlu0 %2093
    %v2097 = vsel %vm550, %v2091, 0
    %2099 = vmatpush.msra.mxu0 0.0
    %2100 = vmatpush.msra.mxu0 0.0
    %2101 = vmatpush.msra.mxu0 0.0
    %2102 = vmatpush.msra.mxu0 0.0
    %2103 = vmatpush.msra.mxu0 0.0
    %2104 = vmatpush.msra.mxu0 0.0
    %2105 = vmatpush.msra.mxu0 0.0
    %2106 = vmatpush.msra.mxu0 0.0
    %2107 = vmatpush.msra.mxu0 0.0
    %2108 = vmatpush.msra.mxu0 0.0
    %2109 = vmatpush.msra.mxu0 0.0
    %2110 = vmatpush.msra.mxu0 0.0
    %2111 = vmatpush.msra.mxu0 0.0
    %2112 = vmatpush.msra.mxu0 0.0
    %2113 = vmatpush.msra.mxu0 0.0
    %2114 = vmatpush.msra.mxu0 %v2094
    %2115 = vmatmul.f32.gmra.mxu0 %v2097
    %v2116 = vpop.f32.mrf.mxu0
    %v2117 = vadd.f32 0.0, %v2116
    %2118 = vdwg.mxu0
    %2119 = vrot.lane.b32.xlu0 %v1506, 80
    %v2120 = vpop.permute.xlu0 %2119
    %v2123 = vsel %vm550, %v2092, 0
    %2125 = vmatpush.msra.mxu0 0.0
    %2126 = vmatpush.msra.mxu0 0.0
    %2127 = vmatpush.msra.mxu0 0.0
    %2128 = vmatpush.msra.mxu0 0.0
    %2129 = vmatpush.msra.mxu0 0.0
    %2130 = vmatpush.msra.mxu0 0.0
    %2131 = vmatpush.msra.mxu0 0.0
    %2132 = vmatpush.msra.mxu0 0.0
    %2133 = vmatpush.msra.mxu0 0.0
    %2134 = vmatpush.msra.mxu0 0.0
    %2135 = vmatpush.msra.mxu0 0.0
    %2136 = vmatpush.msra.mxu0 0.0
    %2137 = vmatpush.msra.mxu0 0.0
    %2138 = vmatpush.msra.mxu0 0.0
    %2139 = vmatpush.msra.mxu0 0.0
    %2140 = vmatpush.msra.mxu0 %v2120
    %2141 = vmatmul.f32.gmra.mxu0 %v2123
    %v2142 = vpop.f32.mrf.mxu0
    %v2143 = vadd.f32 0.0, %v2142
    %2144 = vdwg.mxu0
    %v2146 = vsel %vm494, %v2117, 0
    %v2149 = vsel %vm494, %v2143, 0
    %2151 = vmatpush.msra.mxu0 0.0
    %2152 = vmatpush.msra.mxu0 0.0
    %2153 = vmatpush.msra.mxu0 0.0
    %2154 = vmatpush.msra.mxu0 0.0
    %2155 = vmatpush.msra.mxu0 0.0
    %2156 = vmatpush.msra.mxu0 0.0
    %2157 = vmatpush.msra.mxu0 0.0
    %2158 = vmatpush.msra.mxu0 0.0
    %2159 = vmatpush.msra.mxu0 0.0
    %2160 = vmatpush.msra.mxu0 0.0
    %2161 = vmatpush.msra.mxu0 0.0
    %2162 = vmatpush.msra.mxu0 0.0
    %2163 = vmatpush.msra.mxu0 0.0
    %2164 = vmatpush.msra.mxu0 0.0
    %2165 = vmatpush.msra.mxu0 %v1516
    %2166 = vmatpush.msra.mxu0 %v1515
    %2167 = vmatmul.f32.gmra.mxu0 %v2146
    %v2168 = vpop.f32.mrf.mxu0
    %v2169 = vadd.f32 0.0, %v2168
    %2170 = vmatmul.f32.gmra.mxu0 %v2149
    %v2171 = vpop.f32.mrf.mxu0
    %v2172 = vadd.f32 0.0, %v2171
    %2173 = vdwg.mxu0
    %v2174 = vadd.f32 %v2009, %v2169
    %v2175 = vadd.f32 %v2010, %v2172
    %v2176 = vadd.f32 %v1372, %v2174
    %v2177 = vadd.f32 %v1373, %v2175
    %s2178 = scalar_lea.vmem %s10, 1
    %v2179 = vld [vmem:[%s2178] sm:$0x1]
    %s2180 = scalar_lea.vmem %s11, 1
    %v2181 = vld [vmem:[%s2180] sm:$0x1]
    %v2182 = vsel %vm346, %v2176, 0.0
    %2183 = vadd.xlane.f32.xlu0 %v2182
    %v2184 = vpop.xlane.xlu0 %2183
    %v2185 = vsel %vm346, %v2177, 0.0
    %2186 = vadd.xlane.f32.xlu0 %v2185
    %v2187 = vpop.xlane.xlu0 %2186
    %v2188 = vmul.f32 %v2184, %v359
    %v2189 = vmul.f32 %v2187, %v359
    %v2190 = vsub.f32 %v2176, %v2188
    %v2191 = vsub.f32 %v2177, %v2189
    %v2192 = vmul.f32 %v2190, %v2190
    %v2193 = vmul.f32 %v2191, %v2191
    %v2194 = vsel %vm346, %v2192, 0.0
    %2195 = vadd.xlane.f32.xlu0 %v2194
    %v2196 = vpop.xlane.xlu0 %2195
    %v2197 = vsel %vm346, %v2193, 0.0
    %2198 = vadd.xlane.f32.xlu0 %v2197
    %v2199 = vpop.xlane.xlu0 %2198
    %v2200 = vmul.f32 %v2196, %v359
    %v2201 = vmul.f32 %v2199, %v359
    %v2202 = vadd.f32 %v2200, 1e-06
    %v2203 = vadd.f32 %v2201, 1e-06
    %v2204 = vrsqrt.pop %v2202
    %v2205 = vmul.f32 %v2204, %v2202
    %v2206 = vmul.f32 %v2205, %v2204
    %v2207 = vmul.f32 0.5, %v2206
    %v2208 = vsub.f32 1.5, %v2207
    %v2209 = vmul.f32 %v2204, %v2208
    %vm2210 = vweird.f32 %v2202
    %vm2211 = vweird.f32 %v2204
    %vm2212 = vmor %vm2210, %vm2211
    %v2213 = vsel %vm2212, %v2204, %v2209
    %v2214 = vrsqrt.pop %v2203
    %v2215 = vmul.f32 %v2214, %v2203
    %v2216 = vmul.f32 %v2215, %v2214
    %v2217 = vmul.f32 0.5, %v2216
    %v2218 = vsub.f32 1.5, %v2217
    %v2219 = vmul.f32 %v2214, %v2218
    %vm2220 = vweird.f32 %v2203
    %vm2221 = vweird.f32 %v2214
    %vm2222 = vmor %vm2220, %vm2221
    %v2223 = vsel %vm2222, %v2214, %v2219
    %v2224 = vmul.f32 %v2190, %v2213
    %v2225 = vmul.f32 %v2191, %v2223
    %v2227 = vperm.slane %v2179, 0
    %v2229 = vmul.f32 %v2224, %v2227
    %v2230 = vmul.f32 %v2225, %v2227
    %v2232 = vperm.slane %v2181, 0
    %v2234 = vadd.f32 %v2229, %v2232
    %v2235 = vadd.f32 %v2230, %v2232
    %s2236 = scalar_lea.vmem %s12, 64
    %v2237 = vld [vmem:[%s2236] sm:$0xff]
    %v2238 = vld [vmem:[%s2236 + $0x8] sm:$0xff]
    %v2239 = vld [vmem:[%s2236 + $0x10] sm:$0xff]
    %v2240 = vld [vmem:[%s2236 + $0x18] sm:$0xff]
    %v2241 = vld [vmem:[%s2236 + $0x20] sm:$0xff]
    %v2242 = vld [vmem:[%s2236 + $0x28] sm:$0xff]
    %v2243 = vld [vmem:[%s2236 + $0x30] sm:$0xff]
    %v2244 = vld [vmem:[%s2236 + $0x38] sm:$0xff]
    %s2245 = scalar_lea.vmem %s13, 1
    %v2246 = vld [vmem:[%s2245] sm:$0x1]
    %v2248 = vperm.slane %v2246, 0
    %v2251 = vsel %vm346, %v2234, 0
    %v2254 = vsel %vm346, %v2235, 0
    %2256 = vmatpush.msra.mxu0 0.0
    %2257 = vmatpush.msra.mxu0 0.0
    %2258 = vmatpush.msra.mxu0 0.0
    %2259 = vmatpush.msra.mxu0 0.0
    %2260 = vmatpush.msra.mxu0 0.0
    %2261 = vmatpush.msra.mxu0 0.0
    %2262 = vmatpush.msra.mxu0 0.0
    %2263 = vmatpush.msra.mxu0 0.0
    %2264 = vmatpush.msra.mxu0 %v2244
    %2265 = vmatpush.msra.mxu0 %v2243
    %2266 = vmatpush.msra.mxu0 %v2242
    %2267 = vmatpush.msra.mxu0 %v2241
    %2268 = vmatpush.msra.mxu0 %v2240
    %2269 = vmatpush.msra.mxu0 %v2239
    %2270 = vmatpush.msra.mxu0 %v2238
    %2271 = vmatpush.msra.mxu0 %v2237
    %2272 = vmatmul.f32.gmra.mxu0 %v2251
    %v2273 = vpop.f32.mrf.mxu0
    %v2274 = vadd.f32 %v2248, %v2273
    %2275 = vmatmul.f32.gmra.mxu0 %v2254
    %v2276 = vpop.f32.mrf.mxu0
    %v2277 = vadd.f32 %v2248, %v2276
    %2278 = vdwg.mxu0
    %v2279 = vmul.f32 %v2274, 0.5
    %v2280 = vmul.f32 %v2277, 0.5
    %v2281 = vmul.f32 %v2274, 0.70710677
    %v2282 = vmul.f32 %v2277, 0.70710677
    %vm2283 = vcmp.ge.f32.partialorder %v2281, 0.0
    %vm2284 = vcmp.ge.f32.partialorder %v2282, 0.0
    %v2285 = vsel %vm2283, 1.0, -1.0
    %v2286 = vsel %vm2284, 1.0, -1.0
    %v2287 = vand.u32 2147483647, %v2281
    %v2288 = vand.u32 2147483647, %v2282
    %v2289 = vmul.f32 %v2287, 0.3275911
    %v2290 = vmul.f32 %v2288, 0.3275911
    %v2291 = vadd.f32 %v2289, 1.0
    %v2292 = vadd.f32 %v2290, 1.0
    %v2293 = vrcp.pop %v2291
    %v2294 = vmul.f32 %v2291, %v2293
    %v2295 = vsub.f32 1.0, %v2294
    %v2296 = vmul.f32 %v2293, %v2295
    %v2297 = vadd.f32 %v2293, %v2296
    %vm2298 = vweird.f32 %v2291
    %vm2299 = vweird.f32 %v2293
    %vm2300 = vmor %vm2298, %vm2299
    %v2301 = vsel %vm2300, %v2293, %v2297
    %v2302 = vand.u32 2147483647, %v2291
    %vm2303 = vcmp.eq.f32.partialorder %v2302, 8.507059e+37
    %v2304 = vand.u32 %v2291, 2147483648
    %v2305 = vor.u32 1.1754944e-38, %v2304
    %v2306 = vsel %vm2303, %v2305, %v2301
    %v2307 = vmul.f32 1.0, %v2306
    %v2308 = vrcp.pop %v2292
    %v2309 = vmul.f32 %v2292, %v2308
    %v2310 = vsub.f32 1.0, %v2309
    %v2311 = vmul.f32 %v2308, %v2310
    %v2312 = vadd.f32 %v2308, %v2311
    %vm2313 = vweird.f32 %v2292
    %vm2314 = vweird.f32 %v2308
    %vm2315 = vmor %vm2313, %vm2314
    %v2316 = vsel %vm2315, %v2308, %v2312
    %v2317 = vand.u32 2147483647, %v2292
    %vm2318 = vcmp.eq.f32.partialorder %v2317, 8.507059e+37
    %v2319 = vand.u32 %v2292, 2147483648
    %v2320 = vor.u32 1.1754944e-38, %v2319
    %v2321 = vsel %vm2318, %v2320, %v2316
    %v2322 = vmul.f32 1.0, %v2321
    %v2323 = vmul.f32 %v2307, 1.0614054
    %v2324 = vmul.f32 %v2322, 1.0614054
    %v2325 = vadd.f32 %v2323, -1.4531521
    %v2326 = vadd.f32 %v2324, -1.4531521
    %v2327 = vmul.f32 %v2325, %v2307
    %v2328 = vmul.f32 %v2326, %v2322
    %v2329 = vadd.f32 %v2327, 1.4214138
    %v2330 = vadd.f32 %v2328, 1.4214138
    %v2331 = vmul.f32 %v2329, %v2307
    %v2332 = vmul.f32 %v2330, %v2322
    %v2333 = vadd.f32 %v2331, -0.28449672
    %v2334 = vadd.f32 %v2332, -0.28449672
    %v2335 = vmul.f32 %v2333, %v2307
    %v2336 = vmul.f32 %v2334, %v2322
    %v2337 = vadd.f32 %v2335, 0.2548296
    %v2338 = vadd.f32 %v2336, 0.2548296
    %v2339 = vmul.f32 %v2337, %v2307
    %v2340 = vmul.f32 %v2338, %v2322
    %v2341 = vsub.f32 0.0, %v2287
    %v2342 = vsub.f32 0.0, %v2288
    %v2343 = vmul.f32 %v2341, %v2287
    %v2344 = vmul.f32 %v2342, %v2288
    %v2345 = vmul.f32 %v2343, 1.442695
    %v2346 = vpow.pop %v2345
    %v2347 = vmul.f32 %v2344, 1.442695
    %v2348 = vpow.pop %v2347
    %v2349 = vmul.f32 %v2339, %v2346
    %v2350 = vmul.f32 %v2340, %v2348
    %v2351 = vsub.f32 1.0, %v2349
    %v2352 = vsub.f32 1.0, %v2350
    %v2353 = vmul.f32 %v2285, %v2351
    %v2354 = vmul.f32 %v2286, %v2352
    %v2355 = vadd.f32 %v2353, 1.0
    %v2356 = vadd.f32 %v2354, 1.0
    %v2357 = vmul.f32 %v2279, %v2355
    %v2358 = vmul.f32 %v2280, %v2356
    %s2359 = scalar_lea.vmem %s14, 128
    %v2360 = vld [vmem:[%s2359] sm:$0xff]
    %v2361 = vld [vmem:[%s2359 + $0x8] sm:$0xff]
    %v2362 = vld [vmem:[%s2359 + $0x10] sm:$0xff]
    %v2363 = vld [vmem:[%s2359 + $0x18] sm:$0xff]
    %v2364 = vld [vmem:[%s2359 + $0x20] sm:$0xff]
    %v2365 = vld [vmem:[%s2359 + $0x28] sm:$0xff]
    %v2366 = vld [vmem:[%s2359 + $0x30] sm:$0xff]
    %v2367 = vld [vmem:[%s2359 + $0x38] sm:$0xff]
    %v2368 = vld [vmem:[%s2359 + $0x40] sm:$0xff]
    %v2369 = vld [vmem:[%s2359 + $0x48] sm:$0xff]
    %v2370 = vld [vmem:[%s2359 + $0x50] sm:$0xff]
    %v2371 = vld [vmem:[%s2359 + $0x58] sm:$0xff]
    %v2372 = vld [vmem:[%s2359 + $0x60] sm:$0xff]
    %v2373 = vld [vmem:[%s2359 + $0x68] sm:$0xff]
    %v2374 = vld [vmem:[%s2359 + $0x70] sm:$0xff]
    %v2375 = vld [vmem:[%s2359 + $0x78] sm:$0xff]
    %s2376 = scalar_lea.vmem %s15, 1
    %v2377 = vld [vmem:[%s2376] sm:$0x1]
    %v2379 = vperm.slane %v2377, 0
    %2381 = vmatpush.msra.mxu0 %v2375
    %2382 = vmatpush.msra.mxu0 %v2374
    %2383 = vmatpush.msra.mxu0 %v2373
    %2384 = vmatpush.msra.mxu0 %v2372
    %2385 = vmatpush.msra.mxu0 %v2371
    %2386 = vmatpush.msra.mxu0 %v2370
    %2387 = vmatpush.msra.mxu0 %v2369
    %2388 = vmatpush.msra.mxu0 %v2368
    %2389 = vmatpush.msra.mxu0 %v2367
    %2390 = vmatpush.msra.mxu0 %v2366
    %2391 = vmatpush.msra.mxu0 %v2365
    %2392 = vmatpush.msra.mxu0 %v2364
    %2393 = vmatpush.msra.mxu0 %v2363
    %2394 = vmatpush.msra.mxu0 %v2362
    %2395 = vmatpush.msra.mxu0 %v2361
    %2396 = vmatpush.msra.mxu0 %v2360
    %2397 = vmatmul.f32.gmra.mxu0 %v2357
    %v2398 = vpop.f32.mrf.mxu0
    %v2399 = vadd.f32 %v2379, %v2398
    %2400 = vmatmul.f32.gmra.mxu0 %v2358
    %v2401 = vpop.f32.mrf.mxu0
    %v2402 = vadd.f32 %v2379, %v2401
    %2403 = vdwg.mxu0
    %v2404 = vadd.f32 %v2176, %v2399
    %v2405 = vadd.f32 %v2177, %v2402
    %v2406 = vld [vmem:[%s16] sm:$0x1]
    %v2407 = vld [vmem:[%s17] sm:$0x1]
    %v2408 = vsel %vm346, %v2404, 0.0
    %2409 = vadd.xlane.f32.xlu0 %v2408
    %v2410 = vpop.xlane.xlu0 %2409
    %v2411 = vsel %vm346, %v2405, 0.0
    %2412 = vadd.xlane.f32.xlu0 %v2411
    %v2413 = vpop.xlane.xlu0 %2412
    %v2414 = vmul.f32 %v2410, %v359
    %v2415 = vmul.f32 %v2413, %v359
    %v2416 = vsub.f32 %v2404, %v2414
    %v2417 = vsub.f32 %v2405, %v2415
    %v2418 = vmul.f32 %v2416, %v2416
    %v2419 = vmul.f32 %v2417, %v2417
    %v2420 = vsel %vm346, %v2418, 0.0
    %2421 = vadd.xlane.f32.xlu0 %v2420
    %v2422 = vpop.xlane.xlu0 %2421
    %v2423 = vsel %vm346, %v2419, 0.0
    %2424 = vadd.xlane.f32.xlu0 %v2423
    %v2425 = vpop.xlane.xlu0 %2424
    %v2426 = vmul.f32 %v2422, %v359
    %v2427 = vmul.f32 %v2425, %v359
    %v2428 = vadd.f32 %v2426, 1e-06
    %v2429 = vadd.f32 %v2427, 1e-06
    %v2430 = vrsqrt.pop %v2428
    %v2431 = vmul.f32 %v2430, %v2428
    %v2432 = vmul.f32 %v2431, %v2430
    %v2433 = vmul.f32 0.5, %v2432
    %v2434 = vsub.f32 1.5, %v2433
    %v2435 = vmul.f32 %v2430, %v2434
    %vm2436 = vweird.f32 %v2428
    %vm2437 = vweird.f32 %v2430
    %vm2438 = vmor %vm2436, %vm2437
    %v2439 = vsel %vm2438, %v2430, %v2435
    %v2440 = vrsqrt.pop %v2429
    %v2441 = vmul.f32 %v2440, %v2429
    %v2442 = vmul.f32 %v2441, %v2440
    %v2443 = vmul.f32 0.5, %v2442
    %v2444 = vsub.f32 1.5, %v2443
    %v2445 = vmul.f32 %v2440, %v2444
    %vm2446 = vweird.f32 %v2429
    %vm2447 = vweird.f32 %v2440
    %vm2448 = vmor %vm2446, %vm2447
    %v2449 = vsel %vm2448, %v2440, %v2445
    %v2450 = vmul.f32 %v2416, %v2439
    %v2451 = vmul.f32 %v2417, %v2449
    %v2453 = vperm.slane %v2406, 0
    %v2455 = vmul.f32 %v2450, %v2453
    %v2456 = vmul.f32 %v2451, %v2453
    %v2458 = vperm.slane %v2407, 0
    %v2460 = vadd.f32 %v2455, %v2458
    %v2461 = vadd.f32 %v2456, %v2458
    %v2463 = vrot.slane %v2461, 7
    %vm2465 = vcmask 1040384
    %v2466 = vsel %vm2465, %v2460, %v2463
    %v2467 = vpack.c.bf16 %v2466, %v2466
    %v2468 = vld [vmem:[%s18] sm:$0xff]
    %v2469 = vld [vmem:[%s18 + $0x8] sm:$0xff]
    %v2470 = vld [vmem:[%s18 + $0x10] sm:$0xff]
    %v2471 = vld [vmem:[%s18 + $0x18] sm:$0xff]
    %v2472 = vld [vmem:[%s18 + $0x20] sm:$0xff]
    %v2473 = vld [vmem:[%s18 + $0x28] sm:$0xff]
    %v2474 = vld [vmem:[%s18 + $0x30] sm:$0xff]
    %v2475 = vld [vmem:[%s18 + $0x38] sm:$0xff]
    %v2476 = vld [vmem:[%s18 + $0x40] sm:$0xff]
    %v2477 = vld [vmem:[%s18 + $0x48] sm:$0xff]
    %v2478 = vld [vmem:[%s18 + $0x50] sm:$0xff]
    %v2479 = vld [vmem:[%s18 + $0x58] sm:$0xff]
    %v2480 = vld [vmem:[%s18 + $0x60] sm:$0xff]
    %v2481 = vld [vmem:[%s18 + $0x68] sm:$0xff]
    %v2482 = vld [vmem:[%s18 + $0x70] sm:$0xff]
    %v2483 = vld [vmem:[%s18 + $0x78] sm:$0xff]
    %v2484 = vld [vmem:[%s18 + $0x80] sm:$0xff]
    %v2485 = vld [vmem:[%s18 + $0x88] sm:$0xff]
    %v2486 = vld [vmem:[%s18 + $0x90] sm:$0xff]
    %v2487 = vld [vmem:[%s18 + $0x98] sm:$0xff]
    %v2488 = vld [vmem:[%s18 + $0xa0] sm:$0xff]
    %v2489 = vld [vmem:[%s18 + $0xa8] sm:$0xff]
    %v2490 = vld [vmem:[%s18 + $0xb0] sm:$0xff]
    %v2491 = vld [vmem:[%s18 + $0xb8] sm:$0xff]
    %v2492 = vld [vmem:[%s18 + $0xc0] sm:$0xff]
    %v2493 = vld [vmem:[%s18 + $0xc8] sm:$0xff]
    %v2494 = vld [vmem:[%s18 + $0xd0] sm:$0xff]
    %v2495 = vld [vmem:[%s18 + $0xd8] sm:$0xff]
    %v2496 = vld [vmem:[%s18 + $0xe0] sm:$0xff]
    %v2497 = vld [vmem:[%s18 + $0xe8] sm:$0xff]
    %v2498 = vld [vmem:[%s18 + $0xf0] sm:$0xff]
    %v2499 = vld [vmem:[%s18 + $0xf8] sm:$0xff]
    %v2500 = vld [vmem:[%s19] sm:$0xff]
    %v2502 = vperm.slane %v2500, 0
    %v2503 = vperm.slane %v2500, 1
    %v2504 = vperm.slane %v2500, 2
    %v2505 = vperm.slane %v2500, 3
    %v2506 = vperm.slane %v2500, 4
    %v2507 = vperm.slane %v2500, 5
    %v2508 = vperm.slane %v2500, 6
    %v2509 = vperm.slane %v2500, 7
    %v2550 = vunpack.c.l.b16 %v2468
    %v2551 = vunpack.c.h.b16 %v2468
    %v2552 = vunpack.c.l.b16 %v2469
    %v2553 = vunpack.c.h.b16 %v2469
    %v2554 = vunpack.c.l.b16 %v2470
    %v2555 = vunpack.c.h.b16 %v2470
    %v2556 = vunpack.c.l.b16 %v2471
    %v2557 = vunpack.c.h.b16 %v2471
    %v2558 = vunpack.c.l.b16 %v2472
    %v2559 = vunpack.c.h.b16 %v2472
    %v2560 = vunpack.c.l.b16 %v2473
    %v2561 = vunpack.c.h.b16 %v2473
    %v2562 = vunpack.c.l.b16 %v2474
    %v2563 = vunpack.c.h.b16 %v2474
    %v2564 = vunpack.c.l.b16 %v2475
    %v2565 = vunpack.c.h.b16 %v2475
    %v2566 = vunpack.c.l.b16 %v2476
    %v2567 = vunpack.c.h.b16 %v2476
    %v2568 = vunpack.c.l.b16 %v2477
    %v2569 = vunpack.c.h.b16 %v2477
    %v2570 = vunpack.c.l.b16 %v2478
    %v2571 = vunpack.c.h.b16 %v2478
    %v2572 = vunpack.c.l.b16 %v2479
    %v2573 = vunpack.c.h.b16 %v2479
    %v2574 = vunpack.c.l.b16 %v2480
    %v2575 = vunpack.c.h.b16 %v2480
    %v2576 = vunpack.c.l.b16 %v2481
    %v2577 = vunpack.c.h.b16 %v2481
    %v2578 = vunpack.c.l.b16 %v2482
    %v2579 = vunpack.c.h.b16 %v2482
    %v2580 = vunpack.c.l.b16 %v2483
    %v2581 = vunpack.c.h.b16 %v2483
    %v2582 = vunpack.c.l.b16 %v2484
    %v2583 = vunpack.c.h.b16 %v2484
    %v2584 = vunpack.c.l.b16 %v2485
    %v2585 = vunpack.c.h.b16 %v2485
    %v2586 = vunpack.c.l.b16 %v2486
    %v2587 = vunpack.c.h.b16 %v2486
    %v2588 = vunpack.c.l.b16 %v2487
    %v2589 = vunpack.c.h.b16 %v2487
    %v2590 = vunpack.c.l.b16 %v2488
    %v2591 = vunpack.c.h.b16 %v2488
    %v2592 = vunpack.c.l.b16 %v2489
    %v2593 = vunpack.c.h.b16 %v2489
    %v2594 = vunpack.c.l.b16 %v2490
    %v2595 = vunpack.c.h.b16 %v2490
    %v2596 = vunpack.c.l.b16 %v2491
    %v2597 = vunpack.c.h.b16 %v2491
    %v2598 = vunpack.c.l.b16 %v2492
    %v2599 = vunpack.c.h.b16 %v2492
    %v2600 = vunpack.c.l.b16 %v2493
    %v2601 = vunpack.c.h.b16 %v2493
    %v2602 = vunpack.c.l.b16 %v2494
    %v2603 = vunpack.c.h.b16 %v2494
    %v2604 = vunpack.c.l.b16 %v2495
    %v2605 = vunpack.c.h.b16 %v2495
    %v2606 = vunpack.c.l.b16 %v2496
    %v2607 = vunpack.c.h.b16 %v2496
    %v2608 = vunpack.c.l.b16 %v2497
    %v2609 = vunpack.c.h.b16 %v2497
    %v2610 = vunpack.c.l.b16 %v2498
    %v2611 = vunpack.c.h.b16 %v2498
    %v2612 = vunpack.c.l.b16 %v2499
    %v2613 = vunpack.c.h.b16 %v2499
    %v2614 = vpack.c.b16 %v2558, %v2550
    %v2615 = vpack.c.b16 %v2559, %v2551
    %v2616 = vpack.c.b16 %v2560, %v2552
    %v2617 = vpack.c.b16 %v2561, %v2553
    %v2618 = vpack.c.b16 %v2562, %v2554
    %v2619 = vpack.c.b16 %v2563, %v2555
    %v2620 = vpack.c.b16 %v2564, %v2556
    %v2621 = vpack.c.b16 %v2565, %v2557
    %v2622 = vpack.c.b16 %v2574, %v2566
    %v2623 = vpack.c.b16 %v2575, %v2567
    %v2624 = vpack.c.b16 %v2576, %v2568
    %v2625 = vpack.c.b16 %v2577, %v2569
    %v2626 = vpack.c.b16 %v2578, %v2570
    %v2627 = vpack.c.b16 %v2579, %v2571
    %v2628 = vpack.c.b16 %v2580, %v2572
    %v2629 = vpack.c.b16 %v2581, %v2573
    %v2630 = vpack.c.b16 %v2590, %v2582
    %v2631 = vpack.c.b16 %v2591, %v2583
    %v2632 = vpack.c.b16 %v2592, %v2584
    %v2633 = vpack.c.b16 %v2593, %v2585
    %v2634 = vpack.c.b16 %v2594, %v2586
    %v2635 = vpack.c.b16 %v2595, %v2587
    %v2636 = vpack.c.b16 %v2596, %v2588
    %v2637 = vpack.c.b16 %v2597, %v2589
    %v2638 = vpack.c.b16 %v2606, %v2598
    %v2639 = vpack.c.b16 %v2607, %v2599
    %v2640 = vpack.c.b16 %v2608, %v2600
    %v2641 = vpack.c.b16 %v2609, %v2601
    %v2642 = vpack.c.b16 %v2610, %v2602
    %v2643 = vpack.c.b16 %v2611, %v2603
    %v2644 = vpack.c.b16 %v2612, %v2604
    %v2645 = vpack.c.b16 %v2613, %v2605
    %v2679 = vsel %vm346, %v2467, 0
    %2681 = vmatpush.bf16.msra.mxu0 0
    %2682 = vmatpush.bf16.msra.mxu0 0
    %2683 = vmatpush.bf16.msra.mxu0 0
    %2684 = vmatpush.bf16.msra.mxu0 0
    %2685 = vmatpush.bf16.msra.mxu0 %v2638
    %2686 = vmatpush.bf16.msra.mxu0 %v2630
    %2687 = vmatpush.bf16.msra.mxu0 %v2622
    %2688 = vmatpush.bf16.msra.mxu0 %v2614
    %2689 = vmatmul.bf16.gmra.mxu0 %v2679
    %v2690 = vpop.f32.mrf.mxu0
    %v2691 = vadd.f32 %v2502, %v2690
    %v2692 = vpop.f32.mrf.mxu0
    %2693 = vdwg.mxu0
    %2694 = vmatpush.bf16.msra.mxu0 0
    %2695 = vmatpush.bf16.msra.mxu0 0
    %2696 = vmatpush.bf16.msra.mxu0 0
    %2697 = vmatpush.bf16.msra.mxu0 0
    %2698 = vmatpush.bf16.msra.mxu0 %v2639
    %2699 = vmatpush.bf16.msra.mxu0 %v2631
    %2700 = vmatpush.bf16.msra.mxu0 %v2623
    %2701 = vmatpush.bf16.msra.mxu0 %v2615
    %2702 = vmatmul.bf16.gmra.mxu0 %v2679
    %v2703 = vpop.f32.mrf.mxu0
    %v2704 = vadd.f32 %v2503, %v2703
    %v2705 = vpop.f32.mrf.mxu0
    %2706 = vdwg.mxu0
    %2707 = vmatpush.bf16.msra.mxu0 0
    %2708 = vmatpush.bf16.msra.mxu0 0
    %2709 = vmatpush.bf16.msra.mxu0 0
    %2710 = vmatpush.bf16.msra.mxu0 0
    %2711 = vmatpush.bf16.msra.mxu0 %v2640
    %2712 = vmatpush.bf16.msra.mxu0 %v2632
    %2713 = vmatpush.bf16.msra.mxu0 %v2624
    %2714 = vmatpush.bf16.msra.mxu0 %v2616
    %2715 = vmatmul.bf16.gmra.mxu0 %v2679
    %v2716 = vpop.f32.mrf.mxu0
    %v2717 = vadd.f32 %v2504, %v2716
    %v2718 = vpop.f32.mrf.mxu0
    %2719 = vdwg.mxu0
    %2720 = vmatpush.bf16.msra.mxu0 0
    %2721 = vmatpush.bf16.msra.mxu0 0
    %2722 = vmatpush.bf16.msra.mxu0 0
    %2723 = vmatpush.bf16.msra.mxu0 0
    %2724 = vmatpush.bf16.msra.mxu0 %v2641
    %2725 = vmatpush.bf16.msra.mxu0 %v2633
    %2726 = vmatpush.bf16.msra.mxu0 %v2625
    %2727 = vmatpush.bf16.msra.mxu0 %v2617
    %2728 = vmatmul.bf16.gmra.mxu0 %v2679
    %v2729 = vpop.f32.mrf.mxu0
    %v2730 = vadd.f32 %v2505, %v2729
    %v2731 = vpop.f32.mrf.mxu0
    %2732 = vdwg.mxu0
    %2733 = vmatpush.bf16.msra.mxu0 0
    %2734 = vmatpush.bf16.msra.mxu0 0
    %2735 = vmatpush.bf16.msra.mxu0 0
    %2736 = vmatpush.bf16.msra.mxu0 0
    %2737 = vmatpush.bf16.msra.mxu0 %v2642
    %2738 = vmatpush.bf16.msra.mxu0 %v2634
    %2739 = vmatpush.bf16.msra.mxu0 %v2626
    %2740 = vmatpush.bf16.msra.mxu0 %v2618
    %2741 = vmatmul.bf16.gmra.mxu0 %v2679
    %v2742 = vpop.f32.mrf.mxu0
    %v2743 = vadd.f32 %v2506, %v2742
    %v2744 = vpop.f32.mrf.mxu0
    %2745 = vdwg.mxu0
    %2746 = vmatpush.bf16.msra.mxu0 0
    %2747 = vmatpush.bf16.msra.mxu0 0
    %2748 = vmatpush.bf16.msra.mxu0 0
    %2749 = vmatpush.bf16.msra.mxu0 0
    %2750 = vmatpush.bf16.msra.mxu0 %v2643
    %2751 = vmatpush.bf16.msra.mxu0 %v2635
    %2752 = vmatpush.bf16.msra.mxu0 %v2627
    %2753 = vmatpush.bf16.msra.mxu0 %v2619
    %2754 = vmatmul.bf16.gmra.mxu0 %v2679
    %v2755 = vpop.f32.mrf.mxu0
    %v2756 = vadd.f32 %v2507, %v2755
    %v2757 = vpop.f32.mrf.mxu0
    %2758 = vdwg.mxu0
    %2759 = vmatpush.bf16.msra.mxu0 0
    %2760 = vmatpush.bf16.msra.mxu0 0
    %2761 = vmatpush.bf16.msra.mxu0 0
    %2762 = vmatpush.bf16.msra.mxu0 0
    %2763 = vmatpush.bf16.msra.mxu0 %v2644
    %2764 = vmatpush.bf16.msra.mxu0 %v2636
    %2765 = vmatpush.bf16.msra.mxu0 %v2628
    %2766 = vmatpush.bf16.msra.mxu0 %v2620
    %2767 = vmatmul.bf16.gmra.mxu0 %v2679
    %v2768 = vpop.f32.mrf.mxu0
    %v2769 = vadd.f32 %v2508, %v2768
    %v2770 = vpop.f32.mrf.mxu0
    %2771 = vdwg.mxu0
    %2772 = vmatpush.bf16.msra.mxu0 0
    %2773 = vmatpush.bf16.msra.mxu0 0
    %2774 = vmatpush.bf16.msra.mxu0 0
    %2775 = vmatpush.bf16.msra.mxu0 0
    %2776 = vmatpush.bf16.msra.mxu0 %v2645
    %2777 = vmatpush.bf16.msra.mxu0 %v2637
    %2778 = vmatpush.bf16.msra.mxu0 %v2629
    %2779 = vmatpush.bf16.msra.mxu0 %v2621
    %2780 = vmatmul.bf16.gmra.mxu0 %v2679
    %v2781 = vpop.f32.mrf.mxu0
    %v2782 = vadd.f32 %v2509, %v2781
    %v2783 = vpop.f32.mrf.mxu0
    %2784 = vdwg.mxu0
    %v2785 = vpack.c.bf16 %v2691, %v2691
    %v2786 = vpack.c.bf16 %v2704, %v2704
    %v2787 = vpack.c.bf16 %v2717, %v2717
    %v2788 = vpack.c.bf16 %v2730, %v2730
    %v2789 = vpack.c.bf16 %v2743, %v2743
    %v2790 = vpack.c.bf16 %v2756, %v2756
    %v2791 = vpack.c.bf16 %v2769, %v2769
    %v2792 = vpack.c.bf16 %v2782, %v2782
    %v2793 = vld [vmem:[#allocation2] sm:$0xff]
    %v2794 = vld [vmem:[#allocation2 + $0x8] sm:$0xff]
    %v2795 = vld [vmem:[#allocation2 + $0x10] sm:$0xff]
    %v2796 = vld [vmem:[#allocation2 + $0x18] sm:$0xff]
    %v2797 = vld [vmem:[#allocation2 + $0x20] sm:$0xff]
    %v2798 = vld [vmem:[#allocation2 + $0x28] sm:$0xff]
    %v2799 = vld [vmem:[#allocation2 + $0x30] sm:$0xff]
    %v2800 = vld [vmem:[#allocation2 + $0x38] sm:$0xff]
    %v2801 = vld [vmem:[#allocation2 + $0x40] sm:$0xff]
    %v2802 = vld [vmem:[#allocation2 + $0x48] sm:$0xff]
    %v2803 = vld [vmem:[#allocation2 + $0x50] sm:$0xff]
    %v2804 = vld [vmem:[#allocation2 + $0x58] sm:$0xff]
    %v2805 = vld [vmem:[#allocation2 + $0x60] sm:$0xff]
    %v2806 = vld [vmem:[#allocation2 + $0x68] sm:$0xff]
    %v2807 = vld [vmem:[#allocation2 + $0x70] sm:$0xff]
    %v2808 = vld [vmem:[#allocation2 + $0x78] sm:$0xff]
    %v2809 = vld [vmem:[#allocation2 + $0x80] sm:$0xff]
    %v2810 = vld [vmem:[#allocation2 + $0x88] sm:$0xff]
    %v2811 = vld [vmem:[#allocation2 + $0x90] sm:$0xff]
    %v2812 = vld [vmem:[#allocation2 + $0x98] sm:$0xff]
    %v2813 = vld [vmem:[#allocation2 + $0xa0] sm:$0xff]
    %v2814 = vld [vmem:[#allocation2 + $0xa8] sm:$0xff]
    %v2815 = vld [vmem:[#allocation2 + $0xb0] sm:$0xff]
    %v2816 = vld [vmem:[#allocation2 + $0xb8] sm:$0xff]
    %v2817 = vld [vmem:[#allocation2 + $0xc0] sm:$0xff]
    %v2818 = vld [vmem:[#allocation2 + $0xc8] sm:$0xff]
    %v2819 = vld [vmem:[#allocation2 + $0xd0] sm:$0xff]
    %v2820 = vld [vmem:[#allocation2 + $0xd8] sm:$0xff]
    %v2821 = vld [vmem:[#allocation2 + $0xe0] sm:$0xff]
    %v2822 = vld [vmem:[#allocation2 + $0xe8] sm:$0xff]
    %v2823 = vld [vmem:[#allocation2 + $0xf0] sm:$0xff]
    %v2824 = vld [vmem:[#allocation2 + $0xf8] sm:$0xff]
    %v2825 = vld [vmem:[#allocation2 + $0x100] sm:$0xff]
    %v2826 = vld [vmem:[#allocation2 + $0x108] sm:$0xff]
    %v2827 = vld [vmem:[#allocation2 + $0x110] sm:$0xff]
    %v2828 = vld [vmem:[#allocation2 + $0x118] sm:$0xff]
    %v2829 = vld [vmem:[#allocation2 + $0x120] sm:$0xff]
    %v2830 = vld [vmem:[#allocation2 + $0x128] sm:$0xff]
    %v2831 = vld [vmem:[#allocation2 + $0x130] sm:$0xff]
    %v2832 = vld [vmem:[#allocation2 + $0x138] sm:$0xff]
    %v2833 = vld [vmem:[#allocation2 + $0x140] sm:$0xff]
    %v2834 = vld [vmem:[#allocation2 + $0x148] sm:$0xff]
    %v2835 = vld [vmem:[#allocation2 + $0x150] sm:$0xff]
    %v2836 = vld [vmem:[#allocation2 + $0x158] sm:$0xff]
    %v2837 = vld [vmem:[#allocation2 + $0x160] sm:$0xff]
    %v2838 = vld [vmem:[#allocation2 + $0x168] sm:$0xff]
    %v2839 = vld [vmem:[#allocation2 + $0x170] sm:$0xff]
    %v2840 = vld [vmem:[#allocation2 + $0x178] sm:$0xff]
    %v2841 = vld [vmem:[#allocation2 + $0x180] sm:$0xff]
    %v2842 = vld [vmem:[#allocation2 + $0x188] sm:$0xff]
    %v2843 = vld [vmem:[#allocation2 + $0x190] sm:$0xff]
    %v2844 = vld [vmem:[#allocation2 + $0x198] sm:$0xff]
    %v2845 = vld [vmem:[#allocation2 + $0x1a0] sm:$0xff]
    %v2846 = vld [vmem:[#allocation2 + $0x1a8] sm:$0xff]
    %v2847 = vld [vmem:[#allocation2 + $0x1b0] sm:$0xff]
    %v2848 = vld [vmem:[#allocation2 + $0x1b8] sm:$0xff]
    %v2849 = vld [vmem:[#allocation2 + $0x1c0] sm:$0xff]
    %v2850 = vld [vmem:[#allocation2 + $0x1c8] sm:$0xff]
    %v2851 = vld [vmem:[#allocation2 + $0x1d0] sm:$0xff]
    %v2852 = vld [vmem:[#allocation2 + $0x1d8] sm:$0xff]
    %v2853 = vld [vmem:[#allocation2 + $0x1e0] sm:$0xff]
    %v2854 = vld [vmem:[#allocation2 + $0x1e8] sm:$0xff]
    %v2855 = vld [vmem:[#allocation2 + $0x1f0] sm:$0xff]
    %v2856 = vld [vmem:[#allocation2 + $0x1f8] sm:$0xff]
    %v2857 = vld [vmem:[#allocation2 + $0x200] sm:$0xff]
    %v2858 = vld [vmem:[#allocation2 + $0x208] sm:$0xff]
    %v2859 = vld [vmem:[#allocation2 + $0x210] sm:$0xff]
    %v2860 = vld [vmem:[#allocation2 + $0x218] sm:$0xff]
    %v2861 = vld [vmem:[#allocation2 + $0x220] sm:$0xff]
    %v2862 = vld [vmem:[#allocation2 + $0x228] sm:$0xff]
    %v2863 = vld [vmem:[#allocation2 + $0x230] sm:$0xff]
    %v2864 = vld [vmem:[#allocation2 + $0x238] sm:$0xff]
    %v2865 = vld [vmem:[#allocation2 + $0x240] sm:$0xff]
    %v2866 = vld [vmem:[#allocation2 + $0x248] sm:$0xff]
    %v2867 = vld [vmem:[#allocation2 + $0x250] sm:$0xff]
    %v2868 = vld [vmem:[#allocation2 + $0x258] sm:$0xff]
    %v2869 = vld [vmem:[#allocation2 + $0x260] sm:$0xff]
    %v2870 = vld [vmem:[#allocation2 + $0x268] sm:$0xff]
    %v2871 = vld [vmem:[#allocation2 + $0x270] sm:$0xff]
    %v2872 = vld [vmem:[#allocation2 + $0x278] sm:$0xff]
    %v2873 = vld [vmem:[#allocation2 + $0x280] sm:$0xff]
    %v2874 = vld [vmem:[#allocation2 + $0x288] sm:$0xff]
    %v2875 = vld [vmem:[#allocation2 + $0x290] sm:$0xff]
    %v2876 = vld [vmem:[#allocation2 + $0x298] sm:$0xff]
    %v2877 = vld [vmem:[#allocation2 + $0x2a0] sm:$0xff]
    %v2878 = vld [vmem:[#allocation2 + $0x2a8] sm:$0xff]
    %v2879 = vld [vmem:[#allocation2 + $0x2b0] sm:$0xff]
    %v2880 = vld [vmem:[#allocation2 + $0x2b8] sm:$0xff]
    %v2881 = vld [vmem:[#allocation2 + $0x2c0] sm:$0xff]
    %v2882 = vld [vmem:[#allocation2 + $0x2c8] sm:$0xff]
    %v2883 = vld [vmem:[#allocation2 + $0x2d0] sm:$0xff]
    %v2884 = vld [vmem:[#allocation2 + $0x2d8] sm:$0xff]
    %v2885 = vld [vmem:[#allocation2 + $0x2e0] sm:$0xff]
    %v2886 = vld [vmem:[#allocation2 + $0x2e8] sm:$0xff]
    %v2887 = vld [vmem:[#allocation2 + $0x2f0] sm:$0xff]
    %v2888 = vld [vmem:[#allocation2 + $0x2f8] sm:$0xff]
    %v2889 = vld [vmem:[#allocation2 + $0x300] sm:$0xff]
    %v2890 = vld [vmem:[#allocation2 + $0x308] sm:$0xff]
    %v2891 = vld [vmem:[#allocation2 + $0x310] sm:$0xff]
    %v2892 = vld [vmem:[#allocation2 + $0x318] sm:$0xff]
    %v2893 = vld [vmem:[#allocation2 + $0x320] sm:$0xff]
    %v2894 = vld [vmem:[#allocation2 + $0x328] sm:$0xff]
    %v2895 = vld [vmem:[#allocation2 + $0x330] sm:$0xff]
    %v2896 = vld [vmem:[#allocation2 + $0x338] sm:$0xff]
    %v2897 = vld [vmem:[#allocation2 + $0x340] sm:$0xff]
    %v2898 = vld [vmem:[#allocation2 + $0x348] sm:$0xff]
    %v2899 = vld [vmem:[#allocation2 + $0x350] sm:$0xff]
    %v2900 = vld [vmem:[#allocation2 + $0x358] sm:$0xff]
    %v2901 = vld [vmem:[#allocation2 + $0x360] sm:$0xff]
    %v2902 = vld [vmem:[#allocation2 + $0x368] sm:$0xff]
    %v2903 = vld [vmem:[#allocation2 + $0x370] sm:$0xff]
    %v2904 = vld [vmem:[#allocation2 + $0x378] sm:$0xff]
    %v2905 = vld [vmem:[#allocation2 + $0x380] sm:$0xff]
    %v2906 = vld [vmem:[#allocation2 + $0x388] sm:$0xff]
    %v2907 = vld [vmem:[#allocation2 + $0x390] sm:$0xff]
    %v2908 = vld [vmem:[#allocation2 + $0x398] sm:$0xff]
    %v2909 = vld [vmem:[#allocation2 + $0x3a0] sm:$0xff]
    %v2910 = vld [vmem:[#allocation2 + $0x3a8] sm:$0xff]
    %v2911 = vld [vmem:[#allocation2 + $0x3b0] sm:$0xff]
    %v2912 = vld [vmem:[#allocation2 + $0x3b8] sm:$0xff]
    %v2913 = vld [vmem:[#allocation2 + $0x3c0] sm:$0xff]
    %v2914 = vld [vmem:[#allocation2 + $0x3c8] sm:$0xff]
    %v2915 = vld [vmem:[#allocation2 + $0x3d0] sm:$0xff]
    %v2916 = vld [vmem:[#allocation2 + $0x3d8] sm:$0xff]
    %v2917 = vld [vmem:[#allocation2 + $0x3e0] sm:$0xff]
    %v2918 = vld [vmem:[#allocation2 + $0x3e8] sm:$0xff]
    %v2919 = vld [vmem:[#allocation2 + $0x3f0] sm:$0xff]
    %v2920 = vld [vmem:[#allocation2 + $0x3f8] sm:$0xff]
    %v2921 = vld [vmem:[#allocation2 + $0x400] sm:$0xff]
    %v2922 = vld [vmem:[#allocation2 + $0x408] sm:$0xff]
    %v2923 = vld [vmem:[#allocation2 + $0x410] sm:$0xff]
    %v2924 = vld [vmem:[#allocation2 + $0x418] sm:$0xff]
    %v2925 = vld [vmem:[#allocation2 + $0x420] sm:$0xff]
    %v2926 = vld [vmem:[#allocation2 + $0x428] sm:$0xff]
    %v2927 = vld [vmem:[#allocation2 + $0x430] sm:$0xff]
    %v2928 = vld [vmem:[#allocation2 + $0x438] sm:$0xff]
    %v2929 = vld [vmem:[#allocation2 + $0x440] sm:$0xff]
    %v2930 = vld [vmem:[#allocation2 + $0x448] sm:$0xff]
    %v2931 = vld [vmem:[#allocation2 + $0x450] sm:$0xff]
    %v2932 = vld [vmem:[#allocation2 + $0x458] sm:$0xff]
    %v2933 = vld [vmem:[#allocation2 + $0x460] sm:$0xff]
    %v2934 = vld [vmem:[#allocation2 + $0x468] sm:$0xff]
    %v2935 = vld [vmem:[#allocation2 + $0x470] sm:$0xff]
    %v2936 = vld [vmem:[#allocation2 + $0x478] sm:$0xff]
    %v2937 = vld [vmem:[#allocation2 + $0x480] sm:$0xff]
    %v2938 = vld [vmem:[#allocation2 + $0x488] sm:$0xff]
    %v2939 = vld [vmem:[#allocation2 + $0x490] sm:$0xff]
    %v2940 = vld [vmem:[#allocation2 + $0x498] sm:$0xff]
    %v2941 = vld [vmem:[#allocation2 + $0x4a0] sm:$0xff]
    %v2942 = vld [vmem:[#allocation2 + $0x4a8] sm:$0xff]
    %v2943 = vld [vmem:[#allocation2 + $0x4b0] sm:$0xff]
    %v2944 = vld [vmem:[#allocation2 + $0x4b8] sm:$0xff]
    %v2945 = vld [vmem:[#allocation2 + $0x4c0] sm:$0xff]
    %v2946 = vld [vmem:[#allocation2 + $0x4c8] sm:$0xff]
    %v2947 = vld [vmem:[#allocation2 + $0x4d0] sm:$0xff]
    %v2948 = vld [vmem:[#allocation2 + $0x4d8] sm:$0xff]
    %v2949 = vld [vmem:[#allocation2 + $0x4e0] sm:$0xff]
    %v2950 = vld [vmem:[#allocation2 + $0x4e8] sm:$0xff]
    %v2951 = vld [vmem:[#allocation2 + $0x4f0] sm:$0xff]
    %v2952 = vld [vmem:[#allocation2 + $0x4f8] sm:$0xff]
    %v2953 = vld [vmem:[#allocation2 + $0x500] sm:$0xff]
    %v2954 = vld [vmem:[#allocation2 + $0x508] sm:$0xff]
    %v2955 = vld [vmem:[#allocation2 + $0x510] sm:$0xff]
    %v2956 = vld [vmem:[#allocation2 + $0x518] sm:$0xff]
    %v2957 = vld [vmem:[#allocation2 + $0x520] sm:$0xff]
    %v2958 = vld [vmem:[#allocation2 + $0x528] sm:$0xff]
    %v2959 = vld [vmem:[#allocation2 + $0x530] sm:$0xff]
    %v2960 = vld [vmem:[#allocation2 + $0x538] sm:$0xff]
    %v2961 = vld [vmem:[#allocation2 + $0x540] sm:$0xff]
    %v2962 = vld [vmem:[#allocation2 + $0x548] sm:$0xff]
    %v2963 = vld [vmem:[#allocation2 + $0x550] sm:$0xff]
    %v2964 = vld [vmem:[#allocation2 + $0x558] sm:$0xff]
    %v2965 = vld [vmem:[#allocation2 + $0x560] sm:$0xff]
    %v2966 = vld [vmem:[#allocation2 + $0x568] sm:$0xff]
    %v2967 = vld [vmem:[#allocation2 + $0x570] sm:$0xff]
    %v2968 = vld [vmem:[#allocation2 + $0x578] sm:$0xff]
    %v2969 = vld [vmem:[#allocation2 + $0x580] sm:$0xff]
    %v2970 = vld [vmem:[#allocation2 + $0x588] sm:$0xff]
    %v2971 = vld [vmem:[#allocation2 + $0x590] sm:$0xff]
    %v2972 = vld [vmem:[#allocation2 + $0x598] sm:$0xff]
    %v2973 = vld [vmem:[#allocation2 + $0x5a0] sm:$0xff]
    %v2974 = vld [vmem:[#allocation2 + $0x5a8] sm:$0xff]
    %v2975 = vld [vmem:[#allocation2 + $0x5b0] sm:$0xff]
    %v2976 = vld [vmem:[#allocation2 + $0x5b8] sm:$0xff]
    %v2977 = vld [vmem:[#allocation2 + $0x5c0] sm:$0xff]
    %v2978 = vld [vmem:[#allocation2 + $0x5c8] sm:$0xff]
    %v2979 = vld [vmem:[#allocation2 + $0x5d0] sm:$0xff]
    %v2980 = vld [vmem:[#allocation2 + $0x5d8] sm:$0xff]
    %v2981 = vld [vmem:[#allocation2 + $0x5e0] sm:$0xff]
    %v2982 = vld [vmem:[#allocation2 + $0x5e8] sm:$0xff]
    %v2983 = vld [vmem:[#allocation2 + $0x5f0] sm:$0xff]
    %v2984 = vld [vmem:[#allocation2 + $0x5f8] sm:$0xff]
    %v2985 = vld [vmem:[#allocation2 + $0x600] sm:$0xff]
    %v2986 = vld [vmem:[#allocation2 + $0x608] sm:$0xff]
    %v2987 = vld [vmem:[#allocation2 + $0x610] sm:$0xff]
    %v2988 = vld [vmem:[#allocation2 + $0x618] sm:$0xff]
    %v2989 = vld [vmem:[#allocation2 + $0x620] sm:$0xff]
    %v2990 = vld [vmem:[#allocation2 + $0x628] sm:$0xff]
    %v2991 = vld [vmem:[#allocation2 + $0x630] sm:$0xff]
    %v2992 = vld [vmem:[#allocation2 + $0x638] sm:$0xff]
    %v2993 = vld [vmem:[#allocation2 + $0x640] sm:$0xff]
    %v2994 = vld [vmem:[#allocation2 + $0x648] sm:$0xff]
    %v2995 = vld [vmem:[#allocation2 + $0x650] sm:$0xff]
    %v2996 = vld [vmem:[#allocation2 + $0x658] sm:$0xff]
    %v2997 = vld [vmem:[#allocation2 + $0x660] sm:$0xff]
    %v2998 = vld [vmem:[#allocation2 + $0x668] sm:$0xff]
    %v2999 = vld [vmem:[#allocation2 + $0x670] sm:$0xff]
    %v3000 = vld [vmem:[#allocation2 + $0x678] sm:$0xff]
    %v3001 = vld [vmem:[#allocation2 + $0x680] sm:$0xff]
    %v3002 = vld [vmem:[#allocation2 + $0x688] sm:$0xff]
    %v3003 = vld [vmem:[#allocation2 + $0x690] sm:$0xff]
    %v3004 = vld [vmem:[#allocation2 + $0x698] sm:$0xff]
    %v3005 = vld [vmem:[#allocation2 + $0x6a0] sm:$0xff]
    %v3006 = vld [vmem:[#allocation2 + $0x6a8] sm:$0xff]
    %v3007 = vld [vmem:[#allocation2 + $0x6b0] sm:$0xff]
    %v3008 = vld [vmem:[#allocation2 + $0x6b8] sm:$0xff]
    %v3009 = vld [vmem:[#allocation2 + $0x6c0] sm:$0xff]
    %v3010 = vld [vmem:[#allocation2 + $0x6c8] sm:$0xff]
    %v3011 = vld [vmem:[#allocation2 + $0x6d0] sm:$0xff]
    %v3012 = vld [vmem:[#allocation2 + $0x6d8] sm:$0xff]
    %v3013 = vld [vmem:[#allocation2 + $0x6e0] sm:$0xff]
    %v3014 = vld [vmem:[#allocation2 + $0x6e8] sm:$0xff]
    %v3015 = vld [vmem:[#allocation2 + $0x6f0] sm:$0xff]
    %v3016 = vld [vmem:[#allocation2 + $0x6f8] sm:$0xff]
    %v3017 = vld [vmem:[#allocation2 + $0x700] sm:$0xff]
    %v3018 = vld [vmem:[#allocation2 + $0x708] sm:$0xff]
    %v3019 = vld [vmem:[#allocation2 + $0x710] sm:$0xff]
    %v3020 = vld [vmem:[#allocation2 + $0x718] sm:$0xff]
    %v3021 = vld [vmem:[#allocation2 + $0x720] sm:$0xff]
    %v3022 = vld [vmem:[#allocation2 + $0x728] sm:$0xff]
    %v3023 = vld [vmem:[#allocation2 + $0x730] sm:$0xff]
    %v3024 = vld [vmem:[#allocation2 + $0x738] sm:$0xff]
    %v3025 = vld [vmem:[#allocation2 + $0x740] sm:$0xff]
    %v3026 = vld [vmem:[#allocation2 + $0x748] sm:$0xff]
    %v3027 = vld [vmem:[#allocation2 + $0x750] sm:$0xff]
    %v3028 = vld [vmem:[#allocation2 + $0x758] sm:$0xff]
    %v3029 = vld [vmem:[#allocation2 + $0x760] sm:$0xff]
    %v3030 = vld [vmem:[#allocation2 + $0x768] sm:$0xff]
    %v3031 = vld [vmem:[#allocation2 + $0x770] sm:$0xff]
    %v3032 = vld [vmem:[#allocation2 + $0x778] sm:$0xff]
    %v3033 = vld [vmem:[#allocation2 + $0x780] sm:$0xff]
    %v3034 = vld [vmem:[#allocation2 + $0x788] sm:$0xff]
    %v3035 = vld [vmem:[#allocation2 + $0x790] sm:$0xff]
    %v3036 = vld [vmem:[#allocation2 + $0x798] sm:$0xff]
    %v3037 = vld [vmem:[#allocation2 + $0x7a0] sm:$0xff]
    %v3038 = vld [vmem:[#allocation2 + $0x7a8] sm:$0xff]
    %v3039 = vld [vmem:[#allocation2 + $0x7b0] sm:$0xff]
    %v3040 = vld [vmem:[#allocation2 + $0x7b8] sm:$0xff]
    %v3041 = vld [vmem:[#allocation2 + $0x7c0] sm:$0xff]
    %v3042 = vld [vmem:[#allocation2 + $0x7c8] sm:$0xff]
    %v3043 = vld [vmem:[#allocation2 + $0x7d0] sm:$0xff]
    %v3044 = vld [vmem:[#allocation2 + $0x7d8] sm:$0xff]
    %v3045 = vld [vmem:[#allocation2 + $0x7e0] sm:$0xff]
    %v3046 = vld [vmem:[#allocation2 + $0x7e8] sm:$0xff]
    %v3047 = vld [vmem:[#allocation2 + $0x7f0] sm:$0xff]
    %v3048 = vld [vmem:[#allocation2 + $0x7f8] sm:$0xff]
    %v3049 = vld [vmem:[%s21] sm:$0xf]
    %v3051 = vperm.slane %v3049, 0
    %v3052 = vperm.slane %v3049, 1
    %v3053 = vperm.slane %v3049, 2
    %v3054 = vperm.slane %v3049, 3
    %v3315 = vunpack.c.l.b16 %v2793
    %v3316 = vunpack.c.h.b16 %v2793
    %v3317 = vunpack.c.l.b16 %v2794
    %v3318 = vunpack.c.h.b16 %v2794
    %v3319 = vunpack.c.l.b16 %v2795
    %v3320 = vunpack.c.h.b16 %v2795
    %v3321 = vunpack.c.l.b16 %v2796
    %v3322 = vunpack.c.h.b16 %v2796
    %v3323 = vunpack.c.l.b16 %v2797
    %v3324 = vunpack.c.h.b16 %v2797
    %v3325 = vunpack.c.l.b16 %v2798
    %v3326 = vunpack.c.h.b16 %v2798
    %v3327 = vunpack.c.l.b16 %v2799
    %v3328 = vunpack.c.h.b16 %v2799
    %v3329 = vunpack.c.l.b16 %v2800
    %v3330 = vunpack.c.h.b16 %v2800
    %v3331 = vunpack.c.l.b16 %v2801
    %v3332 = vunpack.c.h.b16 %v2801
    %v3333 = vunpack.c.l.b16 %v2802
    %v3334 = vunpack.c.h.b16 %v2802
    %v3335 = vunpack.c.l.b16 %v2803
    %v3336 = vunpack.c.h.b16 %v2803
    %v3337 = vunpack.c.l.b16 %v2804
    %v3338 = vunpack.c.h.b16 %v2804
    %v3339 = vunpack.c.l.b16 %v2805
    %v3340 = vunpack.c.h.b16 %v2805
    %v3341 = vunpack.c.l.b16 %v2806
    %v3342 = vunpack.c.h.b16 %v2806
    %v3343 = vunpack.c.l.b16 %v2807
    %v3344 = vunpack.c.h.b16 %v2807
    %v3345 = vunpack.c.l.b16 %v2808
    %v3346 = vunpack.c.h.b16 %v2808
    %v3347 = vunpack.c.l.b16 %v2809
    %v3348 = vunpack.c.h.b16 %v2809
    %v3349 = vunpack.c.l.b16 %v2810
    %v3350 = vunpack.c.h.b16 %v2810
    %v3351 = vunpack.c.l.b16 %v2811
    %v3352 = vunpack.c.h.b16 %v2811
    %v3353 = vunpack.c.l.b16 %v2812
    %v3354 = vunpack.c.h.b16 %v2812
    %v3355 = vunpack.c.l.b16 %v2813
    %v3356 = vunpack.c.h.b16 %v2813
    %v3357 = vunpack.c.l.b16 %v2814
    %v3358 = vunpack.c.h.b16 %v2814
    %v3359 = vunpack.c.l.b16 %v2815
    %v3360 = vunpack.c.h.b16 %v2815
    %v3361 = vunpack.c.l.b16 %v2816
    %v3362 = vunpack.c.h.b16 %v2816
    %v3363 = vunpack.c.l.b16 %v2817
    %v3364 = vunpack.c.h.b16 %v2817
    %v3365 = vunpack.c.l.b16 %v2818
    %v3366 = vunpack.c.h.b16 %v2818
    %v3367 = vunpack.c.l.b16 %v2819
    %v3368 = vunpack.c.h.b16 %v2819
    %v3369 = vunpack.c.l.b16 %v2820
    %v3370 = vunpack.c.h.b16 %v2820
    %v3371 = vunpack.c.l.b16 %v2821
    %v3372 = vunpack.c.h.b16 %v2821
    %v3373 = vunpack.c.l.b16 %v2822
    %v3374 = vunpack.c.h.b16 %v2822
    %v3375 = vunpack.c.l.b16 %v2823
    %v3376 = vunpack.c.h.b16 %v2823
    %v3377 = vunpack.c.l.b16 %v2824
    %v3378 = vunpack.c.h.b16 %v2824
    %v3379 = vunpack.c.l.b16 %v2825
    %v3380 = vunpack.c.h.b16 %v2825
    %v3381 = vunpack.c.l.b16 %v2826
    %v3382 = vunpack.c.h.b16 %v2826
    %v3383 = vunpack.c.l.b16 %v2827
    %v3384 = vunpack.c.h.b16 %v2827
    %v3385 = vunpack.c.l.b16 %v2828
    %v3386 = vunpack.c.h.b16 %v2828
    %v3387 = vunpack.c.l.b16 %v2829
    %v3388 = vunpack.c.h.b16 %v2829
    %v3389 = vunpack.c.l.b16 %v2830
    %v3390 = vunpack.c.h.b16 %v2830
    %v3391 = vunpack.c.l.b16 %v2831
    %v3392 = vunpack.c.h.b16 %v2831
    %v3393 = vunpack.c.l.b16 %v2832
    %v3394 = vunpack.c.h.b16 %v2832
    %v3395 = vunpack.c.l.b16 %v2833
    %v3396 = vunpack.c.h.b16 %v2833
    %v3397 = vunpack.c.l.b16 %v2834
    %v3398 = vunpack.c.h.b16 %v2834
    %v3399 = vunpack.c.l.b16 %v2835
    %v3400 = vunpack.c.h.b16 %v2835
    %v3401 = vunpack.c.l.b16 %v2836
    %v3402 = vunpack.c.h.b16 %v2836
    %v3403 = vunpack.c.l.b16 %v2837
    %v3404 = vunpack.c.h.b16 %v2837
    %v3405 = vunpack.c.l.b16 %v2838
    %v3406 = vunpack.c.h.b16 %v2838
    %v3407 = vunpack.c.l.b16 %v2839
    %v3408 = vunpack.c.h.b16 %v2839
    %v3409 = vunpack.c.l.b16 %v2840
    %v3410 = vunpack.c.h.b16 %v2840
    %v3411 = vunpack.c.l.b16 %v2841
    %v3412 = vunpack.c.h.b16 %v2841
    %v3413 = vunpack.c.l.b16 %v2842
    %v3414 = vunpack.c.h.b16 %v2842
    %v3415 = vunpack.c.l.b16 %v2843
    %v3416 = vunpack.c.h.b16 %v2843
    %v3417 = vunpack.c.l.b16 %v2844
    %v3418 = vunpack.c.h.b16 %v2844
    %v3419 = vunpack.c.l.b16 %v2845
    %v3420 = vunpack.c.h.b16 %v2845
    %v3421 = vunpack.c.l.b16 %v2846
    %v3422 = vunpack.c.h.b16 %v2846
    %v3423 = vunpack.c.l.b16 %v2847
    %v3424 = vunpack.c.h.b16 %v2847
    %v3425 = vunpack.c.l.b16 %v2848
    %v3426 = vunpack.c.h.b16 %v2848
    %v3427 = vunpack.c.l.b16 %v2849
    %v3428 = vunpack.c.h.b16 %v2849
    %v3429 = vunpack.c.l.b16 %v2850
    %v3430 = vunpack.c.h.b16 %v2850
    %v3431 = vunpack.c.l.b16 %v2851
    %v3432 = vunpack.c.h.b16 %v2851
    %v3433 = vunpack.c.l.b16 %v2852
    %v3434 = vunpack.c.h.b16 %v2852
    %v3435 = vunpack.c.l.b16 %v2853
    %v3436 = vunpack.c.h.b16 %v2853
    %v3437 = vunpack.c.l.b16 %v2854
    %v3438 = vunpack.c.h.b16 %v2854
    %v3439 = vunpack.c.l.b16 %v2855
    %v3440 = vunpack.c.h.b16 %v2855
    %v3441 = vunpack.c.l.b16 %v2856
    %v3442 = vunpack.c.h.b16 %v2856
    %v3443 = vunpack.c.l.b16 %v2857
    %v3444 = vunpack.c.h.b16 %v2857
    %v3445 = vunpack.c.l.b16 %v2858
    %v3446 = vunpack.c.h.b16 %v2858
    %v3447 = vunpack.c.l.b16 %v2859
    %v3448 = vunpack.c.h.b16 %v2859
    %v3449 = vunpack.c.l.b16 %v2860
    %v3450 = vunpack.c.h.b16 %v2860
    %v3451 = vunpack.c.l.b16 %v2861
    %v3452 = vunpack.c.h.b16 %v2861
    %v3453 = vunpack.c.l.b16 %v2862
    %v3454 = vunpack.c.h.b16 %v2862
    %v3455 = vunpack.c.l.b16 %v2863
    %v3456 = vunpack.c.h.b16 %v2863
    %v3457 = vunpack.c.l.b16 %v2864
    %v3458 = vunpack.c.h.b16 %v2864
    %v3459 = vunpack.c.l.b16 %v2865
    %v3460 = vunpack.c.h.b16 %v2865
    %v3461 = vunpack.c.l.b16 %v2866
    %v3462 = vunpack.c.h.b16 %v2866
    %v3463 = vunpack.c.l.b16 %v2867
    %v3464 = vunpack.c.h.b16 %v2867
    %v3465 = vunpack.c.l.b16 %v2868
    %v3466 = vunpack.c.h.b16 %v2868
    %v3467 = vunpack.c.l.b16 %v2869
    %v3468 = vunpack.c.h.b16 %v2869
    %v3469 = vunpack.c.l.b16 %v2870
    %v3470 = vunpack.c.h.b16 %v2870
    %v3471 = vunpack.c.l.b16 %v2871
    %v3472 = vunpack.c.h.b16 %v2871
    %v3473 = vunpack.c.l.b16 %v2872
    %v3474 = vunpack.c.h.b16 %v2872
    %v3475 = vunpack.c.l.b16 %v2873
    %v3476 = vunpack.c.h.b16 %v2873
    %v3477 = vunpack.c.l.b16 %v2874
    %v3478 = vunpack.c.h.b16 %v2874
    %v3479 = vunpack.c.l.b16 %v2875
    %v3480 = vunpack.c.h.b16 %v2875
    %v3481 = vunpack.c.l.b16 %v2876
    %v3482 = vunpack.c.h.b16 %v2876
    %v3483 = vunpack.c.l.b16 %v2877
    %v3484 = vunpack.c.h.b16 %v2877
    %v3485 = vunpack.c.l.b16 %v2878
    %v3486 = vunpack.c.h.b16 %v2878
    %v3487 = vunpack.c.l.b16 %v2879
    %v3488 = vunpack.c.h.b16 %v2879
    %v3489 = vunpack.c.l.b16 %v2880
    %v3490 = vunpack.c.h.b16 %v2880
    %v3491 = vunpack.c.l.b16 %v2881
    %v3492 = vunpack.c.h.b16 %v2881
    %v3493 = vunpack.c.l.b16 %v2882
    %v3494 = vunpack.c.h.b16 %v2882
    %v3495 = vunpack.c.l.b16 %v2883
    %v3496 = vunpack.c.h.b16 %v2883
    %v3497 = vunpack.c.l.b16 %v2884
    %v3498 = vunpack.c.h.b16 %v2884
    %v3499 = vunpack.c.l.b16 %v2885
    %v3500 = vunpack.c.h.b16 %v2885
    %v3501 = vunpack.c.l.b16 %v2886
    %v3502 = vunpack.c.h.b16 %v2886
    %v3503 = vunpack.c.l.b16 %v2887
    %v3504 = vunpack.c.h.b16 %v2887
    %v3505 = vunpack.c.l.b16 %v2888
    %v3506 = vunpack.c.h.b16 %v2888
    %v3507 = vunpack.c.l.b16 %v2889
    %v3508 = vunpack.c.h.b16 %v2889
    %v3509 = vunpack.c.l.b16 %v2890
    %v3510 = vunpack.c.h.b16 %v2890
    %v3511 = vunpack.c.l.b16 %v2891
    %v3512 = vunpack.c.h.b16 %v2891
    %v3513 = vunpack.c.l.b16 %v2892
    %v3514 = vunpack.c.h.b16 %v2892
    %v3515 = vunpack.c.l.b16 %v2893
    %v3516 = vunpack.c.h.b16 %v2893
    %v3517 = vunpack.c.l.b16 %v2894
    %v3518 = vunpack.c.h.b16 %v2894
    %v3519 = vunpack.c.l.b16 %v2895
    %v3520 = vunpack.c.h.b16 %v2895
    %v3521 = vunpack.c.l.b16 %v2896
    %v3522 = vunpack.c.h.b16 %v2896
    %v3523 = vunpack.c.l.b16 %v2897
    %v3524 = vunpack.c.h.b16 %v2897
    %v3525 = vunpack.c.l.b16 %v2898
    %v3526 = vunpack.c.h.b16 %v2898
    %v3527 = vunpack.c.l.b16 %v2899
    %v3528 = vunpack.c.h.b16 %v2899
    %v3529 = vunpack.c.l.b16 %v2900
    %v3530 = vunpack.c.h.b16 %v2900
    %v3531 = vunpack.c.l.b16 %v2901
    %v3532 = vunpack.c.h.b16 %v2901
    %v3533 = vunpack.c.l.b16 %v2902
    %v3534 = vunpack.c.h.b16 %v2902
    %v3535 = vunpack.c.l.b16 %v2903
    %v3536 = vunpack.c.h.b16 %v2903
    %v3537 = vunpack.c.l.b16 %v2904
    %v3538 = vunpack.c.h.b16 %v2904
    %v3539 = vunpack.c.l.b16 %v2905
    %v3540 = vunpack.c.h.b16 %v2905
    %v3541 = vunpack.c.l.b16 %v2906
    %v3542 = vunpack.c.h.b16 %v2906
    %v3543 = vunpack.c.l.b16 %v2907
    %v3544 = vunpack.c.h.b16 %v2907
    %v3545 = vunpack.c.l.b16 %v2908
    %v3546 = vunpack.c.h.b16 %v2908
    %v3547 = vunpack.c.l.b16 %v2909
    %v3548 = vunpack.c.h.b16 %v2909
    %v3549 = vunpack.c.l.b16 %v2910
    %v3550 = vunpack.c.h.b16 %v2910
    %v3551 = vunpack.c.l.b16 %v2911
    %v3552 = vunpack.c.h.b16 %v2911
    %v3553 = vunpack.c.l.b16 %v2912
    %v3554 = vunpack.c.h.b16 %v2912
    %v3555 = vunpack.c.l.b16 %v2913
    %v3556 = vunpack.c.h.b16 %v2913
    %v3557 = vunpack.c.l.b16 %v2914
    %v3558 = vunpack.c.h.b16 %v2914
    %v3559 = vunpack.c.l.b16 %v2915
    %v3560 = vunpack.c.h.b16 %v2915
    %v3561 = vunpack.c.l.b16 %v2916
    %v3562 = vunpack.c.h.b16 %v2916
    %v3563 = vunpack.c.l.b16 %v2917
    %v3564 = vunpack.c.h.b16 %v2917
    %v3565 = vunpack.c.l.b16 %v2918
    %v3566 = vunpack.c.h.b16 %v2918
    %v3567 = vunpack.c.l.b16 %v2919
    %v3568 = vunpack.c.h.b16 %v2919
    %v3569 = vunpack.c.l.b16 %v2920
    %v3570 = vunpack.c.h.b16 %v2920
    %v3571 = vunpack.c.l.b16 %v2921
    %v3572 = vunpack.c.h.b16 %v2921
    %v3573 = vunpack.c.l.b16 %v2922
    %v3574 = vunpack.c.h.b16 %v2922
    %v3575 = vunpack.c.l.b16 %v2923
    %v3576 = vunpack.c.h.b16 %v2923
    %v3577 = vunpack.c.l.b16 %v2924
    %v3578 = vunpack.c.h.b16 %v2924
    %v3579 = vunpack.c.l.b16 %v2925
    %v3580 = vunpack.c.h.b16 %v2925
    %v3581 = vunpack.c.l.b16 %v2926
    %v3582 = vunpack.c.h.b16 %v2926
    %v3583 = vunpack.c.l.b16 %v2927
    %v3584 = vunpack.c.h.b16 %v2927
    %v3585 = vunpack.c.l.b16 %v2928
    %v3586 = vunpack.c.h.b16 %v2928
    %v3587 = vunpack.c.l.b16 %v2929
    %v3588 = vunpack.c.h.b16 %v2929
    %v3589 = vunpack.c.l.b16 %v2930
    %v3590 = vunpack.c.h.b16 %v2930
    %v3591 = vunpack.c.l.b16 %v2931
    %v3592 = vunpack.c.h.b16 %v2931
    %v3593 = vunpack.c.l.b16 %v2932
    %v3594 = vunpack.c.h.b16 %v2932
    %v3595 = vunpack.c.l.b16 %v2933
    %v3596 = vunpack.c.h.b16 %v2933
    %v3597 = vunpack.c.l.b16 %v2934
    %v3598 = vunpack.c.h.b16 %v2934
    %v3599 = vunpack.c.l.b16 %v2935
    %v3600 = vunpack.c.h.b16 %v2935
    %v3601 = vunpack.c.l.b16 %v2936
    %v3602 = vunpack.c.h.b16 %v2936
    %v3603 = vunpack.c.l.b16 %v2937
    %v3604 = vunpack.c.h.b16 %v2937
    %v3605 = vunpack.c.l.b16 %v2938
    %v3606 = vunpack.c.h.b16 %v2938
    %v3607 = vunpack.c.l.b16 %v2939
    %v3608 = vunpack.c.h.b16 %v2939
    %v3609 = vunpack.c.l.b16 %v2940
    %v3610 = vunpack.c.h.b16 %v2940
    %v3611 = vunpack.c.l.b16 %v2941
    %v3612 = vunpack.c.h.b16 %v2941
    %v3613 = vunpack.c.l.b16 %v2942
    %v3614 = vunpack.c.h.b16 %v2942
    %v3615 = vunpack.c.l.b16 %v2943
    %v3616 = vunpack.c.h.b16 %v2943
    %v3617 = vunpack.c.l.b16 %v2944
    %v3618 = vunpack.c.h.b16 %v2944
    %v3619 = vunpack.c.l.b16 %v2945
    %v3620 = vunpack.c.h.b16 %v2945
    %v3621 = vunpack.c.l.b16 %v2946
    %v3622 = vunpack.c.h.b16 %v2946
    %v3623 = vunpack.c.l.b16 %v2947
    %v3624 = vunpack.c.h.b16 %v2947
    %v3625 = vunpack.c.l.b16 %v2948
    %v3626 = vunpack.c.h.b16 %v2948
    %v3627 = vunpack.c.l.b16 %v2949
    %v3628 = vunpack.c.h.b16 %v2949
    %v3629 = vunpack.c.l.b16 %v2950
    %v3630 = vunpack.c.h.b16 %v2950
    %v3631 = vunpack.c.l.b16 %v2951
    %v3632 = vunpack.c.h.b16 %v2951
    %v3633 = vunpack.c.l.b16 %v2952
    %v3634 = vunpack.c.h.b16 %v2952
    %v3635 = vunpack.c.l.b16 %v2953
    %v3636 = vunpack.c.h.b16 %v2953
    %v3637 = vunpack.c.l.b16 %v2954
    %v3638 = vunpack.c.h.b16 %v2954
    %v3639 = vunpack.c.l.b16 %v2955
    %v3640 = vunpack.c.h.b16 %v2955
    %v3641 = vunpack.c.l.b16 %v2956
    %v3642 = vunpack.c.h.b16 %v2956
    %v3643 = vunpack.c.l.b16 %v2957
    %v3644 = vunpack.c.h.b16 %v2957
    %v3645 = vunpack.c.l.b16 %v2958
    %v3646 = vunpack.c.h.b16 %v2958
    %v3647 = vunpack.c.l.b16 %v2959
    %v3648 = vunpack.c.h.b16 %v2959
    %v3649 = vunpack.c.l.b16 %v2960
    %v3650 = vunpack.c.h.b16 %v2960
    %v3651 = vunpack.c.l.b16 %v2961
    %v3652 = vunpack.c.h.b16 %v2961
    %v3653 = vunpack.c.l.b16 %v2962
    %v3654 = vunpack.c.h.b16 %v2962
    %v3655 = vunpack.c.l.b16 %v2963
    %v3656 = vunpack.c.h.b16 %v2963
    %v3657 = vunpack.c.l.b16 %v2964
    %v3658 = vunpack.c.h.b16 %v2964
    %v3659 = vunpack.c.l.b16 %v2965
    %v3660 = vunpack.c.h.b16 %v2965
    %v3661 = vunpack.c.l.b16 %v2966
    %v3662 = vunpack.c.h.b16 %v2966
    %v3663 = vunpack.c.l.b16 %v2967
    %v3664 = vunpack.c.h.b16 %v2967
    %v3665 = vunpack.c.l.b16 %v2968
    %v3666 = vunpack.c.h.b16 %v2968
    %v3667 = vunpack.c.l.b16 %v2969
    %v3668 = vunpack.c.h.b16 %v2969
    %v3669 = vunpack.c.l.b16 %v2970
    %v3670 = vunpack.c.h.b16 %v2970
    %v3671 = vunpack.c.l.b16 %v2971
    %v3672 = vunpack.c.h.b16 %v2971
    %v3673 = vunpack.c.l.b16 %v2972
    %v3674 = vunpack.c.h.b16 %v2972
    %v3675 = vunpack.c.l.b16 %v2973
    %v3676 = vunpack.c.h.b16 %v2973
    %v3677 = vunpack.c.l.b16 %v2974
    %v3678 = vunpack.c.h.b16 %v2974
    %v3679 = vunpack.c.l.b16 %v2975
    %v3680 = vunpack.c.h.b16 %v2975
    %v3681 = vunpack.c.l.b16 %v2976
    %v3682 = vunpack.c.h.b16 %v2976
    %v3683 = vunpack.c.l.b16 %v2977
    %v3684 = vunpack.c.h.b16 %v2977
    %v3685 = vunpack.c.l.b16 %v2978
    %v3686 = vunpack.c.h.b16 %v2978
    %v3687 = vunpack.c.l.b16 %v2979
    %v3688 = vunpack.c.h.b16 %v2979
    %v3689 = vunpack.c.l.b16 %v2980
    %v3690 = vunpack.c.h.b16 %v2980
    %v3691 = vunpack.c.l.b16 %v2981
    %v3692 = vunpack.c.h.b16 %v2981
    %v3693 = vunpack.c.l.b16 %v2982
    %v3694 = vunpack.c.h.b16 %v2982
    %v3695 = vunpack.c.l.b16 %v2983
    %v3696 = vunpack.c.h.b16 %v2983
    %v3697 = vunpack.c.l.b16 %v2984
    %v3698 = vunpack.c.h.b16 %v2984
    %v3699 = vunpack.c.l.b16 %v2985
    %v3700 = vunpack.c.h.b16 %v2985
    %v3701 = vunpack.c.l.b16 %v2986
    %v3702 = vunpack.c.h.b16 %v2986
    %v3703 = vunpack.c.l.b16 %v2987
    %v3704 = vunpack.c.h.b16 %v2987
    %v3705 = vunpack.c.l.b16 %v2988
    %v3706 = vunpack.c.h.b16 %v2988
    %v3707 = vunpack.c.l.b16 %v2989
    %v3708 = vunpack.c.h.b16 %v2989
    %v3709 = vunpack.c.l.b16 %v2990
    %v3710 = vunpack.c.h.b16 %v2990
    %v3711 = vunpack.c.l.b16 %v2991
    %v3712 = vunpack.c.h.b16 %v2991
    %v3713 = vunpack.c.l.b16 %v2992
    %v3714 = vunpack.c.h.b16 %v2992
    %v3715 = vunpack.c.l.b16 %v2993
    %v3716 = vunpack.c.h.b16 %v2993
    %v3717 = vunpack.c.l.b16 %v2994
    %v3718 = vunpack.c.h.b16 %v2994
    %v3719 = vunpack.c.l.b16 %v2995
    %v3720 = vunpack.c.h.b16 %v2995
    %v3721 = vunpack.c.l.b16 %v2996
    %v3722 = vunpack.c.h.b16 %v2996
    %v3723 = vunpack.c.l.b16 %v2997
    %v3724 = vunpack.c.h.b16 %v2997
    %v3725 = vunpack.c.l.b16 %v2998
    %v3726 = vunpack.c.h.b16 %v2998
    %v3727 = vunpack.c.l.b16 %v2999
    %v3728 = vunpack.c.h.b16 %v2999
    %v3729 = vunpack.c.l.b16 %v3000
    %v3730 = vunpack.c.h.b16 %v3000
    %v3731 = vunpack.c.l.b16 %v3001
    %v3732 = vunpack.c.h.b16 %v3001
    %v3733 = vunpack.c.l.b16 %v3002
    %v3734 = vunpack.c.h.b16 %v3002
    %v3735 = vunpack.c.l.b16 %v3003
    %v3736 = vunpack.c.h.b16 %v3003
    %v3737 = vunpack.c.l.b16 %v3004
    %v3738 = vunpack.c.h.b16 %v3004
    %v3739 = vunpack.c.l.b16 %v3005
    %v3740 = vunpack.c.h.b16 %v3005
    %v3741 = vunpack.c.l.b16 %v3006
    %v3742 = vunpack.c.h.b16 %v3006
    %v3743 = vunpack.c.l.b16 %v3007
    %v3744 = vunpack.c.h.b16 %v3007
    %v3745 = vunpack.c.l.b16 %v3008
    %v3746 = vunpack.c.h.b16 %v3008
    %v3747 = vunpack.c.l.b16 %v3009
    %v3748 = vunpack.c.h.b16 %v3009
    %v3749 = vunpack.c.l.b16 %v3010
    %v3750 = vunpack.c.h.b16 %v3010
    %v3751 = vunpack.c.l.b16 %v3011
    %v3752 = vunpack.c.h.b16 %v3011
    %v3753 = vunpack.c.l.b16 %v3012
    %v3754 = vunpack.c.h.b16 %v3012
    %v3755 = vunpack.c.l.b16 %v3013
    %v3756 = vunpack.c.h.b16 %v3013
    %v3757 = vunpack.c.l.b16 %v3014
    %v3758 = vunpack.c.h.b16 %v3014
    %v3759 = vunpack.c.l.b16 %v3015
    %v3760 = vunpack.c.h.b16 %v3015
    %v3761 = vunpack.c.l.b16 %v3016
    %v3762 = vunpack.c.h.b16 %v3016
    %v3763 = vunpack.c.l.b16 %v3017
    %v3764 = vunpack.c.h.b16 %v3017
    %v3765 = vunpack.c.l.b16 %v3018
    %v3766 = vunpack.c.h.b16 %v3018
    %v3767 = vunpack.c.l.b16 %v3019
    %v3768 = vunpack.c.h.b16 %v3019
    %v3769 = vunpack.c.l.b16 %v3020
    %v3770 = vunpack.c.h.b16 %v3020
    %v3771 = vunpack.c.l.b16 %v3021
    %v3772 = vunpack.c.h.b16 %v3021
    %v3773 = vunpack.c.l.b16 %v3022
    %v3774 = vunpack.c.h.b16 %v3022
    %v3775 = vunpack.c.l.b16 %v3023
    %v3776 = vunpack.c.h.b16 %v3023
    %v3777 = vunpack.c.l.b16 %v3024
    %v3778 = vunpack.c.h.b16 %v3024
    %v3779 = vunpack.c.l.b16 %v3025
    %v3780 = vunpack.c.h.b16 %v3025
    %v3781 = vunpack.c.l.b16 %v3026
    %v3782 = vunpack.c.h.b16 %v3026
    %v3783 = vunpack.c.l.b16 %v3027
    %v3784 = vunpack.c.h.b16 %v3027
    %v3785 = vunpack.c.l.b16 %v3028
    %v3786 = vunpack.c.h.b16 %v3028
    %v3787 = vunpack.c.l.b16 %v3029
    %v3788 = vunpack.c.h.b16 %v3029
    %v3789 = vunpack.c.l.b16 %v3030
    %v3790 = vunpack.c.h.b16 %v3030
    %v3791 = vunpack.c.l.b16 %v3031
    %v3792 = vunpack.c.h.b16 %v3031
    %v3793 = vunpack.c.l.b16 %v3032
    %v3794 = vunpack.c.h.b16 %v3032
    %v3795 = vunpack.c.l.b16 %v3033
    %v3796 = vunpack.c.h.b16 %v3033
    %v3797 = vunpack.c.l.b16 %v3034
    %v3798 = vunpack.c.h.b16 %v3034
    %v3799 = vunpack.c.l.b16 %v3035
    %v3800 = vunpack.c.h.b16 %v3035
    %v3801 = vunpack.c.l.b16 %v3036
    %v3802 = vunpack.c.h.b16 %v3036
    %v3803 = vunpack.c.l.b16 %v3037
    %v3804 = vunpack.c.h.b16 %v3037
    %v3805 = vunpack.c.l.b16 %v3038
    %v3806 = vunpack.c.h.b16 %v3038
    %v3807 = vunpack.c.l.b16 %v3039
    %v3808 = vunpack.c.h.b16 %v3039
    %v3809 = vunpack.c.l.b16 %v3040
    %v3810 = vunpack.c.h.b16 %v3040
    %v3811 = vunpack.c.l.b16 %v3041
    %v3812 = vunpack.c.h.b16 %v3041
    %v3813 = vunpack.c.l.b16 %v3042
    %v3814 = vunpack.c.h.b16 %v3042
    %v3815 = vunpack.c.l.b16 %v3043
    %v3816 = vunpack.c.h.b16 %v3043
    %v3817 = vunpack.c.l.b16 %v3044
    %v3818 = vunpack.c.h.b16 %v3044
    %v3819 = vunpack.c.l.b16 %v3045
    %v3820 = vunpack.c.h.b16 %v3045
    %v3821 = vunpack.c.l.b16 %v3046
    %v3822 = vunpack.c.h.b16 %v3046
    %v3823 = vunpack.c.l.b16 %v3047
    %v3824 = vunpack.c.h.b16 %v3047
    %v3825 = vunpack.c.l.b16 %v3048
    %v3826 = vunpack.c.h.b16 %v3048
    %v3827 = vpack.c.b16 %v3319, %v3315
    %v3828 = vpack.c.b16 %v3320, %v3316
    %v3829 = vpack.c.b16 %v3321, %v3317
    %v3830 = vpack.c.b16 %v3322, %v3318
    %v3831 = vpack.c.b16 %v3327, %v3323
    %v3832 = vpack.c.b16 %v3328, %v3324
    %v3833 = vpack.c.b16 %v3329, %v3325
    %v3834 = vpack.c.b16 %v3330, %v3326
    %v3835 = vpack.c.b16 %v3335, %v3331
    %v3836 = vpack.c.b16 %v3336, %v3332
    %v3837 = vpack.c.b16 %v3337, %v3333
    %v3838 = vpack.c.b16 %v3338, %v3334
    %v3839 = vpack.c.b16 %v3343, %v3339
    %v3840 = vpack.c.b16 %v3344, %v3340
    %v3841 = vpack.c.b16 %v3345, %v3341
    %v3842 = vpack.c.b16 %v3346, %v3342
    %v3843 = vpack.c.b16 %v3351, %v3347
    %v3844 = vpack.c.b16 %v3352, %v3348
    %v3845 = vpack.c.b16 %v3353, %v3349
    %v3846 = vpack.c.b16 %v3354, %v3350
    %v3847 = vpack.c.b16 %v3359, %v3355
    %v3848 = vpack.c.b16 %v3360, %v3356
    %v3849 = vpack.c.b16 %v3361, %v3357
    %v3850 = vpack.c.b16 %v3362, %v3358
    %v3851 = vpack.c.b16 %v3367, %v3363
    %v3852 = vpack.c.b16 %v3368, %v3364
    %v3853 = vpack.c.b16 %v3369, %v3365
    %v3854 = vpack.c.b16 %v3370, %v3366
    %v3855 = vpack.c.b16 %v3375, %v3371
    %v3856 = vpack.c.b16 %v3376, %v3372
    %v3857 = vpack.c.b16 %v3377, %v3373
    %v3858 = vpack.c.b16 %v3378, %v3374
    %v3859 = vpack.c.b16 %v3383, %v3379
    %v3860 = vpack.c.b16 %v3384, %v3380
    %v3861 = vpack.c.b16 %v3385, %v3381
    %v3862 = vpack.c.b16 %v3386, %v3382
    %v3863 = vpack.c.b16 %v3391, %v3387
    %v3864 = vpack.c.b16 %v3392, %v3388
    %v3865 = vpack.c.b16 %v3393, %v3389
    %v3866 = vpack.c.b16 %v3394, %v3390
    %v3867 = vpack.c.b16 %v3399, %v3395
    %v3868 = vpack.c.b16 %v3400, %v3396
    %v3869 = vpack.c.b16 %v3401, %v3397
    %v3870 = vpack.c.b16 %v3402, %v3398
    %v3871 = vpack.c.b16 %v3407, %v3403
    %v3872 = vpack.c.b16 %v3408, %v3404
    %v3873 = vpack.c.b16 %v3409, %v3405
    %v3874 = vpack.c.b16 %v3410, %v3406
    %v3875 = vpack.c.b16 %v3415, %v3411
    %v3876 = vpack.c.b16 %v3416, %v3412
    %v3877 = vpack.c.b16 %v3417, %v3413
    %v3878 = vpack.c.b16 %v3418, %v3414
    %v3879 = vpack.c.b16 %v3423, %v3419
    %v3880 = vpack.c.b16 %v3424, %v3420
    %v3881 = vpack.c.b16 %v3425, %v3421
    %v3882 = vpack.c.b16 %v3426, %v3422
    %v3883 = vpack.c.b16 %v3431, %v3427
    %v3884 = vpack.c.b16 %v3432, %v3428
    %v3885 = vpack.c.b16 %v3433, %v3429
    %v3886 = vpack.c.b16 %v3434, %v3430
    %v3887 = vpack.c.b16 %v3439, %v3435
    %v3888 = vpack.c.b16 %v3440, %v3436
    %v3889 = vpack.c.b16 %v3441, %v3437
    %v3890 = vpack.c.b16 %v3442, %v3438
    %v3891 = vpack.c.b16 %v3447, %v3443
    %v3892 = vpack.c.b16 %v3448, %v3444
    %v3893 = vpack.c.b16 %v3449, %v3445
    %v3894 = vpack.c.b16 %v3450, %v3446
    %v3895 = vpack.c.b16 %v3455, %v3451
    %v3896 = vpack.c.b16 %v3456, %v3452
    %v3897 = vpack.c.b16 %v3457, %v3453
    %v3898 = vpack.c.b16 %v3458, %v3454
    %v3899 = vpack.c.b16 %v3463, %v3459
    %v3900 = vpack.c.b16 %v3464, %v3460
    %v3901 = vpack.c.b16 %v3465, %v3461
    %v3902 = vpack.c.b16 %v3466, %v3462
    %v3903 = vpack.c.b16 %v3471, %v3467
    %v3904 = vpack.c.b16 %v3472, %v3468
    %v3905 = vpack.c.b16 %v3473, %v3469
    %v3906 = vpack.c.b16 %v3474, %v3470
    %v3907 = vpack.c.b16 %v3479, %v3475
    %v3908 = vpack.c.b16 %v3480, %v3476
    %v3909 = vpack.c.b16 %v3481, %v3477
    %v3910 = vpack.c.b16 %v3482, %v3478
    %v3911 = vpack.c.b16 %v3487, %v3483
    %v3912 = vpack.c.b16 %v3488, %v3484
    %v3913 = vpack.c.b16 %v3489, %v3485
    %v3914 = vpack.c.b16 %v3490, %v3486
    %v3915 = vpack.c.b16 %v3495, %v3491
    %v3916 = vpack.c.b16 %v3496, %v3492
    %v3917 = vpack.c.b16 %v3497, %v3493
    %v3918 = vpack.c.b16 %v3498, %v3494
    %v3919 = vpack.c.b16 %v3503, %v3499
    %v3920 = vpack.c.b16 %v3504, %v3500
    %v3921 = vpack.c.b16 %v3505, %v3501
    %v3922 = vpack.c.b16 %v3506, %v3502
    %v3923 = vpack.c.b16 %v3511, %v3507
    %v3924 = vpack.c.b16 %v3512, %v3508
    %v3925 = vpack.c.b16 %v3513, %v3509
    %v3926 = vpack.c.b16 %v3514, %v3510
    %v3927 = vpack.c.b16 %v3519, %v3515
    %v3928 = vpack.c.b16 %v3520, %v3516
    %v3929 = vpack.c.b16 %v3521, %v3517
    %v3930 = vpack.c.b16 %v3522, %v3518
    %v3931 = vpack.c.b16 %v3527, %v3523
    %v3932 = vpack.c.b16 %v3528, %v3524
    %v3933 = vpack.c.b16 %v3529, %v3525
    %v3934 = vpack.c.b16 %v3530, %v3526
    %v3935 = vpack.c.b16 %v3535, %v3531
    %v3936 = vpack.c.b16 %v3536, %v3532
    %v3937 = vpack.c.b16 %v3537, %v3533
    %v3938 = vpack.c.b16 %v3538, %v3534
    %v3939 = vpack.c.b16 %v3543, %v3539
    %v3940 = vpack.c.b16 %v3544, %v3540
    %v3941 = vpack.c.b16 %v3545, %v3541
    %v3942 = vpack.c.b16 %v3546, %v3542
    %v3943 = vpack.c.b16 %v3551, %v3547
    %v3944 = vpack.c.b16 %v3552, %v3548
    %v3945 = vpack.c.b16 %v3553, %v3549
    %v3946 = vpack.c.b16 %v3554, %v3550
    %v3947 = vpack.c.b16 %v3559, %v3555
    %v3948 = vpack.c.b16 %v3560, %v3556
    %v3949 = vpack.c.b16 %v3561, %v3557
    %v3950 = vpack.c.b16 %v3562, %v3558
    %v3951 = vpack.c.b16 %v3567, %v3563
    %v3952 = vpack.c.b16 %v3568, %v3564
    %v3953 = vpack.c.b16 %v3569, %v3565
    %v3954 = vpack.c.b16 %v3570, %v3566
    %v3955 = vpack.c.b16 %v3575, %v3571
    %v3956 = vpack.c.b16 %v3576, %v3572
    %v3957 = vpack.c.b16 %v3577, %v3573
    %v3958 = vpack.c.b16 %v3578, %v3574
    %v3959 = vpack.c.b16 %v3583, %v3579
    %v3960 = vpack.c.b16 %v3584, %v3580
    %v3961 = vpack.c.b16 %v3585, %v3581
    %v3962 = vpack.c.b16 %v3586, %v3582
    %v3963 = vpack.c.b16 %v3591, %v3587
    %v3964 = vpack.c.b16 %v3592, %v3588
    %v3965 = vpack.c.b16 %v3593, %v3589
    %v3966 = vpack.c.b16 %v3594, %v3590
    %v3967 = vpack.c.b16 %v3599, %v3595
    %v3968 = vpack.c.b16 %v3600, %v3596
    %v3969 = vpack.c.b16 %v3601, %v3597
    %v3970 = vpack.c.b16 %v3602, %v3598
    %v3971 = vpack.c.b16 %v3607, %v3603
    %v3972 = vpack.c.b16 %v3608, %v3604
    %v3973 = vpack.c.b16 %v3609, %v3605
    %v3974 = vpack.c.b16 %v3610, %v3606
    %v3975 = vpack.c.b16 %v3615, %v3611
    %v3976 = vpack.c.b16 %v3616, %v3612
    %v3977 = vpack.c.b16 %v3617, %v3613
    %v3978 = vpack.c.b16 %v3618, %v3614
    %v3979 = vpack.c.b16 %v3623, %v3619
    %v3980 = vpack.c.b16 %v3624, %v3620
    %v3981 = vpack.c.b16 %v3625, %v3621
    %v3982 = vpack.c.b16 %v3626, %v3622
    %v3983 = vpack.c.b16 %v3631, %v3627
    %v3984 = vpack.c.b16 %v3632, %v3628
    %v3985 = vpack.c.b16 %v3633, %v3629
    %v3986 = vpack.c.b16 %v3634, %v3630
    %v3987 = vpack.c.b16 %v3639, %v3635
    %v3988 = vpack.c.b16 %v3640, %v3636
    %v3989 = vpack.c.b16 %v3641, %v3637
    %v3990 = vpack.c.b16 %v3642, %v3638
    %v3991 = vpack.c.b16 %v3647, %v3643
    %v3992 = vpack.c.b16 %v3648, %v3644
    %v3993 = vpack.c.b16 %v3649, %v3645
    %v3994 = vpack.c.b16 %v3650, %v3646
    %v3995 = vpack.c.b16 %v3655, %v3651
    %v3996 = vpack.c.b16 %v3656, %v3652
    %v3997 = vpack.c.b16 %v3657, %v3653
    %v3998 = vpack.c.b16 %v3658, %v3654
    %v3999 = vpack.c.b16 %v3663, %v3659
    %v4000 = vpack.c.b16 %v3664, %v3660
    %v4001 = vpack.c.b16 %v3665, %v3661
    %v4002 = vpack.c.b16 %v3666, %v3662
    %v4003 = vpack.c.b16 %v3671, %v3667
    %v4004 = vpack.c.b16 %v3672, %v3668
    %v4005 = vpack.c.b16 %v3673, %v3669
    %v4006 = vpack.c.b16 %v3674, %v3670
    %v4007 = vpack.c.b16 %v3679, %v3675
    %v4008 = vpack.c.b16 %v3680, %v3676
    %v4009 = vpack.c.b16 %v3681, %v3677
    %v4010 = vpack.c.b16 %v3682, %v3678
    %v4011 = vpack.c.b16 %v3687, %v3683
    %v4012 = vpack.c.b16 %v3688, %v3684
    %v4013 = vpack.c.b16 %v3689, %v3685
    %v4014 = vpack.c.b16 %v3690, %v3686
    %v4015 = vpack.c.b16 %v3695, %v3691
    %v4016 = vpack.c.b16 %v3696, %v3692
    %v4017 = vpack.c.b16 %v3697, %v3693
    %v4018 = vpack.c.b16 %v3698, %v3694
    %v4019 = vpack.c.b16 %v3703, %v3699
    %v4020 = vpack.c.b16 %v3704, %v3700
    %v4021 = vpack.c.b16 %v3705, %v3701
    %v4022 = vpack.c.b16 %v3706, %v3702
    %v4023 = vpack.c.b16 %v3711, %v3707
    %v4024 = vpack.c.b16 %v3712, %v3708
    %v4025 = vpack.c.b16 %v3713, %v3709
    %v4026 = vpack.c.b16 %v3714, %v3710
    %v4027 = vpack.c.b16 %v3719, %v3715
    %v4028 = vpack.c.b16 %v3720, %v3716
    %v4029 = vpack.c.b16 %v3721, %v3717
    %v4030 = vpack.c.b16 %v3722, %v3718
    %v4031 = vpack.c.b16 %v3727, %v3723
    %v4032 = vpack.c.b16 %v3728, %v3724
    %v4033 = vpack.c.b16 %v3729, %v3725
    %v4034 = vpack.c.b16 %v3730, %v3726
    %v4035 = vpack.c.b16 %v3735, %v3731
    %v4036 = vpack.c.b16 %v3736, %v3732
    %v4037 = vpack.c.b16 %v3737, %v3733
    %v4038 = vpack.c.b16 %v3738, %v3734
    %v4039 = vpack.c.b16 %v3743, %v3739
    %v4040 = vpack.c.b16 %v3744, %v3740
    %v4041 = vpack.c.b16 %v3745, %v3741
    %v4042 = vpack.c.b16 %v3746, %v3742
    %v4043 = vpack.c.b16 %v3751, %v3747
    %v4044 = vpack.c.b16 %v3752, %v3748
    %v4045 = vpack.c.b16 %v3753, %v3749
    %v4046 = vpack.c.b16 %v3754, %v3750
    %v4047 = vpack.c.b16 %v3759, %v3755
    %v4048 = vpack.c.b16 %v3760, %v3756
    %v4049 = vpack.c.b16 %v3761, %v3757
    %v4050 = vpack.c.b16 %v3762, %v3758
    %v4051 = vpack.c.b16 %v3767, %v3763
    %v4052 = vpack.c.b16 %v3768, %v3764
    %v4053 = vpack.c.b16 %v3769, %v3765
    %v4054 = vpack.c.b16 %v3770, %v3766
    %v4055 = vpack.c.b16 %v3775, %v3771
    %v4056 = vpack.c.b16 %v3776, %v3772
    %v4057 = vpack.c.b16 %v3777, %v3773
    %v4058 = vpack.c.b16 %v3778, %v3774
    %v4059 = vpack.c.b16 %v3783, %v3779
    %v4060 = vpack.c.b16 %v3784, %v3780
    %v4061 = vpack.c.b16 %v3785, %v3781
    %v4062 = vpack.c.b16 %v3786, %v3782
    %v4063 = vpack.c.b16 %v3791, %v3787
    %v4064 = vpack.c.b16 %v3792, %v3788
    %v4065 = vpack.c.b16 %v3793, %v3789
    %v4066 = vpack.c.b16 %v3794, %v3790
    %v4067 = vpack.c.b16 %v3799, %v3795
    %v4068 = vpack.c.b16 %v3800, %v3796
    %v4069 = vpack.c.b16 %v3801, %v3797
    %v4070 = vpack.c.b16 %v3802, %v3798
    %v4071 = vpack.c.b16 %v3807, %v3803
    %v4072 = vpack.c.b16 %v3808, %v3804
    %v4073 = vpack.c.b16 %v3809, %v3805
    %v4074 = vpack.c.b16 %v3810, %v3806
    %v4075 = vpack.c.b16 %v3815, %v3811
    %v4076 = vpack.c.b16 %v3816, %v3812
    %v4077 = vpack.c.b16 %v3817, %v3813
    %v4078 = vpack.c.b16 %v3818, %v3814
    %v4079 = vpack.c.b16 %v3823, %v3819
    %v4080 = vpack.c.b16 %v3824, %v3820
    %v4081 = vpack.c.b16 %v3825, %v3821
    %v4082 = vpack.c.b16 %v3826, %v3822
    %4339 = vmatpush.bf16.msra.mxu0 %v3855
    %4340 = vmatpush.bf16.msra.mxu0 %v3851
    %4341 = vmatpush.bf16.msra.mxu0 %v3847
    %4342 = vmatpush.bf16.msra.mxu0 %v3843
    %4343 = vmatpush.bf16.msra.mxu0 %v3839
    %4344 = vmatpush.bf16.msra.mxu0 %v3835
    %4345 = vmatpush.bf16.msra.mxu0 %v3831
    %4346 = vmatpush.bf16.msra.mxu0 %v3827
    %4347 = vmatmul.bf16.gmra.mxu0 %v2785
    %v4348 = vpop.f32.mrf.mxu0
    %v4349 = vadd.f32 %v3051, %v4348
    %v4350 = vpop.f32.mrf.mxu0
    %4351 = vdwg.mxu0
    %4352 = vmatpush.bf16.msra.mxu0 %v3887
    %4353 = vmatpush.bf16.msra.mxu0 %v3883
    %4354 = vmatpush.bf16.msra.mxu0 %v3879
    %4355 = vmatpush.bf16.msra.mxu0 %v3875
    %4356 = vmatpush.bf16.msra.mxu0 %v3871
    %4357 = vmatpush.bf16.msra.mxu0 %v3867
    %4358 = vmatpush.bf16.msra.mxu0 %v3863
    %4359 = vmatpush.bf16.msra.mxu0 %v3859
    %4360 = vmatmul.bf16.gmra.mxu0 %v2786
    %v4361 = vpop.f32.mrf.mxu0
    %v4362 = vadd.f32 %v4349, %v4361
    %v4363 = vpop.f32.mrf.mxu0
    %4364 = vdwg.mxu0
    %4365 = vmatpush.bf16.msra.mxu0 %v3919
    %4366 = vmatpush.bf16.msra.mxu0 %v3915
    %4367 = vmatpush.bf16.msra.mxu0 %v3911
    %4368 = vmatpush.bf16.msra.mxu0 %v3907
    %4369 = vmatpush.bf16.msra.mxu0 %v3903
    %4370 = vmatpush.bf16.msra.mxu0 %v3899
    %4371 = vmatpush.bf16.msra.mxu0 %v3895
    %4372 = vmatpush.bf16.msra.mxu0 %v3891
    %4373 = vmatmul.bf16.gmra.mxu0 %v2787
    %v4374 = vpop.f32.mrf.mxu0
    %v4375 = vadd.f32 %v4362, %v4374
    %v4376 = vpop.f32.mrf.mxu0
    %4377 = vdwg.mxu0
    %4378 = vmatpush.bf16.msra.mxu0 %v3951
    %4379 = vmatpush.bf16.msra.mxu0 %v3947
    %4380 = vmatpush.bf16.msra.mxu0 %v3943
    %4381 = vmatpush.bf16.msra.mxu0 %v3939
    %4382 = vmatpush.bf16.msra.mxu0 %v3935
    %4383 = vmatpush.bf16.msra.mxu0 %v3931
    %4384 = vmatpush.bf16.msra.mxu0 %v3927
    %4385 = vmatpush.bf16.msra.mxu0 %v3923
    %4386 = vmatmul.bf16.gmra.mxu0 %v2788
    %v4387 = vpop.f32.mrf.mxu0
    %v4388 = vadd.f32 %v4375, %v4387
    %v4389 = vpop.f32.mrf.mxu0
    %4390 = vdwg.mxu0
    %4391 = vmatpush.bf16.msra.mxu0 %v3983
    %4392 = vmatpush.bf16.msra.mxu0 %v3979
    %4393 = vmatpush.bf16.msra.mxu0 %v3975
    %4394 = vmatpush.bf16.msra.mxu0 %v3971
    %4395 = vmatpush.bf16.msra.mxu0 %v3967
    %4396 = vmatpush.bf16.msra.mxu0 %v3963
    %4397 = vmatpush.bf16.msra.mxu0 %v3959
    %4398 = vmatpush.bf16.msra.mxu0 %v3955
    %4399 = vmatmul.bf16.gmra.mxu0 %v2789
    %v4400 = vpop.f32.mrf.mxu0
    %v4401 = vadd.f32 %v4388, %v4400
    %v4402 = vpop.f32.mrf.mxu0
    %4403 = vdwg.mxu0
    %4404 = vmatpush.bf16.msra.mxu0 %v4015
    %4405 = vmatpush.bf16.msra.mxu0 %v4011
    %4406 = vmatpush.bf16.msra.mxu0 %v4007
    %4407 = vmatpush.bf16.msra.mxu0 %v4003
    %4408 = vmatpush.bf16.msra.mxu0 %v3999
    %4409 = vmatpush.bf16.msra.mxu0 %v3995
    %4410 = vmatpush.bf16.msra.mxu0 %v3991
    %4411 = vmatpush.bf16.msra.mxu0 %v3987
    %4412 = vmatmul.bf16.gmra.mxu0 %v2790
    %v4413 = vpop.f32.mrf.mxu0
    %v4414 = vadd.f32 %v4401, %v4413
    %v4415 = vpop.f32.mrf.mxu0
    %4416 = vdwg.mxu0
    %4417 = vmatpush.bf16.msra.mxu0 %v4047
    %4418 = vmatpush.bf16.msra.mxu0 %v4043
    %4419 = vmatpush.bf16.msra.mxu0 %v4039
    %4420 = vmatpush.bf16.msra.mxu0 %v4035
    %4421 = vmatpush.bf16.msra.mxu0 %v4031
    %4422 = vmatpush.bf16.msra.mxu0 %v4027
    %4423 = vmatpush.bf16.msra.mxu0 %v4023
    %4424 = vmatpush.bf16.msra.mxu0 %v4019
    %4425 = vmatmul.bf16.gmra.mxu0 %v2791
    %v4426 = vpop.f32.mrf.mxu0
    %v4427 = vadd.f32 %v4414, %v4426
    %v4428 = vpop.f32.mrf.mxu0
    %4429 = vdwg.mxu0
    %4430 = vmatpush.bf16.msra.mxu0 %v4079
    %4431 = vmatpush.bf16.msra.mxu0 %v4075
    %4432 = vmatpush.bf16.msra.mxu0 %v4071
    %4433 = vmatpush.bf16.msra.mxu0 %v4067
    %4434 = vmatpush.bf16.msra.mxu0 %v4063
    %4435 = vmatpush.bf16.msra.mxu0 %v4059
    %4436 = vmatpush.bf16.msra.mxu0 %v4055
    %4437 = vmatpush.bf16.msra.mxu0 %v4051
    %4438 = vmatmul.bf16.gmra.mxu0 %v2792
    %v4439 = vpop.f32.mrf.mxu0
    %v4440 = vadd.f32 %v4427, %v4439
    %v4441 = vpop.f32.mrf.mxu0
    %4442 = vdwg.mxu0
    %4443 = vmatpush.bf16.msra.mxu0 %v3856
    %4444 = vmatpush.bf16.msra.mxu0 %v3852
    %4445 = vmatpush.bf16.msra.mxu0 %v3848
    %4446 = vmatpush.bf16.msra.mxu0 %v3844
    %4447 = vmatpush.bf16.msra.mxu0 %v3840
    %4448 = vmatpush.bf16.msra.mxu0 %v3836
    %4449 = vmatpush.bf16.msra.mxu0 %v3832
    %4450 = vmatpush.bf16.msra.mxu0 %v3828
    %4451 = vmatmul.bf16.gmra.mxu0 %v2785
    %v4452 = vpop.f32.mrf.mxu0
    %v4453 = vadd.f32 %v3052, %v4452
    %v4454 = vpop.f32.mrf.mxu0
    %4455 = vdwg.mxu0
    %4456 = vmatpush.bf16.msra.mxu0 %v3888
    %4457 = vmatpush.bf16.msra.mxu0 %v3884
    %4458 = vmatpush.bf16.msra.mxu0 %v3880
    %4459 = vmatpush.bf16.msra.mxu0 %v3876
    %4460 = vmatpush.bf16.msra.mxu0 %v3872
    %4461 = vmatpush.bf16.msra.mxu0 %v3868
    %4462 = vmatpush.bf16.msra.mxu0 %v3864
    %4463 = vmatpush.bf16.msra.mxu0 %v3860
    %4464 = vmatmul.bf16.gmra.mxu0 %v2786
    %v4465 = vpop.f32.mrf.mxu0
    %v4466 = vadd.f32 %v4453, %v4465
    %v4467 = vpop.f32.mrf.mxu0
    %4468 = vdwg.mxu0
    %4469 = vmatpush.bf16.msra.mxu0 %v3920
    %4470 = vmatpush.bf16.msra.mxu0 %v3916
    %4471 = vmatpush.bf16.msra.mxu0 %v3912
    %4472 = vmatpush.bf16.msra.mxu0 %v3908
    %4473 = vmatpush.bf16.msra.mxu0 %v3904
    %4474 = vmatpush.bf16.msra.mxu0 %v3900
    %4475 = vmatpush.bf16.msra.mxu0 %v3896
    %4476 = vmatpush.bf16.msra.mxu0 %v3892
    %4477 = vmatmul.bf16.gmra.mxu0 %v2787
    %v4478 = vpop.f32.mrf.mxu0
    %v4479 = vadd.f32 %v4466, %v4478
    %v4480 = vpop.f32.mrf.mxu0
    %4481 = vdwg.mxu0
    %4482 = vmatpush.bf16.msra.mxu0 %v3952
    %4483 = vmatpush.bf16.msra.mxu0 %v3948
    %4484 = vmatpush.bf16.msra.mxu0 %v3944
    %4485 = vmatpush.bf16.msra.mxu0 %v3940
    %4486 = vmatpush.bf16.msra.mxu0 %v3936
    %4487 = vmatpush.bf16.msra.mxu0 %v3932
    %4488 = vmatpush.bf16.msra.mxu0 %v3928
    %4489 = vmatpush.bf16.msra.mxu0 %v3924
    %4490 = vmatmul.bf16.gmra.mxu0 %v2788
    %v4491 = vpop.f32.mrf.mxu0
    %v4492 = vadd.f32 %v4479, %v4491
    %v4493 = vpop.f32.mrf.mxu0
    %4494 = vdwg.mxu0
    %4495 = vmatpush.bf16.msra.mxu0 %v3984
    %4496 = vmatpush.bf16.msra.mxu0 %v3980
    %4497 = vmatpush.bf16.msra.mxu0 %v3976
    %4498 = vmatpush.bf16.msra.mxu0 %v3972
    %4499 = vmatpush.bf16.msra.mxu0 %v3968
    %4500 = vmatpush.bf16.msra.mxu0 %v3964
    %4501 = vmatpush.bf16.msra.mxu0 %v3960
    %4502 = vmatpush.bf16.msra.mxu0 %v3956
    %4503 = vmatmul.bf16.gmra.mxu0 %v2789
    %v4504 = vpop.f32.mrf.mxu0
    %v4505 = vadd.f32 %v4492, %v4504
    %v4506 = vpop.f32.mrf.mxu0
    %4507 = vdwg.mxu0
    %4508 = vmatpush.bf16.msra.mxu0 %v4016
    %4509 = vmatpush.bf16.msra.mxu0 %v4012
    %4510 = vmatpush.bf16.msra.mxu0 %v4008
    %4511 = vmatpush.bf16.msra.mxu0 %v4004
    %4512 = vmatpush.bf16.msra.mxu0 %v4000
    %4513 = vmatpush.bf16.msra.mxu0 %v3996
    %4514 = vmatpush.bf16.msra.mxu0 %v3992
    %4515 = vmatpush.bf16.msra.mxu0 %v3988
    %4516 = vmatmul.bf16.gmra.mxu0 %v2790
    %v4517 = vpop.f32.mrf.mxu0
    %v4518 = vadd.f32 %v4505, %v4517
    %v4519 = vpop.f32.mrf.mxu0
    %4520 = vdwg.mxu0
    %4521 = vmatpush.bf16.msra.mxu0 %v4048
    %4522 = vmatpush.bf16.msra.mxu0 %v4044
    %4523 = vmatpush.bf16.msra.mxu0 %v4040
    %4524 = vmatpush.bf16.msra.mxu0 %v4036
    %4525 = vmatpush.bf16.msra.mxu0 %v4032
    %4526 = vmatpush.bf16.msra.mxu0 %v4028
    %4527 = vmatpush.bf16.msra.mxu0 %v4024
    %4528 = vmatpush.bf16.msra.mxu0 %v4020
    %4529 = vmatmul.bf16.gmra.mxu0 %v2791
    %v4530 = vpop.f32.mrf.mxu0
    %v4531 = vadd.f32 %v4518, %v4530
    %v4532 = vpop.f32.mrf.mxu0
    %4533 = vdwg.mxu0
    %4534 = vmatpush.bf16.msra.mxu0 %v4080
    %4535 = vmatpush.bf16.msra.mxu0 %v4076
    %4536 = vmatpush.bf16.msra.mxu0 %v4072
    %4537 = vmatpush.bf16.msra.mxu0 %v4068
    %4538 = vmatpush.bf16.msra.mxu0 %v4064
    %4539 = vmatpush.bf16.msra.mxu0 %v4060
    %4540 = vmatpush.bf16.msra.mxu0 %v4056
    %4541 = vmatpush.bf16.msra.mxu0 %v4052
    %4542 = vmatmul.bf16.gmra.mxu0 %v2792
    %v4543 = vpop.f32.mrf.mxu0
    %v4544 = vadd.f32 %v4531, %v4543
    %v4545 = vpop.f32.mrf.mxu0
    %4546 = vdwg.mxu0
    %4547 = vmatpush.bf16.msra.mxu0 %v3857
    %4548 = vmatpush.bf16.msra.mxu0 %v3853
    %4549 = vmatpush.bf16.msra.mxu0 %v3849
    %4550 = vmatpush.bf16.msra.mxu0 %v3845
    %4551 = vmatpush.bf16.msra.mxu0 %v3841
    %4552 = vmatpush.bf16.msra.mxu0 %v3837
    %4553 = vmatpush.bf16.msra.mxu0 %v3833
    %4554 = vmatpush.bf16.msra.mxu0 %v3829
    %4555 = vmatmul.bf16.gmra.mxu0 %v2785
    %v4556 = vpop.f32.mrf.mxu0
    %v4557 = vadd.f32 %v3053, %v4556
    %v4558 = vpop.f32.mrf.mxu0
    %4559 = vdwg.mxu0
    %4560 = vmatpush.bf16.msra.mxu0 %v3889
    %4561 = vmatpush.bf16.msra.mxu0 %v3885
    %4562 = vmatpush.bf16.msra.mxu0 %v3881
    %4563 = vmatpush.bf16.msra.mxu0 %v3877
    %4564 = vmatpush.bf16.msra.mxu0 %v3873
    %4565 = vmatpush.bf16.msra.mxu0 %v3869
    %4566 = vmatpush.bf16.msra.mxu0 %v3865
    %4567 = vmatpush.bf16.msra.mxu0 %v3861
    %4568 = vmatmul.bf16.gmra.mxu0 %v2786
    %v4569 = vpop.f32.mrf.mxu0
    %v4570 = vadd.f32 %v4557, %v4569
    %v4571 = vpop.f32.mrf.mxu0
    %4572 = vdwg.mxu0
    %4573 = vmatpush.bf16.msra.mxu0 %v3921
    %4574 = vmatpush.bf16.msra.mxu0 %v3917
    %4575 = vmatpush.bf16.msra.mxu0 %v3913
    %4576 = vmatpush.bf16.msra.mxu0 %v3909
    %4577 = vmatpush.bf16.msra.mxu0 %v3905
    %4578 = vmatpush.bf16.msra.mxu0 %v3901
    %4579 = vmatpush.bf16.msra.mxu0 %v3897
    %4580 = vmatpush.bf16.msra.mxu0 %v3893
    %4581 = vmatmul.bf16.gmra.mxu0 %v2787
    %v4582 = vpop.f32.mrf.mxu0
    %v4583 = vadd.f32 %v4570, %v4582
    %v4584 = vpop.f32.mrf.mxu0
    %4585 = vdwg.mxu0
    %4586 = vmatpush.bf16.msra.mxu0 %v3953
    %4587 = vmatpush.bf16.msra.mxu0 %v3949
    %4588 = vmatpush.bf16.msra.mxu0 %v3945
    %4589 = vmatpush.bf16.msra.mxu0 %v3941
    %4590 = vmatpush.bf16.msra.mxu0 %v3937
    %4591 = vmatpush.bf16.msra.mxu0 %v3933
    %4592 = vmatpush.bf16.msra.mxu0 %v3929
    %4593 = vmatpush.bf16.msra.mxu0 %v3925
    %4594 = vmatmul.bf16.gmra.mxu0 %v2788
    %v4595 = vpop.f32.mrf.mxu0
    %v4596 = vadd.f32 %v4583, %v4595
    %v4597 = vpop.f32.mrf.mxu0
    %4598 = vdwg.mxu0
    %4599 = vmatpush.bf16.msra.mxu0 %v3985
    %4600 = vmatpush.bf16.msra.mxu0 %v3981
    %4601 = vmatpush.bf16.msra.mxu0 %v3977
    %4602 = vmatpush.bf16.msra.mxu0 %v3973
    %4603 = vmatpush.bf16.msra.mxu0 %v3969
    %4604 = vmatpush.bf16.msra.mxu0 %v3965
    %4605 = vmatpush.bf16.msra.mxu0 %v3961
    %4606 = vmatpush.bf16.msra.mxu0 %v3957
    %4607 = vmatmul.bf16.gmra.mxu0 %v2789
    %v4608 = vpop.f32.mrf.mxu0
    %v4609 = vadd.f32 %v4596, %v4608
    %v4610 = vpop.f32.mrf.mxu0
    %4611 = vdwg.mxu0
    %4612 = vmatpush.bf16.msra.mxu0 %v4017
    %4613 = vmatpush.bf16.msra.mxu0 %v4013
    %4614 = vmatpush.bf16.msra.mxu0 %v4009
    %4615 = vmatpush.bf16.msra.mxu0 %v4005
    %4616 = vmatpush.bf16.msra.mxu0 %v4001
    %4617 = vmatpush.bf16.msra.mxu0 %v3997
    %4618 = vmatpush.bf16.msra.mxu0 %v3993
    %4619 = vmatpush.bf16.msra.mxu0 %v3989
    %4620 = vmatmul.bf16.gmra.mxu0 %v2790
    %v4621 = vpop.f32.mrf.mxu0
    %v4622 = vadd.f32 %v4609, %v4621
    %v4623 = vpop.f32.mrf.mxu0
    %4624 = vdwg.mxu0
    %4625 = vmatpush.bf16.msra.mxu0 %v4049
    %4626 = vmatpush.bf16.msra.mxu0 %v4045
    %4627 = vmatpush.bf16.msra.mxu0 %v4041
    %4628 = vmatpush.bf16.msra.mxu0 %v4037
    %4629 = vmatpush.bf16.msra.mxu0 %v4033
    %4630 = vmatpush.bf16.msra.mxu0 %v4029
    %4631 = vmatpush.bf16.msra.mxu0 %v4025
    %4632 = vmatpush.bf16.msra.mxu0 %v4021
    %4633 = vmatmul.bf16.gmra.mxu0 %v2791
    %v4634 = vpop.f32.mrf.mxu0
    %v4635 = vadd.f32 %v4622, %v4634
    %v4636 = vpop.f32.mrf.mxu0
    %4637 = vdwg.mxu0
    %4638 = vmatpush.bf16.msra.mxu0 %v4081
    %4639 = vmatpush.bf16.msra.mxu0 %v4077
    %4640 = vmatpush.bf16.msra.mxu0 %v4073
    %4641 = vmatpush.bf16.msra.mxu0 %v4069
    %4642 = vmatpush.bf16.msra.mxu0 %v4065
    %4643 = vmatpush.bf16.msra.mxu0 %v4061
    %4644 = vmatpush.bf16.msra.mxu0 %v4057
    %4645 = vmatpush.bf16.msra.mxu0 %v4053
    %4646 = vmatmul.bf16.gmra.mxu0 %v2792
    %v4647 = vpop.f32.mrf.mxu0
    %v4648 = vadd.f32 %v4635, %v4647
    %v4649 = vpop.f32.mrf.mxu0
    %4650 = vdwg.mxu0
    %4651 = vmatpush.bf16.msra.mxu0 %v3858
    %4652 = vmatpush.bf16.msra.mxu0 %v3854
    %4653 = vmatpush.bf16.msra.mxu0 %v3850
    %4654 = vmatpush.bf16.msra.mxu0 %v3846
    %4655 = vmatpush.bf16.msra.mxu0 %v3842
    %4656 = vmatpush.bf16.msra.mxu0 %v3838
    %4657 = vmatpush.bf16.msra.mxu0 %v3834
    %4658 = vmatpush.bf16.msra.mxu0 %v3830
    %4659 = vmatmul.bf16.gmra.mxu0 %v2785
    %v4660 = vpop.f32.mrf.mxu0
    %v4661 = vadd.f32 %v3054, %v4660
    %v4662 = vpop.f32.mrf.mxu0
    %4663 = vdwg.mxu0
    %4664 = vmatpush.bf16.msra.mxu0 %v3890
    %4665 = vmatpush.bf16.msra.mxu0 %v3886
    %4666 = vmatpush.bf16.msra.mxu0 %v3882
    %4667 = vmatpush.bf16.msra.mxu0 %v3878
    %4668 = vmatpush.bf16.msra.mxu0 %v3874
    %4669 = vmatpush.bf16.msra.mxu0 %v3870
    %4670 = vmatpush.bf16.msra.mxu0 %v3866
    %4671 = vmatpush.bf16.msra.mxu0 %v3862
    %4672 = vmatmul.bf16.gmra.mxu0 %v2786
    %v4673 = vpop.f32.mrf.mxu0
    %v4674 = vadd.f32 %v4661, %v4673
    %v4675 = vpop.f32.mrf.mxu0
    %4676 = vdwg.mxu0
    %4677 = vmatpush.bf16.msra.mxu0 %v3922
    %4678 = vmatpush.bf16.msra.mxu0 %v3918
    %4679 = vmatpush.bf16.msra.mxu0 %v3914
    %4680 = vmatpush.bf16.msra.mxu0 %v3910
    %4681 = vmatpush.bf16.msra.mxu0 %v3906
    %4682 = vmatpush.bf16.msra.mxu0 %v3902
    %4683 = vmatpush.bf16.msra.mxu0 %v3898
    %4684 = vmatpush.bf16.msra.mxu0 %v3894
    %4685 = vmatmul.bf16.gmra.mxu0 %v2787
    %v4686 = vpop.f32.mrf.mxu0
    %v4687 = vadd.f32 %v4674, %v4686
    %v4688 = vpop.f32.mrf.mxu0
    %4689 = vdwg.mxu0
    %4690 = vmatpush.bf16.msra.mxu0 %v3954
    %4691 = vmatpush.bf16.msra.mxu0 %v3950
    %4692 = vmatpush.bf16.msra.mxu0 %v3946
    %4693 = vmatpush.bf16.msra.mxu0 %v3942
    %4694 = vmatpush.bf16.msra.mxu0 %v3938
    %4695 = vmatpush.bf16.msra.mxu0 %v3934
    %4696 = vmatpush.bf16.msra.mxu0 %v3930
    %4697 = vmatpush.bf16.msra.mxu0 %v3926
    %4698 = vmatmul.bf16.gmra.mxu0 %v2788
    %v4699 = vpop.f32.mrf.mxu0
    %v4700 = vadd.f32 %v4687, %v4699
    %v4701 = vpop.f32.mrf.mxu0
    %4702 = vdwg.mxu0
    %4703 = vmatpush.bf16.msra.mxu0 %v3986
    %4704 = vmatpush.bf16.msra.mxu0 %v3982
    %4705 = vmatpush.bf16.msra.mxu0 %v3978
    %4706 = vmatpush.bf16.msra.mxu0 %v3974
    %4707 = vmatpush.bf16.msra.mxu0 %v3970
    %4708 = vmatpush.bf16.msra.mxu0 %v3966
    %4709 = vmatpush.bf16.msra.mxu0 %v3962
    %4710 = vmatpush.bf16.msra.mxu0 %v3958
    %4711 = vmatmul.bf16.gmra.mxu0 %v2789
    %v4712 = vpop.f32.mrf.mxu0
    %v4713 = vadd.f32 %v4700, %v4712
    %v4714 = vpop.f32.mrf.mxu0
    %4715 = vdwg.mxu0
    %4716 = vmatpush.bf16.msra.mxu0 %v4018
    %4717 = vmatpush.bf16.msra.mxu0 %v4014
    %4718 = vmatpush.bf16.msra.mxu0 %v4010
    %4719 = vmatpush.bf16.msra.mxu0 %v4006
    %4720 = vmatpush.bf16.msra.mxu0 %v4002
    %4721 = vmatpush.bf16.msra.mxu0 %v3998
    %4722 = vmatpush.bf16.msra.mxu0 %v3994
    %4723 = vmatpush.bf16.msra.mxu0 %v3990
    %4724 = vmatmul.bf16.gmra.mxu0 %v2790
    %v4725 = vpop.f32.mrf.mxu0
    %v4726 = vadd.f32 %v4713, %v4725
    %v4727 = vpop.f32.mrf.mxu0
    %4728 = vdwg.mxu0
    %4729 = vmatpush.bf16.msra.mxu0 %v4050
    %4730 = vmatpush.bf16.msra.mxu0 %v4046
    %4731 = vmatpush.bf16.msra.mxu0 %v4042
    %4732 = vmatpush.bf16.msra.mxu0 %v4038
    %4733 = vmatpush.bf16.msra.mxu0 %v4034
    %4734 = vmatpush.bf16.msra.mxu0 %v4030
    %4735 = vmatpush.bf16.msra.mxu0 %v4026
    %4736 = vmatpush.bf16.msra.mxu0 %v4022
    %4737 = vmatmul.bf16.gmra.mxu0 %v2791
    %v4738 = vpop.f32.mrf.mxu0
    %v4739 = vadd.f32 %v4726, %v4738
    %v4740 = vpop.f32.mrf.mxu0
    %4741 = vdwg.mxu0
    %4742 = vmatpush.bf16.msra.mxu0 %v4082
    %4743 = vmatpush.bf16.msra.mxu0 %v4078
    %4744 = vmatpush.bf16.msra.mxu0 %v4074
    %4745 = vmatpush.bf16.msra.mxu0 %v4070
    %4746 = vmatpush.bf16.msra.mxu0 %v4066
    %4747 = vmatpush.bf16.msra.mxu0 %v4062
    %4748 = vmatpush.bf16.msra.mxu0 %v4058
    %4749 = vmatpush.bf16.msra.mxu0 %v4054
    %4750 = vmatmul.bf16.gmra.mxu0 %v2792
    %v4751 = vpop.f32.mrf.mxu0
    %v4752 = vadd.f32 %v4739, %v4751
    %v4753 = vpop.f32.mrf.mxu0
    %4754 = vdwg.mxu0
    %v4755 = vmul.f32 %v4440, 0.5
    %v4756 = vmul.f32 %v4544, 0.5
    %v4757 = vmul.f32 %v4648, 0.5
    %v4758 = vmul.f32 %v4752, 0.5
    %v4759 = vmul.f32 %v4440, 0.70710677
    %v4760 = vmul.f32 %v4544, 0.70710677
    %v4761 = vmul.f32 %v4648, 0.70710677
    %v4762 = vmul.f32 %v4752, 0.70710677
    %vm4763 = vcmp.ge.f32.partialorder %v4759, 0.0
    %vm4764 = vcmp.ge.f32.partialorder %v4760, 0.0
    %vm4765 = vcmp.ge.f32.partialorder %v4761, 0.0
    %vm4766 = vcmp.ge.f32.partialorder %v4762, 0.0
    %v4767 = vsel %vm4763, 1.0, -1.0
    %v4768 = vsel %vm4764, 1.0, -1.0
    %v4769 = vsel %vm4765, 1.0, -1.0
    %v4770 = vsel %vm4766, 1.0, -1.0
    %v4771 = vand.u32 2147483647, %v4759
    %v4772 = vand.u32 2147483647, %v4760
    %v4773 = vand.u32 2147483647, %v4761
    %v4774 = vand.u32 2147483647, %v4762
    %v4775 = vmul.f32 %v4771, 0.3275911
    %v4776 = vmul.f32 %v4772, 0.3275911
    %v4777 = vmul.f32 %v4773, 0.3275911
    %v4778 = vmul.f32 %v4774, 0.3275911
    %v4779 = vadd.f32 %v4775, 1.0
    %v4780 = vadd.f32 %v4776, 1.0
    %v4781 = vadd.f32 %v4777, 1.0
    %v4782 = vadd.f32 %v4778, 1.0
    %v4783 = vrcp.pop %v4779
    %v4784 = vmul.f32 %v4779, %v4783
    %v4785 = vsub.f32 1.0, %v4784
    %v4786 = vmul.f32 %v4783, %v4785
    %v4787 = vadd.f32 %v4783, %v4786
    %vm4788 = vweird.f32 %v4779
    %vm4789 = vweird.f32 %v4783
    %vm4790 = vmor %vm4788, %vm4789
    %v4791 = vsel %vm4790, %v4783, %v4787
    %v4792 = vand.u32 2147483647, %v4779
    %vm4793 = vcmp.eq.f32.partialorder %v4792, 8.507059e+37
    %v4794 = vand.u32 %v4779, 2147483648
    %v4795 = vor.u32 1.1754944e-38, %v4794
    %v4796 = vsel %vm4793, %v4795, %v4791
    %v4797 = vmul.f32 1.0, %v4796
    %v4798 = vrcp.pop %v4780
    %v4799 = vmul.f32 %v4780, %v4798
    %v4800 = vsub.f32 1.0, %v4799
    %v4801 = vmul.f32 %v4798, %v4800
    %v4802 = vadd.f32 %v4798, %v4801
    %vm4803 = vweird.f32 %v4780
    %vm4804 = vweird.f32 %v4798
    %vm4805 = vmor %vm4803, %vm4804
    %v4806 = vsel %vm4805, %v4798, %v4802
    %v4807 = vand.u32 2147483647, %v4780
    %vm4808 = vcmp.eq.f32.partialorder %v4807, 8.507059e+37
    %v4809 = vand.u32 %v4780, 2147483648
    %v4810 = vor.u32 1.1754944e-38, %v4809
    %v4811 = vsel %vm4808, %v4810, %v4806
    %v4812 = vmul.f32 1.0, %v4811
    %v4813 = vrcp.pop %v4781
    %v4814 = vmul.f32 %v4781, %v4813
    %v4815 = vsub.f32 1.0, %v4814
    %v4816 = vmul.f32 %v4813, %v4815
    %v4817 = vadd.f32 %v4813, %v4816
    %vm4818 = vweird.f32 %v4781
    %vm4819 = vweird.f32 %v4813
    %vm4820 = vmor %vm4818, %vm4819
    %v4821 = vsel %vm4820, %v4813, %v4817
    %v4822 = vand.u32 2147483647, %v4781
    %vm4823 = vcmp.eq.f32.partialorder %v4822, 8.507059e+37
    %v4824 = vand.u32 %v4781, 2147483648
    %v4825 = vor.u32 1.1754944e-38, %v4824
    %v4826 = vsel %vm4823, %v4825, %v4821
    %v4827 = vmul.f32 1.0, %v4826
    %v4828 = vrcp.pop %v4782
    %v4829 = vmul.f32 %v4782, %v4828
    %v4830 = vsub.f32 1.0, %v4829
    %v4831 = vmul.f32 %v4828, %v4830
    %v4832 = vadd.f32 %v4828, %v4831
    %vm4833 = vweird.f32 %v4782
    %vm4834 = vweird.f32 %v4828
    %vm4835 = vmor %vm4833, %vm4834
    %v4836 = vsel %vm4835, %v4828, %v4832
    %v4837 = vand.u32 2147483647, %v4782
    %vm4838 = vcmp.eq.f32.partialorder %v4837, 8.507059e+37
    %v4839 = vand.u32 %v4782, 2147483648
    %v4840 = vor.u32 1.1754944e-38, %v4839
    %v4841 = vsel %vm4838, %v4840, %v4836
    %v4842 = vmul.f32 1.0, %v4841
    %v4843 = vmul.f32 %v4797, 1.0614054
    %v4844 = vmul.f32 %v4812, 1.0614054
    %v4845 = vmul.f32 %v4827, 1.0614054
    %v4846 = vmul.f32 %v4842, 1.0614054
    %v4847 = vadd.f32 %v4843, -1.4531521
    %v4848 = vadd.f32 %v4844, -1.4531521
    %v4849 = vadd.f32 %v4845, -1.4531521
    %v4850 = vadd.f32 %v4846, -1.4531521
    %v4851 = vmul.f32 %v4847, %v4797
    %v4852 = vmul.f32 %v4848, %v4812
    %v4853 = vmul.f32 %v4849, %v4827
    %v4854 = vmul.f32 %v4850, %v4842
    %v4855 = vadd.f32 %v4851, 1.4214138
    %v4856 = vadd.f32 %v4852, 1.4214138
    %v4857 = vadd.f32 %v4853, 1.4214138
    %v4858 = vadd.f32 %v4854, 1.4214138
    %v4859 = vmul.f32 %v4855, %v4797
    %v4860 = vmul.f32 %v4856, %v4812
    %v4861 = vmul.f32 %v4857, %v4827
    %v4862 = vmul.f32 %v4858, %v4842
    %v4863 = vadd.f32 %v4859, -0.28449672
    %v4864 = vadd.f32 %v4860, -0.28449672
    %v4865 = vadd.f32 %v4861, -0.28449672
    %v4866 = vadd.f32 %v4862, -0.28449672
    %v4867 = vmul.f32 %v4863, %v4797
    %v4868 = vmul.f32 %v4864, %v4812
    %v4869 = vmul.f32 %v4865, %v4827
    %v4870 = vmul.f32 %v4866, %v4842
    %v4871 = vadd.f32 %v4867, 0.2548296
    %v4872 = vadd.f32 %v4868, 0.2548296
    %v4873 = vadd.f32 %v4869, 0.2548296
    %v4874 = vadd.f32 %v4870, 0.2548296
    %v4875 = vmul.f32 %v4871, %v4797
    %v4876 = vmul.f32 %v4872, %v4812
    %v4877 = vmul.f32 %v4873, %v4827
    %v4878 = vmul.f32 %v4874, %v4842
    %v4879 = vsub.f32 0.0, %v4771
    %v4880 = vsub.f32 0.0, %v4772
    %v4881 = vsub.f32 0.0, %v4773
    %v4882 = vsub.f32 0.0, %v4774
    %v4883 = vmul.f32 %v4879, %v4771
    %v4884 = vmul.f32 %v4880, %v4772
    %v4885 = vmul.f32 %v4881, %v4773
    %v4886 = vmul.f32 %v4882, %v4774
    %v4887 = vmul.f32 %v4883, 1.442695
    %v4888 = vpow.pop %v4887
    %v4889 = vmul.f32 %v4884, 1.442695
    %v4890 = vpow.pop %v4889
    %v4891 = vmul.f32 %v4885, 1.442695
    %v4892 = vpow.pop %v4891
    %v4893 = vmul.f32 %v4886, 1.442695
    %v4894 = vpow.pop %v4893
    %v4895 = vmul.f32 %v4875, %v4888
    %v4896 = vmul.f32 %v4876, %v4890
    %v4897 = vmul.f32 %v4877, %v4892
    %v4898 = vmul.f32 %v4878, %v4894
    %v4899 = vsub.f32 1.0, %v4895
    %v4900 = vsub.f32 1.0, %v4896
    %v4901 = vsub.f32 1.0, %v4897
    %v4902 = vsub.f32 1.0, %v4898
    %v4903 = vmul.f32 %v4767, %v4899
    %v4904 = vmul.f32 %v4768, %v4900
    %v4905 = vmul.f32 %v4769, %v4901
    %v4906 = vmul.f32 %v4770, %v4902
    %v4907 = vadd.f32 %v4903, 1.0
    %v4908 = vadd.f32 %v4904, 1.0
    %v4909 = vadd.f32 %v4905, 1.0
    %v4910 = vadd.f32 %v4906, 1.0
    %v4911 = vmul.f32 %v4755, %v4907
    %v4912 = vmul.f32 %v4756, %v4908
    %v4913 = vmul.f32 %v4757, %v4909
    %v4914 = vmul.f32 %v4758, %v4910
    %v4915 = vpack.c.bf16 %v4911, %v4911
    %v4916 = vpack.c.bf16 %v4912, %v4912
    %v4917 = vpack.c.bf16 %v4913, %v4913
    %v4918 = vpack.c.bf16 %v4914, %v4914
    %v4919 = vld [vmem:[%s22] sm:$0xff]
    %v4920 = vld [vmem:[%s22 + $0x8] sm:$0xff]
    %v4921 = vld [vmem:[%s22 + $0x10] sm:$0xff]
    %v4922 = vld [vmem:[%s22 + $0x18] sm:$0xff]
    %v4923 = vld [vmem:[%s22 + $0x20] sm:$0xff]
    %v4924 = vld [vmem:[%s22 + $0x28] sm:$0xff]
    %v4925 = vld [vmem:[%s22 + $0x30] sm:$0xff]
    %v4926 = vld [vmem:[%s22 + $0x38] sm:$0xff]
    %v4927 = vld [vmem:[%s22 + $0x40] sm:$0xff]
    %v4928 = vld [vmem:[%s22 + $0x48] sm:$0xff]
    %v4929 = vld [vmem:[%s22 + $0x50] sm:$0xff]
    %v4930 = vld [vmem:[%s22 + $0x58] sm:$0xff]
    %v4931 = vld [vmem:[%s22 + $0x60] sm:$0xff]
    %v4932 = vld [vmem:[%s22 + $0x68] sm:$0xff]
    %v4933 = vld [vmem:[%s22 + $0x70] sm:$0xff]
    %v4934 = vld [vmem:[%s22 + $0x78] sm:$0xff]
    %v4935 = vld [vmem:[%s22 + $0x80] sm:$0xff]
    %v4936 = vld [vmem:[%s22 + $0x88] sm:$0xff]
    %v4937 = vld [vmem:[%s22 + $0x90] sm:$0xff]
    %v4938 = vld [vmem:[%s22 + $0x98] sm:$0xff]
    %v4939 = vld [vmem:[%s22 + $0xa0] sm:$0xff]
    %v4940 = vld [vmem:[%s22 + $0xa8] sm:$0xff]
    %v4941 = vld [vmem:[%s22 + $0xb0] sm:$0xff]
    %v4942 = vld [vmem:[%s22 + $0xb8] sm:$0xff]
    %v4943 = vld [vmem:[%s22 + $0xc0] sm:$0xff]
    %v4944 = vld [vmem:[%s22 + $0xc8] sm:$0xff]
    %v4945 = vld [vmem:[%s22 + $0xd0] sm:$0xff]
    %v4946 = vld [vmem:[%s22 + $0xd8] sm:$0xff]
    %v4947 = vld [vmem:[%s22 + $0xe0] sm:$0xff]
    %v4948 = vld [vmem:[%s22 + $0xe8] sm:$0xff]
    %v4949 = vld [vmem:[%s22 + $0xf0] sm:$0xff]
    %v4950 = vld [vmem:[%s22 + $0xf8] sm:$0xff]
    %v4951 = vld [vmem:[%s22 + $0x100] sm:$0xff]
    %v4952 = vld [vmem:[%s22 + $0x108] sm:$0xff]
    %v4953 = vld [vmem:[%s22 + $0x110] sm:$0xff]
    %v4954 = vld [vmem:[%s22 + $0x118] sm:$0xff]
    %v4955 = vld [vmem:[%s22 + $0x120] sm:$0xff]
    %v4956 = vld [vmem:[%s22 + $0x128] sm:$0xff]
    %v4957 = vld [vmem:[%s22 + $0x130] sm:$0xff]
    %v4958 = vld [vmem:[%s22 + $0x138] sm:$0xff]
    %v4959 = vld [vmem:[%s22 + $0x140] sm:$0xff]
    %v4960 = vld [vmem:[%s22 + $0x148] sm:$0xff]
    %v4961 = vld [vmem:[%s22 + $0x150] sm:$0xff]
    %v4962 = vld [vmem:[%s22 + $0x158] sm:$0xff]
    %v4963 = vld [vmem:[%s22 + $0x160] sm:$0xff]
    %v4964 = vld [vmem:[%s22 + $0x168] sm:$0xff]
    %v4965 = vld [vmem:[%s22 + $0x170] sm:$0xff]
    %v4966 = vld [vmem:[%s22 + $0x178] sm:$0xff]
    %v4967 = vld [vmem:[%s22 + $0x180] sm:$0xff]
    %v4968 = vld [vmem:[%s22 + $0x188] sm:$0xff]
    %v4969 = vld [vmem:[%s22 + $0x190] sm:$0xff]
    %v4970 = vld [vmem:[%s22 + $0x198] sm:$0xff]
    %v4971 = vld [vmem:[%s22 + $0x1a0] sm:$0xff]
    %v4972 = vld [vmem:[%s22 + $0x1a8] sm:$0xff]
    %v4973 = vld [vmem:[%s22 + $0x1b0] sm:$0xff]
    %v4974 = vld [vmem:[%s22 + $0x1b8] sm:$0xff]
    %v4975 = vld [vmem:[%s22 + $0x1c0] sm:$0xff]
    %v4976 = vld [vmem:[%s22 + $0x1c8] sm:$0xff]
    %v4977 = vld [vmem:[%s22 + $0x1d0] sm:$0xff]
    %v4978 = vld [vmem:[%s22 + $0x1d8] sm:$0xff]
    %v4979 = vld [vmem:[%s22 + $0x1e0] sm:$0xff]
    %v4980 = vld [vmem:[%s22 + $0x1e8] sm:$0xff]
    %v4981 = vld [vmem:[%s22 + $0x1f0] sm:$0xff]
    %v4982 = vld [vmem:[%s22 + $0x1f8] sm:$0xff]
    %v4983 = vld [vmem:[%s23] sm:$0x3]
    %v4985 = vperm.slane %v4983, 0
    %v4986 = vperm.slane %v4983, 1
    %v5053 = vunpack.c.l.b16 %v4919
    %v5054 = vunpack.c.h.b16 %v4919
    %v5055 = vunpack.c.l.b16 %v4920
    %v5056 = vunpack.c.h.b16 %v4920
    %v5057 = vunpack.c.l.b16 %v4921
    %v5058 = vunpack.c.h.b16 %v4921
    %v5059 = vunpack.c.l.b16 %v4922
    %v5060 = vunpack.c.h.b16 %v4922
    %v5061 = vunpack.c.l.b16 %v4923
    %v5062 = vunpack.c.h.b16 %v4923
    %v5063 = vunpack.c.l.b16 %v4924
    %v5064 = vunpack.c.h.b16 %v4924
    %v5065 = vunpack.c.l.b16 %v4925
    %v5066 = vunpack.c.h.b16 %v4925
    %v5067 = vunpack.c.l.b16 %v4926
    %v5068 = vunpack.c.h.b16 %v4926
    %v5069 = vunpack.c.l.b16 %v4927
    %v5070 = vunpack.c.h.b16 %v4927
    %v5071 = vunpack.c.l.b16 %v4928
    %v5072 = vunpack.c.h.b16 %v4928
    %v5073 = vunpack.c.l.b16 %v4929
    %v5074 = vunpack.c.h.b16 %v4929
    %v5075 = vunpack.c.l.b16 %v4930
    %v5076 = vunpack.c.h.b16 %v4930
    %v5077 = vunpack.c.l.b16 %v4931
    %v5078 = vunpack.c.h.b16 %v4931
    %v5079 = vunpack.c.l.b16 %v4932
    %v5080 = vunpack.c.h.b16 %v4932
    %v5081 = vunpack.c.l.b16 %v4933
    %v5082 = vunpack.c.h.b16 %v4933
    %v5083 = vunpack.c.l.b16 %v4934
    %v5084 = vunpack.c.h.b16 %v4934
    %v5085 = vunpack.c.l.b16 %v4935
    %v5086 = vunpack.c.h.b16 %v4935
    %v5087 = vunpack.c.l.b16 %v4936
    %v5088 = vunpack.c.h.b16 %v4936
    %v5089 = vunpack.c.l.b16 %v4937
    %v5090 = vunpack.c.h.b16 %v4937
    %v5091 = vunpack.c.l.b16 %v4938
    %v5092 = vunpack.c.h.b16 %v4938
    %v5093 = vunpack.c.l.b16 %v4939
    %v5094 = vunpack.c.h.b16 %v4939
    %v5095 = vunpack.c.l.b16 %v4940
    %v5096 = vunpack.c.h.b16 %v4940
    %v5097 = vunpack.c.l.b16 %v4941
    %v5098 = vunpack.c.h.b16 %v4941
    %v5099 = vunpack.c.l.b16 %v4942
    %v5100 = vunpack.c.h.b16 %v4942
    %v5101 = vunpack.c.l.b16 %v4943
    %v5102 = vunpack.c.h.b16 %v4943
    %v5103 = vunpack.c.l.b16 %v4944
    %v5104 = vunpack.c.h.b16 %v4944
    %v5105 = vunpack.c.l.b16 %v4945
    %v5106 = vunpack.c.h.b16 %v4945
    %v5107 = vunpack.c.l.b16 %v4946
    %v5108 = vunpack.c.h.b16 %v4946
    %v5109 = vunpack.c.l.b16 %v4947
    %v5110 = vunpack.c.h.b16 %v4947
    %v5111 = vunpack.c.l.b16 %v4948
    %v5112 = vunpack.c.h.b16 %v4948
    %v5113 = vunpack.c.l.b16 %v4949
    %v5114 = vunpack.c.h.b16 %v4949
    %v5115 = vunpack.c.l.b16 %v4950
    %v5116 = vunpack.c.h.b16 %v4950
    %v5117 = vunpack.c.l.b16 %v4951
    %v5118 = vunpack.c.h.b16 %v4951
    %v5119 = vunpack.c.l.b16 %v4952
    %v5120 = vunpack.c.h.b16 %v4952
    %v5121 = vunpack.c.l.b16 %v4953
    %v5122 = vunpack.c.h.b16 %v4953
    %v5123 = vunpack.c.l.b16 %v4954
    %v5124 = vunpack.c.h.b16 %v4954
    %v5125 = vunpack.c.l.b16 %v4955
    %v5126 = vunpack.c.h.b16 %v4955
    %v5127 = vunpack.c.l.b16 %v4956
    %v5128 = vunpack.c.h.b16 %v4956
    %v5129 = vunpack.c.l.b16 %v4957
    %v5130 = vunpack.c.h.b16 %v4957
    %v5131 = vunpack.c.l.b16 %v4958
    %v5132 = vunpack.c.h.b16 %v4958
    %v5133 = vunpack.c.l.b16 %v4959
    %v5134 = vunpack.c.h.b16 %v4959
    %v5135 = vunpack.c.l.b16 %v4960
    %v5136 = vunpack.c.h.b16 %v4960
    %v5137 = vunpack.c.l.b16 %v4961
    %v5138 = vunpack.c.h.b16 %v4961
    %v5139 = vunpack.c.l.b16 %v4962
    %v5140 = vunpack.c.h.b16 %v4962
    %v5141 = vunpack.c.l.b16 %v4963
    %v5142 = vunpack.c.h.b16 %v4963
    %v5143 = vunpack.c.l.b16 %v4964
    %v5144 = vunpack.c.h.b16 %v4964
    %v5145 = vunpack.c.l.b16 %v4965
    %v5146 = vunpack.c.h.b16 %v4965
    %v5147 = vunpack.c.l.b16 %v4966
    %v5148 = vunpack.c.h.b16 %v4966
    %v5149 = vunpack.c.l.b16 %v4967
    %v5150 = vunpack.c.h.b16 %v4967
    %v5151 = vunpack.c.l.b16 %v4968
    %v5152 = vunpack.c.h.b16 %v4968
    %v5153 = vunpack.c.l.b16 %v4969
    %v5154 = vunpack.c.h.b16 %v4969
    %v5155 = vunpack.c.l.b16 %v4970
    %v5156 = vunpack.c.h.b16 %v4970
    %v5157 = vunpack.c.l.b16 %v4971
    %v5158 = vunpack.c.h.b16 %v4971
    %v5159 = vunpack.c.l.b16 %v4972
    %v5160 = vunpack.c.h.b16 %v4972
    %v5161 = vunpack.c.l.b16 %v4973
    %v5162 = vunpack.c.h.b16 %v4973
    %v5163 = vunpack.c.l.b16 %v4974
    %v5164 = vunpack.c.h.b16 %v4974
    %v5165 = vunpack.c.l.b16 %v4975
    %v5166 = vunpack.c.h.b16 %v4975
    %v5167 = vunpack.c.l.b16 %v4976
    %v5168 = vunpack.c.h.b16 %v4976
    %v5169 = vunpack.c.l.b16 %v4977
    %v5170 = vunpack.c.h.b16 %v4977
    %v5171 = vunpack.c.l.b16 %v4978
    %v5172 = vunpack.c.h.b16 %v4978
    %v5173 = vunpack.c.l.b16 %v4979
    %v5174 = vunpack.c.h.b16 %v4979
    %v5175 = vunpack.c.l.b16 %v4980
    %v5176 = vunpack.c.h.b16 %v4980
    %v5177 = vunpack.c.l.b16 %v4981
    %v5178 = vunpack.c.h.b16 %v4981
    %v5179 = vunpack.c.l.b16 %v4982
    %v5180 = vunpack.c.h.b16 %v4982
    %v5181 = vpack.c.b16 %v5055, %v5053
    %v5182 = vpack.c.b16 %v5056, %v5054
    %v5183 = vpack.c.b16 %v5059, %v5057
    %v5184 = vpack.c.b16 %v5060, %v5058
    %v5185 = vpack.c.b16 %v5063, %v5061
    %v5186 = vpack.c.b16 %v5064, %v5062
    %v5187 = vpack.c.b16 %v5067, %v5065
    %v5188 = vpack.c.b16 %v5068, %v5066
    %v5189 = vpack.c.b16 %v5071, %v5069
    %v5190 = vpack.c.b16 %v5072, %v5070
    %v5191 = vpack.c.b16 %v5075, %v5073
    %v5192 = vpack.c.b16 %v5076, %v5074
    %v5193 = vpack.c.b16 %v5079, %v5077
    %v5194 = vpack.c.b16 %v5080, %v5078
    %v5195 = vpack.c.b16 %v5083, %v5081
    %v5196 = vpack.c.b16 %v5084, %v5082
    %v5197 = vpack.c.b16 %v5087, %v5085
    %v5198 = vpack.c.b16 %v5088, %v5086
    %v5199 = vpack.c.b16 %v5091, %v5089
    %v5200 = vpack.c.b16 %v5092, %v5090
    %v5201 = vpack.c.b16 %v5095, %v5093
    %v5202 = vpack.c.b16 %v5096, %v5094
    %v5203 = vpack.c.b16 %v5099, %v5097
    %v5204 = vpack.c.b16 %v5100, %v5098
    %v5205 = vpack.c.b16 %v5103, %v5101
    %v5206 = vpack.c.b16 %v5104, %v5102
    %v5207 = vpack.c.b16 %v5107, %v5105
    %v5208 = vpack.c.b16 %v5108, %v5106
    %v5209 = vpack.c.b16 %v5111, %v5109
    %v5210 = vpack.c.b16 %v5112, %v5110
    %v5211 = vpack.c.b16 %v5115, %v5113
    %v5212 = vpack.c.b16 %v5116, %v5114
    %v5213 = vpack.c.b16 %v5119, %v5117
    %v5214 = vpack.c.b16 %v5120, %v5118
    %v5215 = vpack.c.b16 %v5123, %v5121
    %v5216 = vpack.c.b16 %v5124, %v5122
    %v5217 = vpack.c.b16 %v5127, %v5125
    %v5218 = vpack.c.b16 %v5128, %v5126
    %v5219 = vpack.c.b16 %v5131, %v5129
    %v5220 = vpack.c.b16 %v5132, %v5130
    %v5221 = vpack.c.b16 %v5135, %v5133
    %v5222 = vpack.c.b16 %v5136, %v5134
    %v5223 = vpack.c.b16 %v5139, %v5137
    %v5224 = vpack.c.b16 %v5140, %v5138
    %v5225 = vpack.c.b16 %v5143, %v5141
    %v5226 = vpack.c.b16 %v5144, %v5142
    %v5227 = vpack.c.b16 %v5147, %v5145
    %v5228 = vpack.c.b16 %v5148, %v5146
    %v5229 = vpack.c.b16 %v5151, %v5149
    %v5230 = vpack.c.b16 %v5152, %v5150
    %v5231 = vpack.c.b16 %v5155, %v5153
    %v5232 = vpack.c.b16 %v5156, %v5154
    %v5233 = vpack.c.b16 %v5159, %v5157
    %v5234 = vpack.c.b16 %v5160, %v5158
    %v5235 = vpack.c.b16 %v5163, %v5161
    %v5236 = vpack.c.b16 %v5164, %v5162
    %v5237 = vpack.c.b16 %v5167, %v5165
    %v5238 = vpack.c.b16 %v5168, %v5166
    %v5239 = vpack.c.b16 %v5171, %v5169
    %v5240 = vpack.c.b16 %v5172, %v5170
    %v5241 = vpack.c.b16 %v5175, %v5173
    %v5242 = vpack.c.b16 %v5176, %v5174
    %v5243 = vpack.c.b16 %v5179, %v5177
    %v5244 = vpack.c.b16 %v5180, %v5178
    %5309 = vmatpush.bf16.msra.mxu0 %v5195
    %5310 = vmatpush.bf16.msra.mxu0 %v5193
    %5311 = vmatpush.bf16.msra.mxu0 %v5191
    %5312 = vmatpush.bf16.msra.mxu0 %v5189
    %5313 = vmatpush.bf16.msra.mxu0 %v5187
    %5314 = vmatpush.bf16.msra.mxu0 %v5185
    %5315 = vmatpush.bf16.msra.mxu0 %v5183
    %5316 = vmatpush.bf16.msra.mxu0 %v5181
    %5317 = vmatmul.bf16.gmra.mxu0 %v4915
    %v5318 = vpop.f32.mrf.mxu0
    %v5319 = vadd.f32 %v4985, %v5318
    %v5320 = vpop.f32.mrf.mxu0
    %5321 = vdwg.mxu0
    %5322 = vmatpush.bf16.msra.mxu0 %v5211
    %5323 = vmatpush.bf16.msra.mxu0 %v5209
    %5324 = vmatpush.bf16.msra.mxu0 %v5207
    %5325 = vmatpush.bf16.msra.mxu0 %v5205
    %5326 = vmatpush.bf16.msra.mxu0 %v5203
    %5327 = vmatpush.bf16.msra.mxu0 %v5201
    %5328 = vmatpush.bf16.msra.mxu0 %v5199
    %5329 = vmatpush.bf16.msra.mxu0 %v5197
    %5330 = vmatmul.bf16.gmra.mxu0 %v4916
    %v5331 = vpop.f32.mrf.mxu0
    %v5332 = vadd.f32 %v5319, %v5331
    %v5333 = vpop.f32.mrf.mxu0
    %5334 = vdwg.mxu0
    %5335 = vmatpush.bf16.msra.mxu0 %v5227
    %5336 = vmatpush.bf16.msra.mxu0 %v5225
    %5337 = vmatpush.bf16.msra.mxu0 %v5223
    %5338 = vmatpush.bf16.msra.mxu0 %v5221
    %5339 = vmatpush.bf16.msra.mxu0 %v5219
    %5340 = vmatpush.bf16.msra.mxu0 %v5217
    %5341 = vmatpush.bf16.msra.mxu0 %v5215
    %5342 = vmatpush.bf16.msra.mxu0 %v5213
    %5343 = vmatmul.bf16.gmra.mxu0 %v4917
    %v5344 = vpop.f32.mrf.mxu0
    %v5345 = vadd.f32 %v5332, %v5344
    %v5346 = vpop.f32.mrf.mxu0
    %5347 = vdwg.mxu0
    %5348 = vmatpush.bf16.msra.mxu0 %v5243
    %5349 = vmatpush.bf16.msra.mxu0 %v5241
    %5350 = vmatpush.bf16.msra.mxu0 %v5239
    %5351 = vmatpush.bf16.msra.mxu0 %v5237
    %5352 = vmatpush.bf16.msra.mxu0 %v5235
    %5353 = vmatpush.bf16.msra.mxu0 %v5233
    %5354 = vmatpush.bf16.msra.mxu0 %v5231
    %5355 = vmatpush.bf16.msra.mxu0 %v5229
    %5356 = vmatmul.bf16.gmra.mxu0 %v4918
    %v5357 = vpop.f32.mrf.mxu0
    %v5358 = vadd.f32 %v5345, %v5357
    %v5359 = vpop.f32.mrf.mxu0
    %5360 = vdwg.mxu0
    %5361 = vmatpush.bf16.msra.mxu0 %v5196
    %5362 = vmatpush.bf16.msra.mxu0 %v5194
    %5363 = vmatpush.bf16.msra.mxu0 %v5192
    %5364 = vmatpush.bf16.msra.mxu0 %v5190
    %5365 = vmatpush.bf16.msra.mxu0 %v5188
    %5366 = vmatpush.bf16.msra.mxu0 %v5186
    %5367 = vmatpush.bf16.msra.mxu0 %v5184
    %5368 = vmatpush.bf16.msra.mxu0 %v5182
    %5369 = vmatmul.bf16.gmra.mxu0 %v4915
    %v5370 = vpop.f32.mrf.mxu0
    %v5371 = vadd.f32 %v4986, %v5370
    %v5372 = vpop.f32.mrf.mxu0
    %5373 = vdwg.mxu0
    %5374 = vmatpush.bf16.msra.mxu0 %v5212
    %5375 = vmatpush.bf16.msra.mxu0 %v5210
    %5376 = vmatpush.bf16.msra.mxu0 %v5208
    %5377 = vmatpush.bf16.msra.mxu0 %v5206
    %5378 = vmatpush.bf16.msra.mxu0 %v5204
    %5379 = vmatpush.bf16.msra.mxu0 %v5202
    %5380 = vmatpush.bf16.msra.mxu0 %v5200
    %5381 = vmatpush.bf16.msra.mxu0 %v5198
    %5382 = vmatmul.bf16.gmra.mxu0 %v4916
    %v5383 = vpop.f32.mrf.mxu0
    %v5384 = vadd.f32 %v5371, %v5383
    %v5385 = vpop.f32.mrf.mxu0
    %5386 = vdwg.mxu0
    %5387 = vmatpush.bf16.msra.mxu0 %v5228
    %5388 = vmatpush.bf16.msra.mxu0 %v5226
    %5389 = vmatpush.bf16.msra.mxu0 %v5224
    %5390 = vmatpush.bf16.msra.mxu0 %v5222
    %5391 = vmatpush.bf16.msra.mxu0 %v5220
    %5392 = vmatpush.bf16.msra.mxu0 %v5218
    %5393 = vmatpush.bf16.msra.mxu0 %v5216
    %5394 = vmatpush.bf16.msra.mxu0 %v5214
    %5395 = vmatmul.bf16.gmra.mxu0 %v4917
    %v5396 = vpop.f32.mrf.mxu0
    %v5397 = vadd.f32 %v5384, %v5396
    %v5398 = vpop.f32.mrf.mxu0
    %5399 = vdwg.mxu0
    %5400 = vmatpush.bf16.msra.mxu0 %v5244
    %5401 = vmatpush.bf16.msra.mxu0 %v5242
    %5402 = vmatpush.bf16.msra.mxu0 %v5240
    %5403 = vmatpush.bf16.msra.mxu0 %v5238
    %5404 = vmatpush.bf16.msra.mxu0 %v5236
    %5405 = vmatpush.bf16.msra.mxu0 %v5234
    %5406 = vmatpush.bf16.msra.mxu0 %v5232
    %5407 = vmatpush.bf16.msra.mxu0 %v5230
    %5408 = vmatmul.bf16.gmra.mxu0 %v4918
    %v5409 = vpop.f32.mrf.mxu0
    %v5410 = vadd.f32 %v5397, %v5409
    %v5411 = vpop.f32.mrf.mxu0
    %5412 = vdwg.mxu0
    %v5415 = vrot.slane %v5410, 6
    %vm5416 = vcmask 1041408
    %v5417 = vsel %vm5416, %v5358, %v5415
    %5419 = vst [vmem:[#allocation5] sm:$0xf] %v5417
    // Predicated region
    $region102: #{vit_forward.1} parent=1 // pred_check
      _
    $region103: #{vit_forward.1} parent=1 // pred_check_branch
      %5421 = sbr.rel (0) target = $region105
    $region104: #{vit_forward.1} parent=1 // pred_region
      %5423 = vsyncadd [#allocation4], 0
      %s5425 = sshll.u32 [#allocation5], 4
      %s5426 = int_to_ptr.vmem [resolvable:$true] %s5425
      %s5427 = sshll.u32 %s24, 4
      %s5428 = int_to_ptr.hbm [resolvable:$true] %s5427
      %5430 = dma.vmem_to_hbm [thread:$0]  %s5426, 64, %s5428, [#allocation4]
    $region105: #{vit_forward.1} parent=1 // pred_fallthru
      _
    // Predicated region
    $region106: #{vit_forward.1} parent=1 // pred_check
      _
    $region107: #{vit_forward.1} parent=1 // pred_check_branch
      %5432 = sbr.rel (0) target = $region109
    $region108: #{vit_forward.1} parent=1 // pred_region
      %5434 = dma.done [#allocation4], 64
    $region109: #{vit_forward.1} parent=1 // pred_fallthru
      _
    %5435 = vsyncpa [#allocation3], 1
    %5436 = vsyncpa [#allocation4], 1

</llo_original>
